<compile_context>
chip_gen: v6e
topology: v6e:2x2x1
jax: 0.10.0
libtpu: 0.0.40
codegen_flags: <defaults>
</compile_context>

<pallas_src>
import math
import jax
import jax.numpy as jnp
from jax.experimental import pallas as pl
from jax.experimental.pallas import tpu as pltpu


def _layernorm(x, g, b, eps=1e-5):
    mu = jnp.mean(x, axis=-1, keepdims=True)
    var = jnp.mean((x - mu) ** 2, axis=-1, keepdims=True)
    return (x - mu) * jax.lax.rsqrt(var + eps) * g + b


def make_transformer_call(depth, B, N, D, heads, dim_head, hidden):
    BN = B * N
    scale = dim_head ** (-0.5)
    inv_sqrt2 = 1.0 / math.sqrt(2.0)

    def kernel(x_ref, ln1g_ref, ln1b_ref, wq_ref, wk_ref, wv_ref, wo_ref,
               ln2g_ref, ln2b_ref, w1_ref, b1_ref, w2_ref, b2_ref, o_ref):
        layer = pl.program_id(0)

        # Layer 0: seed the VMEM-resident residual stream from the input.
        @pl.when(layer == 0)
        def _():
            o_ref[...] = x_ref[...]

        x = o_ref[...].reshape(BN, D)                  # (B*N, D) f32

        # ----------------- attention block -----------------
        xn = _layernorm(x, ln1g_ref[0], ln1b_ref[0])   # f32 statistics
        xn16 = xn.astype(jnp.bfloat16)

        acc = jnp.zeros((BN, D), jnp.float32)
        # Static per-head loop; each head's q/k/v is produced by its own
        # (D, dim_head) matmul (full-width contraction over D — no lane
        # slicing of a wide qkv activation).
        # TODO(synk): for large head counts (>=12) switch to
        # lax.fori_loop(..., unroll=True) or a head grid axis to bound vreg
        # live ranges.
        for h in range(heads):
            qh = jnp.dot(xn16, wq_ref[0, h], preferred_element_type=jnp.float32)
            kh = jnp.dot(xn16, wk_ref[0, h], preferred_element_type=jnp.float32)
            vh = jnp.dot(xn16, wv_ref[0, h], preferred_element_type=jnp.float32)
            qh = qh.reshape(B, N, dim_head)
            kh = kh.reshape(B, N, dim_head)
            vh = vh.reshape(B, N, dim_head)
            dots = jnp.einsum("bnk,bmk->bnm",
                              qh.astype(jnp.bfloat16), kh.astype(jnp.bfloat16),
                              preferred_element_type=jnp.float32) * scale
            dots = dots - jnp.max(dots, axis=-1, keepdims=True)
            p = jnp.exp(dots)                           # f32 softmax
            attn = p * pl.reciprocal(jnp.sum(p, axis=-1, keepdims=True),
                                     approx=True)
            oh = jnp.einsum("bnm,bmk->bnk",
                            attn.astype(jnp.bfloat16), vh.astype(jnp.bfloat16),
                            preferred_element_type=jnp.float32)
            oh = oh.reshape(BN, dim_head)
            # out @ Wout == sum_h oh @ Wout[h*dh:(h+1)*dh, :]
            acc = acc + jnp.dot(oh.astype(jnp.bfloat16), wo_ref[0, h],
                                preferred_element_type=jnp.float32)
        x = x + acc                                     # residual

        # ----------------- feed-forward block -----------------
        xn2 = _layernorm(x, ln2g_ref[0], ln2b_ref[0])
        hh = jnp.dot(xn2.astype(jnp.bfloat16), w1_ref[0],
                     preferred_element_type=jnp.float32) + b1_ref[0]
        # exact (erf-based) GELU in f32, matching torch.nn.GELU default
        hh = 0.5 * hh * (1.0 + jax.lax.erf(hh * inv_sqrt2))
        y = jnp.dot(hh.astype(jnp.bfloat16), w2_ref[0],
                    preferred_element_type=jnp.float32) + b2_ref[0]
        x = x + y                                       # residual

        o_ref[...] = x.reshape(B, N, D)

    in_specs = [
        pl.BlockSpec((B, N, D), lambda l: (0, 0, 0)),                    # x
        pl.BlockSpec((1, 1, D), lambda l: (l, 0, 0)),                    # ln1 gamma
        pl.BlockSpec((1, 1, D), lambda l: (l, 0, 0)),                    # ln1 beta
        pl.BlockSpec((1, heads, D, dim_head), lambda l: (l, 0, 0, 0)),   # Wq
        pl.BlockSpec((1, heads, D, dim_head), lambda l: (l, 0, 0, 0)),   # Wk
        pl.BlockSpec((1, heads, D, dim_head), lambda l: (l, 0, 0, 0)),   # Wv
        pl.BlockSpec((1, heads, dim_head, D), lambda l: (l, 0, 0, 0)),   # Wout
        pl.BlockSpec((1, 1, D), lambda l: (l, 0, 0)),                    # ln2 gamma
        pl.BlockSpec((1, 1, D), lambda l: (l, 0, 0)),                    # ln2 beta
        pl.BlockSpec((1, D, hidden), lambda l: (l, 0, 0)),               # W1
        pl.BlockSpec((1, 1, hidden), lambda l: (l, 0, 0)),               # b1
        pl.BlockSpec((1, hidden, D), lambda l: (l, 0, 0)),               # W2
        pl.BlockSpec((1, 1, D), lambda l: (l, 0, 0)),                    # b2
    ]

    return pl.pallas_call(
        kernel,
        out_shape=jax.ShapeDtypeStruct((B, N, D), jnp.float32),
        grid=(depth,),
        in_specs=in_specs,
        out_specs=pl.BlockSpec((B, N, D), lambda l: (0, 0, 0)),
        compiler_params=pltpu.CompilerParams(
            # depth is a sequential (residual-carrying) axis
            dimension_semantics=("arbitrary",),
            vmem_limit_bytes=64 * 1024 * 1024,
        ),
    )


def transformer_forward(x, params, heads, dim_head):
    B, N, D = x.shape
    depth = len(params)
    inner = heads * dim_head
    hidden = params[0]["w1"].shape[1]
    dh = dim_head

    # One-time layout plumbing (outside the kernel): split Wqkv / Wout per
    # head, stack everything on a leading depth axis, cast matmul weights to
    # bf16 (LN params and biases stay f32).
    wq, wk, wv, wo = [], [], [], []
    ln1g, ln1b, ln2g, ln2b, w1, b1, w2, b2 = ([] for _ in range(8))
    for lp in params:
        wqkv = lp["wqkv"]
        wq.append(wqkv[:, 0 * inner:1 * inner].reshape(D, heads, dh).transpose(1, 0, 2))
        wk.append(wqkv[:, 1 * inner:2 * inner].reshape(D, heads, dh).transpose(1, 0, 2))
        wv.append(wqkv[:, 2 * inner:3 * inner].reshape(D, heads, dh).transpose(1, 0, 2))
        wo.append(lp["wout"].reshape(heads, dh, D))
        ln1g.append(lp["ln1_g"]); ln1b.append(lp["ln1_b"])
        ln2g.append(lp["ln2_g"]); ln2b.append(lp["ln2_b"])
        w1.append(lp["w1"]); b1.append(lp["b1"])
        w2.append(lp["w2"]); b2.append(lp["b2"])

    stack = lambda xs, dt: jnp.stack(xs).astype(dt)
    bf16, f32 = jnp.bfloat16, jnp.float32

    call = make_transformer_call(depth, B, N, D, heads, dim_head, hidden)
    return call(
        x.astype(f32),
        stack(ln1g, f32), stack(ln1b, f32),
        stack(wq, bf16), stack(wk, bf16), stack(wv, bf16), stack(wo, bf16),
        stack(ln2g, f32), stack(ln2b, f32),
        stack(w1, bf16), stack(b1, f32),
        stack(w2, bf16), stack(b2, f32),
    )


def transformer_reference(x, params, heads, dim_head):
    # Pure-JAX reference of the same math (bf16 matmul operands with f32
    # accumulation, f32 LN/softmax/GELU) for correctness checking.
    B, N, D = x.shape
    inner = heads * dim_head
    scale = dim_head ** (-0.5)

    def mm(a, w):
        return jnp.dot(a.astype(jnp.bfloat16), w.astype(jnp.bfloat16),
                       preferred_element_type=jnp.float32)

    for lp in params:
        xn = _layernorm(x, lp["ln1_g"], lp["ln1_b"])
        qkv = mm(xn, lp["wqkv"])                                   # (B, N, 3*inner)
        q, k, v = jnp.split(qkv, 3, axis=-1)
        q = q.reshape(B, N, heads, dim_head).transpose(0, 2, 1, 3)
        k = k.reshape(B, N, heads, dim_head).transpose(0, 2, 1, 3)
        v = v.reshape(B, N, heads, dim_head).transpose(0, 2, 1, 3)
        dots = jnp.einsum("bhnd,bhmd->bhnm",
                          q.astype(jnp.bfloat16), k.astype(jnp.bfloat16),
                          preferred_element_type=jnp.float32) * scale
        attn = jax.nn.softmax(dots, axis=-1)
        out = jnp.einsum("bhnm,bhmd->bhnd",
                         attn.astype(jnp.bfloat16), v.astype(jnp.bfloat16),
                         preferred_element_type=jnp.float32)
        out = out.transpose(0, 2, 1, 3).reshape(B, N, inner)
        x = mm(out, lp["wout"]) + x
        xn = _layernorm(x, lp["ln2_g"], lp["ln2_b"])
        h = mm(xn, lp["w1"]) + lp["b1"]
        h = 0.5 * h * (1.0 + jax.lax.erf(h / math.sqrt(2.0)))
        x = mm(h, lp["w2"]) + lp["b2"] + x
    return x


def init_params(key, depth, dim, heads, dim_head, mlp_dim):
    inner = heads * dim_head
    params = []
    for _ in range(depth):
        key, *ks = jax.random.split(key, 7)
        params.append({
            "ln1_g": jnp.ones((1, dim), jnp.float32),
            "ln1_b": jnp.zeros((1, dim), jnp.float32),
            "wqkv": 0.05 * jax.random.normal(ks[0], (dim, 3 * inner), jnp.float32),
            "wout": 0.05 * jax.random.normal(ks[1], (inner, dim), jnp.float32),
            "ln2_g": jnp.ones((1, dim), jnp.float32),
            "ln2_b": jnp.zeros((1, dim), jnp.float32),
            "w1": 0.05 * jax.random.normal(ks[2], (dim, mlp_dim), jnp.float32),
            "b1": 0.05 * jax.random.normal(ks[3], (1, mlp_dim), jnp.float32),
            "w2": 0.05 * jax.random.normal(ks[4], (mlp_dim, dim), jnp.float32),
            "b2": 0.05 * jax.random.normal(ks[5], (1, dim), jnp.float32),
        })
    return params


if __name__ == "__main__":
    B, N = 2, 8
    dim, depth, heads, dim_head, mlp_dim = 32, 2, 4, 8, 64

    key = jax.random.PRNGKey(0)
    kx, kp = jax.random.split(key)
    x = jax.random.normal(kx, (B, N, dim), jnp.float32)
    params = init_params(kp, depth, dim, heads, dim_head, mlp_dim)

    out = jax.block_until_ready(transformer_forward(x, params, heads, dim_head))
    ref = transformer_reference(x, params, heads, dim_head)

    assert out.shape == (B, N, dim)
    assert jnp.allclose(out, ref, atol=2e-2, rtol=2e-2), "mismatch vs reference"

    print("KERNEL_OK")
</pallas_src>

<mosaic_0001>
module attributes {stable_mosaic.version = 11 : i64} {
  func.func @kernel(%arg0: i32, %arg1: memref<2x8x32xf32, #tpu.memory_space<vmem>>, %arg2: memref<1x1x32xf32, #tpu.memory_space<vmem>>, %arg3: memref<1x1x32xf32, #tpu.memory_space<vmem>>, %arg4: memref<1x4x32x8xbf16, #tpu.memory_space<vmem>>, %arg5: memref<1x4x32x8xbf16, #tpu.memory_space<vmem>>, %arg6: memref<1x4x32x8xbf16, #tpu.memory_space<vmem>>, %arg7: memref<1x4x8x32xbf16, #tpu.memory_space<vmem>>, %arg8: memref<1x1x32xf32, #tpu.memory_space<vmem>>, %arg9: memref<1x1x32xf32, #tpu.memory_space<vmem>>, %arg10: memref<1x32x64xbf16, #tpu.memory_space<vmem>>, %arg11: memref<1x1x64xf32, #tpu.memory_space<vmem>>, %arg12: memref<1x64x32xbf16, #tpu.memory_space<vmem>>, %arg13: memref<1x1x32xf32, #tpu.memory_space<vmem>>, %arg14: memref<2x8x32xf32, #tpu.memory_space<vmem>>) attributes {dimension_semantics = [#tpu.dimension_semantics<arbitrary>], iteration_bounds = array<i64: 2>, scalar_prefetch = 0 : i64, scratch_operands = 0 : i64, tpu.core_type = #tpu.core_type<tc>, window_params = [{pipeline_mode = #tpu.pipeline_mode<synchronous>, transform_indices = @transform_0, window_bounds = array<i64: 2, 8, 32>}, {transform_indices = @transform_1, window_bounds = array<i64: 1, 1, 32>}, {transform_indices = @transform_2, window_bounds = array<i64: 1, 1, 32>}, {transform_indices = @transform_3, window_bounds = array<i64: 1, 4, 32, 8>}, {transform_indices = @transform_4, window_bounds = array<i64: 1, 4, 32, 8>}, {transform_indices = @transform_5, window_bounds = array<i64: 1, 4, 32, 8>}, {transform_indices = @transform_6, window_bounds = array<i64: 1, 4, 8, 32>}, {transform_indices = @transform_7, window_bounds = array<i64: 1, 1, 32>}, {transform_indices = @transform_8, window_bounds = array<i64: 1, 1, 32>}, {transform_indices = @transform_9, window_bounds = array<i64: 1, 32, 64>}, {transform_indices = @transform_10, window_bounds = array<i64: 1, 1, 64>}, {transform_indices = @transform_11, window_bounds = array<i64: 1, 64, 32>}, {transform_indices = @transform_12, window_bounds = array<i64: 1, 1, 32>}, {pipeline_mode = #tpu.pipeline_mode<synchronous>, transform_indices = @transform_13, window_bounds = array<i64: 2, 8, 32>}]} {
    %c0_i32 = arith.constant 0 : i32
    %0 = arith.cmpi eq, %arg0, %c0_i32 : i32
    %1 = arith.extui %0 : i1 to i32
    %c0_i32_0 = arith.constant 0 : i32
    %2 = arith.cmpi ne, %1, %c0_i32_0 : i32
    scf.if %2 {
      %c0_142 = arith.constant 0 : index
      %c0_143 = arith.constant 0 : index
      %c0_144 = arith.constant 0 : index
      %231 = vector.load %arg1[%c0_142, %c0_143, %c0_144] : memref<2x8x32xf32, #tpu.memory_space<vmem>>, vector<2x8x32xf32>
      %c0_145 = arith.constant 0 : index
      %c0_146 = arith.constant 0 : index
      %c0_147 = arith.constant 0 : index
      %232 = vector.load %arg14[%c0_145, %c0_146, %c0_147] : memref<2x8x32xf32, #tpu.memory_space<vmem>>, vector<2x8x32xf32>
      tpu.vector_store %arg14[%c0_145, %c0_146, %c0_147], %231 {strides = array<i32>} : memref<2x8x32xf32, #tpu.memory_space<vmem>>, vector<2x8x32xf32>,
    } else {
    }
    %c0 = arith.constant 0 : index
    %c0_1 = arith.constant 0 : index
    %c0_2 = arith.constant 0 : index
    %3 = vector.load %arg14[%c0, %c0_1, %c0_2] : memref<2x8x32xf32, #tpu.memory_space<vmem>>, vector<2x8x32xf32>
    %4 = vector.shape_cast %3 : vector<2x8x32xf32> to vector<16x32xf32>
    %c0_3 = arith.constant 0 : index
    %c0_4 = arith.constant 0 : index
    %c0_5 = arith.constant 0 : index
    %5 = vector.load %arg2[%c0_3, %c0_4, %c0_5] : memref<1x1x32xf32, #tpu.memory_space<vmem>>, vector<1x1x32xf32>
    %6 = vector.shape_cast %5 : vector<1x1x32xf32> to vector<1x32xf32>
    %c0_6 = arith.constant 0 : index
    %c0_7 = arith.constant 0 : index
    %c0_8 = arith.constant 0 : index
    %7 = vector.load %arg3[%c0_6, %c0_7, %c0_8] : memref<1x1x32xf32, #tpu.memory_space<vmem>>, vector<1x1x32xf32>
    %8 = vector.shape_cast %7 : vector<1x1x32xf32> to vector<1x32xf32>
    %cst = arith.constant dense<0.000000e+00> : vector<16xf32>
    %9 = vector.multi_reduction <add>, %4, %cst [1] : vector<16x32xf32> to vector<16xf32>
    %10 = vector.shape_cast %9 : vector<16xf32> to vector<16x1xf32>
    %cst_9 = arith.constant 3.200000e+01 : f32
    %11 = vector.broadcast %cst_9 : f32 to vector<16x1xf32>
    %12 = arith.divf %10, %11 : vector<16x1xf32>
    %13 = vector.broadcast %12 : vector<16x1xf32> to vector<16x32xf32>
    %14 = arith.subf %4, %13 : vector<16x32xf32>
    %15 = arith.mulf %14, %14 : vector<16x32xf32>
    %cst_10 = arith.constant dense<0.000000e+00> : vector<16xf32>
    %16 = vector.multi_reduction <add>, %15, %cst_10 [1] : vector<16x32xf32> to vector<16xf32>
    %17 = vector.shape_cast %16 : vector<16xf32> to vector<16x1xf32>
    %cst_11 = arith.constant 3.200000e+01 : f32
    %18 = vector.broadcast %cst_11 : f32 to vector<16x1xf32>
    %19 = arith.divf %17, %18 : vector<16x1xf32>
    %20 = vector.broadcast %12 : vector<16x1xf32> to vector<16x32xf32>
    %21 = arith.subf %4, %20 : vector<16x32xf32>
    %cst_12 = arith.constant 9.99999974E-6 : f32
    %22 = vector.broadcast %cst_12 : f32 to vector<16x1xf32>
    %23 = arith.addf %19, %22 : vector<16x1xf32>
    %24 = math.rsqrt %23 : vector<16x1xf32>
    %25 = vector.broadcast %24 : vector<16x1xf32> to vector<16x32xf32>
    %26 = arith.mulf %21, %25 : vector<16x32xf32>
    %27 = vector.broadcast %6 : vector<1x32xf32> to vector<16x32xf32>
    %28 = arith.mulf %26, %27 : vector<16x32xf32>
    %29 = vector.broadcast %8 : vector<1x32xf32> to vector<16x32xf32>
    %30 = arith.addf %28, %29 : vector<16x32xf32>
    %31 = arith.truncf %30 : vector<16x32xf32> to vector<16x32xbf16>
    %cst_13 = arith.constant 0.000000e+00 : f32
    %32 = vector.broadcast %cst_13 : f32 to vector<16x32xf32>
    %c0_14 = arith.constant 0 : index
    %c0_15 = arith.constant 0 : index
    %c0_16 = arith.constant 0 : index
    %c0_17 = arith.constant 0 : index
    %33 = vector.load %arg4[%c0_14, %c0_15, %c0_16, %c0_17] : memref<1x4x32x8xbf16, #tpu.memory_space<vmem>>, vector<1x1x32x8xbf16>
    %34 = vector.shape_cast %33 : vector<1x1x32x8xbf16> to vector<32x8xbf16>
    %cst_18 = arith.constant dense<0.000000e+00> : vector<16x8xf32>
    %35 = tpu.matmul %31, %34, %cst_18 {dimension_numbers = #tpu.dot_dimension_numbers<[1], [0], [0], [1], [0, 0, 1, 1], [], []>} : vector<16x32xbf16>, vector<32x8xbf16>, vector<16x8xf32> -> vector<16x8xf32>
    %c0_19 = arith.constant 0 : index
    %c0_20 = arith.constant 0 : index
    %c0_21 = arith.constant 0 : index
    %c0_22 = arith.constant 0 : index
    %36 = vector.load %arg5[%c0_19, %c0_20, %c0_21, %c0_22] : memref<1x4x32x8xbf16, #tpu.memory_space<vmem>>, vector<1x1x32x8xbf16>
    %37 = vector.shape_cast %36 : vector<1x1x32x8xbf16> to vector<32x8xbf16>
    %cst_23 = arith.constant dense<0.000000e+00> : vector<16x8xf32>
    %38 = tpu.matmul %31, %37, %cst_23 {dimension_numbers = #tpu.dot_dimension_numbers<[1], [0], [0], [1], [0, 0, 1, 1], [], []>} : vector<16x32xbf16>, vector<32x8xbf16>, vector<16x8xf32> -> vector<16x8xf32>
    %c0_24 = arith.constant 0 : index
    %c0_25 = arith.constant 0 : index
    %c0_26 = arith.constant 0 : index
    %c0_27 = arith.constant 0 : index
    %39 = vector.load %arg6[%c0_24, %c0_25, %c0_26, %c0_27] : memref<1x4x32x8xbf16, #tpu.memory_space<vmem>>, vector<1x1x32x8xbf16>
    %40 = vector.shape_cast %39 : vector<1x1x32x8xbf16> to vector<32x8xbf16>
    %cst_28 = arith.constant dense<0.000000e+00> : vector<16x8xf32>
    %41 = tpu.matmul %31, %40, %cst_28 {dimension_numbers = #tpu.dot_dimension_numbers<[1], [0], [0], [1], [0, 0, 1, 1], [], []>} : vector<16x32xbf16>, vector<32x8xbf16>, vector<16x8xf32> -> vector<16x8xf32>
    %42 = vector.shape_cast %35 : vector<16x8xf32> to vector<2x8x8xf32>
    %43 = vector.shape_cast %38 : vector<16x8xf32> to vector<2x8x8xf32>
    %44 = vector.shape_cast %41 : vector<16x8xf32> to vector<2x8x8xf32>
    %45 = arith.truncf %42 : vector<2x8x8xf32> to vector<2x8x8xbf16>
    %46 = arith.truncf %43 : vector<2x8x8xf32> to vector<2x8x8xbf16>
    "tpu.trace_start"() <{level = 10 : i32, message = "bnk,bmk->bnm"}> : () -> ()
    %cst_29 = arith.constant dense<0.000000e+00> : vector<2x8x8xf32>
    %47 = tpu.matmul %45, %46, %cst_29 {dimension_numbers = #tpu.dot_dimension_numbers<[2], [2], [1], [1], [0, 0, 0, 1, 1, 1], [0], [0]>} : vector<2x8x8xbf16>, vector<2x8x8xbf16>, vector<2x8x8xf32> -> vector<2x8x8xf32>
    "tpu.trace_stop"() : () -> ()
    %cst_30 = arith.constant 0.353553385 : f32
    %48 = vector.broadcast %cst_30 : f32 to vector<2x8x8xf32>
    %49 = arith.mulf %47, %48 : vector<2x8x8xf32>
    %cst_31 = arith.constant dense<0xFF800000> : vector<2x8xf32>
    %50 = vector.multi_reduction <maximumf>, %49, %cst_31 [2] : vector<2x8x8xf32> to vector<2x8xf32>
    %51 = vector.shape_cast %50 : vector<2x8xf32> to vector<2x8x1xf32>
    %52 = vector.broadcast %51 : vector<2x8x1xf32> to vector<2x8x8xf32>
    %53 = arith.subf %49, %52 : vector<2x8x8xf32>
    %54 = math.exp %53 : vector<2x8x8xf32>
    %cst_32 = arith.constant dense<0.000000e+00> : vector<2x8xf32>
    %55 = vector.multi_reduction <add>, %54, %cst_32 [2] : vector<2x8x8xf32> to vector<2x8xf32>
    %56 = vector.shape_cast %55 : vector<2x8xf32> to vector<2x8x1xf32>
    %57 = tpu.reciprocal %56 {approx = true} : vector<2x8x1xf32> -> vector<2x8x1xf32>
    %58 = vector.broadcast %57 : vector<2x8x1xf32> to vector<2x8x8xf32>
    %59 = arith.mulf %54, %58 : vector<2x8x8xf32>
    %60 = arith.truncf %59 : vector<2x8x8xf32> to vector<2x8x8xbf16>
    %61 = arith.truncf %44 : vector<2x8x8xf32> to vector<2x8x8xbf16>
    "tpu.trace_start"() <{level = 10 : i32, message = "bnm,bmk->bnk"}> : () -> ()
    %cst_33 = arith.constant dense<0.000000e+00> : vector<2x8x8xf32>
    %62 = tpu.matmul %60, %61, %cst_33 {dimension_numbers = #tpu.dot_dimension_numbers<[2], [1], [1], [2], [0, 0, 0, 1, 1, 2], [0], [0]>} : vector<2x8x8xbf16>, vector<2x8x8xbf16>, vector<2x8x8xf32> -> vector<2x8x8xf32>
    "tpu.trace_stop"() : () -> ()
    %63 = vector.shape_cast %62 : vector<2x8x8xf32> to vector<16x8xf32>
    %64 = arith.truncf %63 : vector<16x8xf32> to vector<16x8xbf16>
    %c0_34 = arith.constant 0 : index
    %c0_35 = arith.constant 0 : index
    %c0_36 = arith.constant 0 : index
    %c0_37 = arith.constant 0 : index
    %65 = vector.load %arg7[%c0_34, %c0_35, %c0_36, %c0_37] : memref<1x4x8x32xbf16, #tpu.memory_space<vmem>>, vector<1x1x8x32xbf16>
    %66 = vector.shape_cast %65 : vector<1x1x8x32xbf16> to vector<8x32xbf16>
    %cst_38 = arith.constant dense<0.000000e+00> : vector<16x32xf32>
    %67 = tpu.matmul %64, %66, %cst_38 {dimension_numbers = #tpu.dot_dimension_numbers<[1], [0], [0], [1], [0, 0, 1, 1], [], []>} : vector<16x8xbf16>, vector<8x32xbf16>, vector<16x32xf32> -> vector<16x32xf32>
    %68 = arith.addf %32, %67 : vector<16x32xf32>
    %c0_39 = arith.constant 0 : index
    %c1 = arith.constant 1 : index
    %c0_40 = arith.constant 0 : index
    %c0_41 = arith.constant 0 : index
    %69 = vector.load %arg4[%c0_39, %c1, %c0_40, %c0_41] : memref<1x4x32x8xbf16, #tpu.memory_space<vmem>>, vector<1x1x32x8xbf16>
    %70 = vector.shape_cast %69 : vector<1x1x32x8xbf16> to vector<32x8xbf16>
    %cst_42 = arith.constant dense<0.000000e+00> : vector<16x8xf32>
    %71 = tpu.matmul %31, %70, %cst_42 {dimension_numbers = #tpu.dot_dimension_numbers<[1], [0], [0], [1], [0, 0, 1, 1], [], []>} : vector<16x32xbf16>, vector<32x8xbf16>, vector<16x8xf32> -> vector<16x8xf32>
    %c0_43 = arith.constant 0 : index
    %c1_44 = arith.constant 1 : index
    %c0_45 = arith.constant 0 : index
    %c0_46 = arith.constant 0 : index
    %72 = vector.load %arg5[%c0_43, %c1_44, %c0_45, %c0_46] : memref<1x4x32x8xbf16, #tpu.memory_space<vmem>>, vector<1x1x32x8xbf16>
    %73 = vector.shape_cast %72 : vector<1x1x32x8xbf16> to vector<32x8xbf16>
    %cst_47 = arith.constant dense<0.000000e+00> : vector<16x8xf32>
    %74 = tpu.matmul %31, %73, %cst_47 {dimension_numbers = #tpu.dot_dimension_numbers<[1], [0], [0], [1], [0, 0, 1, 1], [], []>} : vector<16x32xbf16>, vector<32x8xbf16>, vector<16x8xf32> -> vector<16x8xf32>
    %c0_48 = arith.constant 0 : index
    %c1_49 = arith.constant 1 : index
    %c0_50 = arith.constant 0 : index
    %c0_51 = arith.constant 0 : index
    %75 = vector.load %arg6[%c0_48, %c1_49, %c0_50, %c0_51] : memref<1x4x32x8xbf16, #tpu.memory_space<vmem>>, vector<1x1x32x8xbf16>
    %76 = vector.shape_cast %75 : vector<1x1x32x8xbf16> to vector<32x8xbf16>
    %cst_52 = arith.constant dense<0.000000e+00> : vector<16x8xf32>
    %77 = tpu.matmul %31, %76, %cst_52 {dimension_numbers = #tpu.dot_dimension_numbers<[1], [0], [0], [1], [0, 0, 1, 1], [], []>} : vector<16x32xbf16>, vector<32x8xbf16>, vector<16x8xf32> -> vector<16x8xf32>
    %78 = vector.shape_cast %71 : vector<16x8xf32> to vector<2x8x8xf32>
    %79 = vector.shape_cast %74 : vector<16x8xf32> to vector<2x8x8xf32>
    %80 = vector.shape_cast %77 : vector<16x8xf32> to vector<2x8x8xf32>
    %81 = arith.truncf %78 : vector<2x8x8xf32> to vector<2x8x8xbf16>
    %82 = arith.truncf %79 : vector<2x8x8xf32> to vector<2x8x8xbf16>
    "tpu.trace_start"() <{level = 10 : i32, message = "bnk,bmk->bnm"}> : () -> ()
    %cst_53 = arith.constant dense<0.000000e+00> : vector<2x8x8xf32>
    %83 = tpu.matmul %81, %82, %cst_53 {dimension_numbers = #tpu.dot_dimension_numbers<[2], [2], [1], [1], [0, 0, 0, 1, 1, 1], [0], [0]>} : vector<2x8x8xbf16>, vector<2x8x8xbf16>, vector<2x8x8xf32> -> vector<2x8x8xf32>
    "tpu.trace_stop"() : () -> ()
    %cst_54 = arith.constant 0.353553385 : f32
    %84 = vector.broadcast %cst_54 : f32 to vector<2x8x8xf32>
    %85 = arith.mulf %83, %84 : vector<2x8x8xf32>
    %cst_55 = arith.constant dense<0xFF800000> : vector<2x8xf32>
    %86 = vector.multi_reduction <maximumf>, %85, %cst_55 [2] : vector<2x8x8xf32> to vector<2x8xf32>
    %87 = vector.shape_cast %86 : vector<2x8xf32> to vector<2x8x1xf32>
    %88 = vector.broadcast %87 : vector<2x8x1xf32> to vector<2x8x8xf32>
    %89 = arith.subf %85, %88 : vector<2x8x8xf32>
    %90 = math.exp %89 : vector<2x8x8xf32>
    %cst_56 = arith.constant dense<0.000000e+00> : vector<2x8xf32>
    %91 = vector.multi_reduction <add>, %90, %cst_56 [2] : vector<2x8x8xf32> to vector<2x8xf32>
    %92 = vector.shape_cast %91 : vector<2x8xf32> to vector<2x8x1xf32>
    %93 = tpu.reciprocal %92 {approx = true} : vector<2x8x1xf32> -> vector<2x8x1xf32>
    %94 = vector.broadcast %93 : vector<2x8x1xf32> to vector<2x8x8xf32>
    %95 = arith.mulf %90, %94 : vector<2x8x8xf32>
    %96 = arith.truncf %95 : vector<2x8x8xf32> to vector<2x8x8xbf16>
    %97 = arith.truncf %80 : vector<2x8x8xf32> to vector<2x8x8xbf16>
    "tpu.trace_start"() <{level = 10 : i32, message = "bnm,bmk->bnk"}> : () -> ()
    %cst_57 = arith.constant dense<0.000000e+00> : vector<2x8x8xf32>
    %98 = tpu.matmul %96, %97, %cst_57 {dimension_numbers = #tpu.dot_dimension_numbers<[2], [1], [1], [2], [0, 0, 0, 1, 1, 2], [0], [0]>} : vector<2x8x8xbf16>, vector<2x8x8xbf16>, vector<2x8x8xf32> -> vector<2x8x8xf32>
    "tpu.trace_stop"() : () -> ()
    %99 = vector.shape_cast %98 : vector<2x8x8xf32> to vector<16x8xf32>
    %100 = arith.truncf %99 : vector<16x8xf32> to vector<16x8xbf16>
    %c0_58 = arith.constant 0 : index
    %c1_59 = arith.constant 1 : index
    %c0_60 = arith.constant 0 : index
    %c0_61 = arith.constant 0 : index
    %101 = vector.load %arg7[%c0_58, %c1_59, %c0_60, %c0_61] : memref<1x4x8x32xbf16, #tpu.memory_space<vmem>>, vector<1x1x8x32xbf16>
    %102 = vector.shape_cast %101 : vector<1x1x8x32xbf16> to vector<8x32xbf16>
    %cst_62 = arith.constant dense<0.000000e+00> : vector<16x32xf32>
    %103 = tpu.matmul %100, %102, %cst_62 {dimension_numbers = #tpu.dot_dimension_numbers<[1], [0], [0], [1], [0, 0, 1, 1], [], []>} : vector<16x8xbf16>, vector<8x32xbf16>, vector<16x32xf32> -> vector<16x32xf32>
    %104 = arith.addf %68, %103 : vector<16x32xf32>
    %c0_63 = arith.constant 0 : index
    %c2 = arith.constant 2 : index
    %c0_64 = arith.constant 0 : index
    %c0_65 = arith.constant 0 : index
    %105 = vector.load %arg4[%c0_63, %c2, %c0_64, %c0_65] : memref<1x4x32x8xbf16, #tpu.memory_space<vmem>>, vector<1x1x32x8xbf16>
    %106 = vector.shape_cast %105 : vector<1x1x32x8xbf16> to vector<32x8xbf16>
    %cst_66 = arith.constant dense<0.000000e+00> : vector<16x8xf32>
    %107 = tpu.matmul %31, %106, %cst_66 {dimension_numbers = #tpu.dot_dimension_numbers<[1], [0], [0], [1], [0, 0, 1, 1], [], []>} : vector<16x32xbf16>, vector<32x8xbf16>, vector<16x8xf32> -> vector<16x8xf32>
    %c0_67 = arith.constant 0 : index
    %c2_68 = arith.constant 2 : index
    %c0_69 = arith.constant 0 : index
    %c0_70 = arith.constant 0 : index
    %108 = vector.load %arg5[%c0_67, %c2_68, %c0_69, %c0_70] : memref<1x4x32x8xbf16, #tpu.memory_space<vmem>>, vector<1x1x32x8xbf16>
    %109 = vector.shape_cast %108 : vector<1x1x32x8xbf16> to vector<32x8xbf16>
    %cst_71 = arith.constant dense<0.000000e+00> : vector<16x8xf32>
    %110 = tpu.matmul %31, %109, %cst_71 {dimension_numbers = #tpu.dot_dimension_numbers<[1], [0], [0], [1], [0, 0, 1, 1], [], []>} : vector<16x32xbf16>, vector<32x8xbf16>, vector<16x8xf32> -> vector<16x8xf32>
    %c0_72 = arith.constant 0 : index
    %c2_73 = arith.constant 2 : index
    %c0_74 = arith.constant 0 : index
    %c0_75 = arith.constant 0 : index
    %111 = vector.load %arg6[%c0_72, %c2_73, %c0_74, %c0_75] : memref<1x4x32x8xbf16, #tpu.memory_space<vmem>>, vector<1x1x32x8xbf16>
    %112 = vector.shape_cast %111 : vector<1x1x32x8xbf16> to vector<32x8xbf16>
    %cst_76 = arith.constant dense<0.000000e+00> : vector<16x8xf32>
    %113 = tpu.matmul %31, %112, %cst_76 {dimension_numbers = #tpu.dot_dimension_numbers<[1], [0], [0], [1], [0, 0, 1, 1], [], []>} : vector<16x32xbf16>, vector<32x8xbf16>, vector<16x8xf32> -> vector<16x8xf32>
    %114 = vector.shape_cast %107 : vector<16x8xf32> to vector<2x8x8xf32>
    %115 = vector.shape_cast %110 : vector<16x8xf32> to vector<2x8x8xf32>
    %116 = vector.shape_cast %113 : vector<16x8xf32> to vector<2x8x8xf32>
    %117 = arith.truncf %114 : vector<2x8x8xf32> to vector<2x8x8xbf16>
    %118 = arith.truncf %115 : vector<2x8x8xf32> to vector<2x8x8xbf16>
    "tpu.trace_start"() <{level = 10 : i32, message = "bnk,bmk->bnm"}> : () -> ()
    %cst_77 = arith.constant dense<0.000000e+00> : vector<2x8x8xf32>
    %119 = tpu.matmul %117, %118, %cst_77 {dimension_numbers = #tpu.dot_dimension_numbers<[2], [2], [1], [1], [0, 0, 0, 1, 1, 1], [0], [0]>} : vector<2x8x8xbf16>, vector<2x8x8xbf16>, vector<2x8x8xf32> -> vector<2x8x8xf32>
    "tpu.trace_stop"() : () -> ()
    %cst_78 = arith.constant 0.353553385 : f32
    %120 = vector.broadcast %cst_78 : f32 to vector<2x8x8xf32>
    %121 = arith.mulf %119, %120 : vector<2x8x8xf32>
    %cst_79 = arith.constant dense<0xFF800000> : vector<2x8xf32>
    %122 = vector.multi_reduction <maximumf>, %121, %cst_79 [2] : vector<2x8x8xf32> to vector<2x8xf32>
    %123 = vector.shape_cast %122 : vector<2x8xf32> to vector<2x8x1xf32>
    %124 = vector.broadcast %123 : vector<2x8x1xf32> to vector<2x8x8xf32>
    %125 = arith.subf %121, %124 : vector<2x8x8xf32>
    %126 = math.exp %125 : vector<2x8x8xf32>
    %cst_80 = arith.constant dense<0.000000e+00> : vector<2x8xf32>
    %127 = vector.multi_reduction <add>, %126, %cst_80 [2] : vector<2x8x8xf32> to vector<2x8xf32>
    %128 = vector.shape_cast %127 : vector<2x8xf32> to vector<2x8x1xf32>
    %129 = tpu.reciprocal %128 {approx = true} : vector<2x8x1xf32> -> vector<2x8x1xf32>
    %130 = vector.broadcast %129 : vector<2x8x1xf32> to vector<2x8x8xf32>
    %131 = arith.mulf %126, %130 : vector<2x8x8xf32>
    %132 = arith.truncf %131 : vector<2x8x8xf32> to vector<2x8x8xbf16>
    %133 = arith.truncf %116 : vector<2x8x8xf32> to vector<2x8x8xbf16>
    "tpu.trace_start"() <{level = 10 : i32, message = "bnm,bmk->bnk"}> : () -> ()
    %cst_81 = arith.constant dense<0.000000e+00> : vector<2x8x8xf32>
    %134 = tpu.matmul %132, %133, %cst_81 {dimension_numbers = #tpu.dot_dimension_numbers<[2], [1], [1], [2], [0, 0, 0, 1, 1, 2], [0], [0]>} : vector<2x8x8xbf16>, vector<2x8x8xbf16>, vector<2x8x8xf32> -> vector<2x8x8xf32>
    "tpu.trace_stop"() : () -> ()
    %135 = vector.shape_cast %134 : vector<2x8x8xf32> to vector<16x8xf32>
    %136 = arith.truncf %135 : vector<16x8xf32> to vector<16x8xbf16>
    %c0_82 = arith.constant 0 : index
    %c2_83 = arith.constant 2 : index
    %c0_84 = arith.constant 0 : index
    %c0_85 = arith.constant 0 : index
    %137 = vector.load %arg7[%c0_82, %c2_83, %c0_84, %c0_85] : memref<1x4x8x32xbf16, #tpu.memory_space<vmem>>, vector<1x1x8x32xbf16>
    %138 = vector.shape_cast %137 : vector<1x1x8x32xbf16> to vector<8x32xbf16>
    %cst_86 = arith.constant dense<0.000000e+00> : vector<16x32xf32>
    %139 = tpu.matmul %136, %138, %cst_86 {dimension_numbers = #tpu.dot_dimension_numbers<[1], [0], [0], [1], [0, 0, 1, 1], [], []>} : vector<16x8xbf16>, vector<8x32xbf16>, vector<16x32xf32> -> vector<16x32xf32>
    %140 = arith.addf %104, %139 : vector<16x32xf32>
    %c0_87 = arith.constant 0 : index
    %c3 = arith.constant 3 : index
    %c0_88 = arith.constant 0 : index
    %c0_89 = arith.constant 0 : index
    %141 = vector.load %arg4[%c0_87, %c3, %c0_88, %c0_89] : memref<1x4x32x8xbf16, #tpu.memory_space<vmem>>, vector<1x1x32x8xbf16>
    %142 = vector.shape_cast %141 : vector<1x1x32x8xbf16> to vector<32x8xbf16>
    %cst_90 = arith.constant dense<0.000000e+00> : vector<16x8xf32>
    %143 = tpu.matmul %31, %142, %cst_90 {dimension_numbers = #tpu.dot_dimension_numbers<[1], [0], [0], [1], [0, 0, 1, 1], [], []>} : vector<16x32xbf16>, vector<32x8xbf16>, vector<16x8xf32> -> vector<16x8xf32>
    %c0_91 = arith.constant 0 : index
    %c3_92 = arith.constant 3 : index
    %c0_93 = arith.constant 0 : index
    %c0_94 = arith.constant 0 : index
    %144 = vector.load %arg5[%c0_91, %c3_92, %c0_93, %c0_94] : memref<1x4x32x8xbf16, #tpu.memory_space<vmem>>, vector<1x1x32x8xbf16>
    %145 = vector.shape_cast %144 : vector<1x1x32x8xbf16> to vector<32x8xbf16>
    %cst_95 = arith.constant dense<0.000000e+00> : vector<16x8xf32>
    %146 = tpu.matmul %31, %145, %cst_95 {dimension_numbers = #tpu.dot_dimension_numbers<[1], [0], [0], [1], [0, 0, 1, 1], [], []>} : vector<16x32xbf16>, vector<32x8xbf16>, vector<16x8xf32> -> vector<16x8xf32>
    %c0_96 = arith.constant 0 : index
    %c3_97 = arith.constant 3 : index
    %c0_98 = arith.constant 0 : index
    %c0_99 = arith.constant 0 : index
    %147 = vector.load %arg6[%c0_96, %c3_97, %c0_98, %c0_99] : memref<1x4x32x8xbf16, #tpu.memory_space<vmem>>, vector<1x1x32x8xbf16>
    %148 = vector.shape_cast %147 : vector<1x1x32x8xbf16> to vector<32x8xbf16>
    %cst_100 = arith.constant dense<0.000000e+00> : vector<16x8xf32>
    %149 = tpu.matmul %31, %148, %cst_100 {dimension_numbers = #tpu.dot_dimension_numbers<[1], [0], [0], [1], [0, 0, 1, 1], [], []>} : vector<16x32xbf16>, vector<32x8xbf16>, vector<16x8xf32> -> vector<16x8xf32>
    %150 = vector.shape_cast %143 : vector<16x8xf32> to vector<2x8x8xf32>
    %151 = vector.shape_cast %146 : vector<16x8xf32> to vector<2x8x8xf32>
    %152 = vector.shape_cast %149 : vector<16x8xf32> to vector<2x8x8xf32>
    %153 = arith.truncf %150 : vector<2x8x8xf32> to vector<2x8x8xbf16>
    %154 = arith.truncf %151 : vector<2x8x8xf32> to vector<2x8x8xbf16>
    "tpu.trace_start"() <{level = 10 : i32, message = "bnk,bmk->bnm"}> : () -> ()
    %cst_101 = arith.constant dense<0.000000e+00> : vector<2x8x8xf32>
    %155 = tpu.matmul %153, %154, %cst_101 {dimension_numbers = #tpu.dot_dimension_numbers<[2], [2], [1], [1], [0, 0, 0, 1, 1, 1], [0], [0]>} : vector<2x8x8xbf16>, vector<2x8x8xbf16>, vector<2x8x8xf32> -> vector<2x8x8xf32>
    "tpu.trace_stop"() : () -> ()
    %cst_102 = arith.constant 0.353553385 : f32
    %156 = vector.broadcast %cst_102 : f32 to vector<2x8x8xf32>
    %157 = arith.mulf %155, %156 : vector<2x8x8xf32>
    %cst_103 = arith.constant dense<0xFF800000> : vector<2x8xf32>
    %158 = vector.multi_reduction <maximumf>, %157, %cst_103 [2] : vector<2x8x8xf32> to vector<2x8xf32>
    %159 = vector.shape_cast %158 : vector<2x8xf32> to vector<2x8x1xf32>
    %160 = vector.broadcast %159 : vector<2x8x1xf32> to vector<2x8x8xf32>
    %161 = arith.subf %157, %160 : vector<2x8x8xf32>
    %162 = math.exp %161 : vector<2x8x8xf32>
    %cst_104 = arith.constant dense<0.000000e+00> : vector<2x8xf32>
    %163 = vector.multi_reduction <add>, %162, %cst_104 [2] : vector<2x8x8xf32> to vector<2x8xf32>
    %164 = vector.shape_cast %163 : vector<2x8xf32> to vector<2x8x1xf32>
    %165 = tpu.reciprocal %164 {approx = true} : vector<2x8x1xf32> -> vector<2x8x1xf32>
    %166 = vector.broadcast %165 : vector<2x8x1xf32> to vector<2x8x8xf32>
    %167 = arith.mulf %162, %166 : vector<2x8x8xf32>
    %168 = arith.truncf %167 : vector<2x8x8xf32> to vector<2x8x8xbf16>
    %169 = arith.truncf %152 : vector<2x8x8xf32> to vector<2x8x8xbf16>
    "tpu.trace_start"() <{level = 10 : i32, message = "bnm,bmk->bnk"}> : () -> ()
    %cst_105 = arith.constant dense<0.000000e+00> : vector<2x8x8xf32>
    %170 = tpu.matmul %168, %169, %cst_105 {dimension_numbers = #tpu.dot_dimension_numbers<[2], [1], [1], [2], [0, 0, 0, 1, 1, 2], [0], [0]>} : vector<2x8x8xbf16>, vector<2x8x8xbf16>, vector<2x8x8xf32> -> vector<2x8x8xf32>
    "tpu.trace_stop"() : () -> ()
    %171 = vector.shape_cast %170 : vector<2x8x8xf32> to vector<16x8xf32>
    %172 = arith.truncf %171 : vector<16x8xf32> to vector<16x8xbf16>
    %c0_106 = arith.constant 0 : index
    %c3_107 = arith.constant 3 : index
    %c0_108 = arith.constant 0 : index
    %c0_109 = arith.constant 0 : index
    %173 = vector.load %arg7[%c0_106, %c3_107, %c0_108, %c0_109] : memref<1x4x8x32xbf16, #tpu.memory_space<vmem>>, vector<1x1x8x32xbf16>
    %174 = vector.shape_cast %173 : vector<1x1x8x32xbf16> to vector<8x32xbf16>
    %cst_110 = arith.constant dense<0.000000e+00> : vector<16x32xf32>
    %175 = tpu.matmul %172, %174, %cst_110 {dimension_numbers = #tpu.dot_dimension_numbers<[1], [0], [0], [1], [0, 0, 1, 1], [], []>} : vector<16x8xbf16>, vector<8x32xbf16>, vector<16x32xf32> -> vector<16x32xf32>
    %176 = arith.addf %140, %175 : vector<16x32xf32>
    %177 = arith.addf %4, %176 : vector<16x32xf32>
    %c0_111 = arith.constant 0 : index
    %c0_112 = arith.constant 0 : index
    %c0_113 = arith.constant 0 : index
    %178 = vector.load %arg8[%c0_111, %c0_112, %c0_113] : memref<1x1x32xf32, #tpu.memory_space<vmem>>, vector<1x1x32xf32>
    %179 = vector.shape_cast %178 : vector<1x1x32xf32> to vector<1x32xf32>
    %c0_114 = arith.constant 0 : index
    %c0_115 = arith.constant 0 : index
    %c0_116 = arith.constant 0 : index
    %180 = vector.load %arg9[%c0_114, %c0_115, %c0_116] : memref<1x1x32xf32, #tpu.memory_space<vmem>>, vector<1x1x32xf32>
    %181 = vector.shape_cast %180 : vector<1x1x32xf32> to vector<1x32xf32>
    %cst_117 = arith.constant dense<0.000000e+00> : vector<16xf32>
    %182 = vector.multi_reduction <add>, %177, %cst_117 [1] : vector<16x32xf32> to vector<16xf32>
    %183 = vector.shape_cast %182 : vector<16xf32> to vector<16x1xf32>
    %cst_118 = arith.constant 3.200000e+01 : f32
    %184 = vector.broadcast %cst_118 : f32 to vector<16x1xf32>
    %185 = arith.divf %183, %184 : vector<16x1xf32>
    %186 = vector.broadcast %185 : vector<16x1xf32> to vector<16x32xf32>
    %187 = arith.subf %177, %186 : vector<16x32xf32>
    %188 = arith.mulf %187, %187 : vector<16x32xf32>
    %cst_119 = arith.constant dense<0.000000e+00> : vector<16xf32>
    %189 = vector.multi_reduction <add>, %188, %cst_119 [1] : vector<16x32xf32> to vector<16xf32>
    %190 = vector.shape_cast %189 : vector<16xf32> to vector<16x1xf32>
    %cst_120 = arith.constant 3.200000e+01 : f32
    %191 = vector.broadcast %cst_120 : f32 to vector<16x1xf32>
    %192 = arith.divf %190, %191 : vector<16x1xf32>
    %193 = vector.broadcast %185 : vector<16x1xf32> to vector<16x32xf32>
    %194 = arith.subf %177, %193 : vector<16x32xf32>
    %cst_121 = arith.constant 9.99999974E-6 : f32
    %195 = vector.broadcast %cst_121 : f32 to vector<16x1xf32>
    %196 = arith.addf %192, %195 : vector<16x1xf32>
    %197 = math.rsqrt %196 : vector<16x1xf32>
    %198 = vector.broadcast %197 : vector<16x1xf32> to vector<16x32xf32>
    %199 = arith.mulf %194, %198 : vector<16x32xf32>
    %200 = vector.broadcast %179 : vector<1x32xf32> to vector<16x32xf32>
    %201 = arith.mulf %199, %200 : vector<16x32xf32>
    %202 = vector.broadcast %181 : vector<1x32xf32> to vector<16x32xf32>
    %203 = arith.addf %201, %202 : vector<16x32xf32>
    %204 = arith.truncf %203 : vector<16x32xf32> to vector<16x32xbf16>
    %c0_122 = arith.constant 0 : index
    %c0_123 = arith.constant 0 : index
    %c0_124 = arith.constant 0 : index
    %205 = vector.load %arg10[%c0_122, %c0_123, %c0_124] : memref<1x32x64xbf16, #tpu.memory_space<vmem>>, vector<1x32x64xbf16>
    %206 = vector.shape_cast %205 : vector<1x32x64xbf16> to vector<32x64xbf16>
    %cst_125 = arith.constant dense<0.000000e+00> : vector<16x64xf32>
    %207 = tpu.matmul %204, %206, %cst_125 {dimension_numbers = #tpu.dot_dimension_numbers<[1], [0], [0], [1], [0, 0, 1, 1], [], []>} : vector<16x32xbf16>, vector<32x64xbf16>, vector<16x64xf32> -> vector<16x64xf32>
    %c0_126 = arith.constant 0 : index
    %c0_127 = arith.constant 0 : index
    %c0_128 = arith.constant 0 : index
    %208 = vector.load %arg11[%c0_126, %c0_127, %c0_128] : memref<1x1x64xf32, #tpu.memory_space<vmem>>, vector<1x1x64xf32>
    %209 = vector.shape_cast %208 : vector<1x1x64xf32> to vector<1x64xf32>
    %210 = vector.broadcast %209 : vector<1x64xf32> to vector<16x64xf32>
    %211 = arith.addf %207, %210 : vector<16x64xf32>
    %cst_129 = arith.constant 5.000000e-01 : f32
    %212 = vector.broadcast %cst_129 : f32 to vector<16x64xf32>
    %213 = arith.mulf %212, %211 : vector<16x64xf32>
    %cst_130 = arith.constant 0.707106769 : f32
    %214 = vector.broadcast %cst_130 : f32 to vector<16x64xf32>
    %215 = arith.mulf %211, %214 : vector<16x64xf32>
    %216 = math.erf %215 : vector<16x64xf32>
    %cst_131 = arith.constant 1.000000e+00 : f32
    %217 = vector.broadcast %cst_131 : f32 to vector<16x64xf32>
    %218 = arith.addf %217, %216 : vector<16x64xf32>
    %219 = arith.mulf %213, %218 : vector<16x64xf32>
    %220 = arith.truncf %219 : vector<16x64xf32> to vector<16x64xbf16>
    %c0_132 = arith.constant 0 : index
    %c0_133 = arith.constant 0 : index
    %c0_134 = arith.constant 0 : index
    %221 = vector.load %arg12[%c0_132, %c0_133, %c0_134] : memref<1x64x32xbf16, #tpu.memory_space<vmem>>, vector<1x64x32xbf16>
    %222 = vector.shape_cast %221 : vector<1x64x32xbf16> to vector<64x32xbf16>
    %cst_135 = arith.constant dense<0.000000e+00> : vector<16x32xf32>
    %223 = tpu.matmul %220, %222, %cst_135 {dimension_numbers = #tpu.dot_dimension_numbers<[1], [0], [0], [1], [0, 0, 1, 1], [], []>} : vector<16x64xbf16>, vector<64x32xbf16>, vector<16x32xf32> -> vector<16x32xf32>
    %c0_136 = arith.constant 0 : index
    %c0_137 = arith.constant 0 : index
    %c0_138 = arith.constant 0 : index
    %224 = vector.load %arg13[%c0_136, %c0_137, %c0_138] : memref<1x1x32xf32, #tpu.memory_space<vmem>>, vector<1x1x32xf32>
    %225 = vector.shape_cast %224 : vector<1x1x32xf32> to vector<1x32xf32>
    %226 = vector.broadcast %225 : vector<1x32xf32> to vector<16x32xf32>
    %227 = arith.addf %223, %226 : vector<16x32xf32>
    %228 = arith.addf %177, %227 : vector<16x32xf32>
    %229 = vector.shape_cast %228 : vector<16x32xf32> to vector<2x8x32xf32>
    %c0_139 = arith.constant 0 : index
    %c0_140 = arith.constant 0 : index
    %c0_141 = arith.constant 0 : index
    %230 = vector.load %arg14[%c0_139, %c0_140, %c0_141] : memref<2x8x32xf32, #tpu.memory_space<vmem>>, vector<2x8x32xf32>
    tpu.vector_store %arg14[%c0_139, %c0_140, %c0_141], %229 {strides = array<i32>} : memref<2x8x32xf32, #tpu.memory_space<vmem>>, vector<2x8x32xf32>,
    return
  }
  func.func @transform_0(%arg0: i32) -> (i32, i32, i32) {
    %c0_i32 = arith.constant 0 : i32
    %c0_i32_0 = arith.constant 0 : i32
    %c0_i32_1 = arith.constant 0 : i32
    %c0_i32_2 = arith.constant 0 : i32
    return %c0_i32, %c0_i32_0, %c0_i32_1 : i32, i32, i32
  }
  func.func @transform_1(%arg0: i32) -> (i32, i32, i32) {
    %c0_i32 = arith.constant 0 : i32
    %c0_i32_0 = arith.constant 0 : i32
    %c0_i32_1 = arith.constant 0 : i32
    return %arg0, %c0_i32, %c0_i32_0 : i32, i32, i32
  }
  func.func @transform_2(%arg0: i32) -> (i32, i32, i32) {
    %c0_i32 = arith.constant 0 : i32
    %c0_i32_0 = arith.constant 0 : i32
    %c0_i32_1 = arith.constant 0 : i32
    return %arg0, %c0_i32, %c0_i32_0 : i32, i32, i32
  }
  func.func @transform_3(%arg0: i32) -> (i32, i32, i32, i32) {
    %c0_i32 = arith.constant 0 : i32
    %c0_i32_0 = arith.constant 0 : i32
    %c0_i32_1 = arith.constant 0 : i32
    %c0_i32_2 = arith.constant 0 : i32
    return %arg0, %c0_i32, %c0_i32_0, %c0_i32_1 : i32, i32, i32, i32
  }
  func.func @transform_4(%arg0: i32) -> (i32, i32, i32, i32) {
    %c0_i32 = arith.constant 0 : i32
    %c0_i32_0 = arith.constant 0 : i32
    %c0_i32_1 = arith.constant 0 : i32
    %c0_i32_2 = arith.constant 0 : i32
    return %arg0, %c0_i32, %c0_i32_0, %c0_i32_1 : i32, i32, i32, i32
  }
  func.func @transform_5(%arg0: i32) -> (i32, i32, i32, i32) {
    %c0_i32 = arith.constant 0 : i32
    %c0_i32_0 = arith.constant 0 : i32
    %c0_i32_1 = arith.constant 0 : i32
    %c0_i32_2 = arith.constant 0 : i32
    return %arg0, %c0_i32, %c0_i32_0, %c0_i32_1 : i32, i32, i32, i32
  }
  func.func @transform_6(%arg0: i32) -> (i32, i32, i32, i32) {
    %c0_i32 = arith.constant 0 : i32
    %c0_i32_0 = arith.constant 0 : i32
    %c0_i32_1 = arith.constant 0 : i32
    %c0_i32_2 = arith.constant 0 : i32
    return %arg0, %c0_i32, %c0_i32_0, %c0_i32_1 : i32, i32, i32, i32
  }
  func.func @transform_7(%arg0: i32) -> (i32, i32, i32) {
    %c0_i32 = arith.constant 0 : i32
    %c0_i32_0 = arith.constant 0 : i32
    %c0_i32_1 = arith.constant 0 : i32
    return %arg0, %c0_i32, %c0_i32_0 : i32, i32, i32
  }
  func.func @transform_8(%arg0: i32) -> (i32, i32, i32) {
    %c0_i32 = arith.constant 0 : i32
    %c0_i32_0 = arith.constant 0 : i32
    %c0_i32_1 = arith.constant 0 : i32
    return %arg0, %c0_i32, %c0_i32_0 : i32, i32, i32
  }
  func.func @transform_9(%arg0: i32) -> (i32, i32, i32) {
    %c0_i32 = arith.constant 0 : i32
    %c0_i32_0 = arith.constant 0 : i32
    %c0_i32_1 = arith.constant 0 : i32
    return %arg0, %c0_i32, %c0_i32_0 : i32, i32, i32
  }
  func.func @transform_10(%arg0: i32) -> (i32, i32, i32) {
    %c0_i32 = arith.constant 0 : i32
    %c0_i32_0 = arith.constant 0 : i32
    %c0_i32_1 = arith.constant 0 : i32
    return %arg0, %c0_i32, %c0_i32_0 : i32, i32, i32
  }
  func.func @transform_11(%arg0: i32) -> (i32, i32, i32) {
    %c0_i32 = arith.constant 0 : i32
    %c0_i32_0 = arith.constant 0 : i32
    %c0_i32_1 = arith.constant 0 : i32
    return %arg0, %c0_i32, %c0_i32_0 : i32, i32, i32
  }
  func.func @transform_12(%arg0: i32) -> (i32, i32, i32) {
    %c0_i32 = arith.constant 0 : i32
    %c0_i32_0 = arith.constant 0 : i32
    %c0_i32_1 = arith.constant 0 : i32
    return %arg0, %c0_i32, %c0_i32_0 : i32, i32, i32
  }
  func.func @transform_13(%arg0: i32) -> (i32, i32, i32) {
    %c0_i32 = arith.constant 0 : i32
    %c0_i32_0 = arith.constant 0 : i32
    %c0_i32_1 = arith.constant 0 : i32
    %c0_i32_2 = arith.constant 0 : i32
    return %c0_i32, %c0_i32_0, %c0_i32_1 : i32, i32, i32
  }
}

</mosaic_0001>

<llo_original>
// kernel: tpu_custom_call.1
$region0: #{tpu_custom_call.1}
  #allocation0 [shape = 'u32[]', space=smem, size = 0x4, offset = 0x4, fixed_abs, tag = 'smem constant byte address 0x4 - core index']
  #allocation1 [shape = 'u32[144,128]{1,0:T(1,128)}', space=vmem, size = 0x12000, scoped, tag = 'internal scratch']
  %s0 = inlined_call_operand.vmem [shape: f32[2,8,32], index: 0, kind: input, shape index: {}]
  %s1 = inlined_call_operand.vmem [shape: f32[2,1,32], index: 1, kind: input, shape index: {}]
  %s2 = inlined_call_operand.vmem [shape: f32[2,1,32], index: 2, kind: input, shape index: {}]
  %s3 = inlined_call_operand.vmem [shape: bf16[2,4,32,8], index: 3, kind: input, shape index: {}]
  %s4 = inlined_call_operand.vmem [shape: bf16[2,4,32,8], index: 4, kind: input, shape index: {}]
  %s5 = inlined_call_operand.vmem [shape: bf16[2,4,32,8], index: 5, kind: input, shape index: {}]
  %s6 = inlined_call_operand.vmem [shape: bf16[2,4,8,32], index: 6, kind: input, shape index: {}]
  %s7 = inlined_call_operand.vmem [shape: f32[2,1,32], index: 7, kind: input, shape index: {}]
  %s8 = inlined_call_operand.vmem [shape: f32[2,1,32], index: 8, kind: input, shape index: {}]
  %s9 = inlined_call_operand.vmem [shape: bf16[2,32,64], index: 9, kind: input, shape index: {}]
  %s10 = inlined_call_operand.vmem [shape: f32[2,1,64], index: 10, kind: input, shape index: {}]
  %s11 = inlined_call_operand.vmem [shape: bf16[2,64,32], index: 11, kind: input, shape index: {}]
  %s12 = inlined_call_operand.vmem [shape: f32[2,1,32], index: 12, kind: input, shape index: {}]
  %s13 = inlined_call_operand.hbm [shape: f32[2,8,32], index: 13, kind: output, shape index: {}]
  %s14 = sld [smem:[#allocation0]]
  $region89: #{tpu_custom_call.1} parent=0
    _
  %s16 = ssub.s32 1, %s14
  %s17 = scalar_select 0, %s16, %s14
  $region1: #{tpu_custom_call.1} parent=0
    #allocation2 [shape = 'u8[8192]{0}', space=vmem, size = 0x2000, scoped, tag = 'output window, operand 0, single buffered']
    #allocation3 [shape = 's32[2]{0}', space=sflag, size = 0x8, scoped, tag = 'scoped memory for tpu_custom_call.1']
    %18 = vsyncpa [#allocation3], 0
    loop: start=0, step=1, limit=4
    $region2: #{tpu_custom_call.1} parent=1 // loop_pre_header
      _
    $region3: #{tpu_custom_call.1} parent=1 // loop_header
      %s20 = sphi 0, %s24
      %p21 = scmp.ge.s32.totalorder %s20, 4
      %s28 = sphi 0, %s28
      %s30 = sphi 0, %s28
      %s31 = sphi 0, %s30
      %s45 = sphi 0, %s31
      %s51 = sphi 0, %s53
      %s54 = sphi 0, %s51
      %s55 = sphi 0, %s54
      %s71 = sphi 0, %s55
      %s77 = sphi 0, %s79
      %s80 = sphi 0, %s77
      %s81 = sphi 0, %s80
      %s97 = sphi 0, %s81
      %s103 = sphi 0, %s105
      %s106 = sphi 0, %s103
      %s107 = sphi 0, %s106
      %s123 = sphi 0, %s107
      %s129 = sphi 0, %s131
      %s132 = sphi 0, %s129
      %s133 = sphi 0, %s132
      %s149 = sphi 0, %s133
      %s155 = sphi 0, %s157
      %s158 = sphi 0, %s155
      %s159 = sphi 0, %s158
      %s175 = sphi 0, %s159
      %s181 = sphi 0, %s183
      %s184 = sphi 0, %s181
      %s185 = sphi 0, %s184
      %s201 = sphi 0, %s185
      %s207 = sphi 0, %s209
      %s210 = sphi 0, %s207
      %s211 = sphi 0, %s210
      %s227 = sphi 0, %s211
      %s233 = sphi 0, %s235
      %s236 = sphi 0, %s233
      %s237 = sphi 0, %s236
      %s253 = sphi 0, %s237
      %s259 = sphi 0, %s261
      %s262 = sphi 0, %s259
      %s263 = sphi 0, %s262
      %s279 = sphi 0, %s263
      %s285 = sphi 0, %s287
      %s288 = sphi 0, %s285
      %s289 = sphi 0, %s288
      %s305 = sphi 0, %s289
      %s311 = sphi 0, %s313
      %s314 = sphi 0, %s311
      %s315 = sphi 0, %s314
      %s331 = sphi 0, %s315
      %s337 = sphi 0, %s339
      %s340 = sphi 0, %s337
      %s341 = sphi 0, %s340
      %s357 = sphi 0, %s341
      %s361 = sphi 0, %s361
      %s363 = sphi 0, %s361
      %s364 = sphi 0, %s363
      %s378 = sphi 0, %s364
    $region4: #{tpu_custom_call.1} parent=1 // loop_header_branch
      %23 = sbr.rel (%p21) target = $region8
    $region5: #{tpu_custom_call.1} parent=1 // loop_body
      %s25 = ssub.s32 %s20, 1
      %s26 = ssub.s32 %s20, 2
      %s27 = sadd.s32 %s20, 1
      %s29 = sadd.s32 %s28, 1
      %p32 = scmp.eq.s32.totalorder %s20, 1
      %p33 = scmp.ne.s32.totalorder %s28, %s30
      %p34 = scmp.eq.s32.totalorder %s20, 0
      %p35 = por %p33, %p34
      %p36 = scmp.ne.s32.totalorder %s28, %s30
      %p37 = scmp.eq.s32.totalorder %s25, 1
      %p38 = por %p36, %p37
      %p39 = scmp.ne.s32.totalorder %s30, %s31
      %p40 = scmp.eq.s32.totalorder %s25, 0
      %p41 = por %p39, %p40
      %p42 = scmp.ne.s32.totalorder %s30, %s31
      %p43 = scmp.eq.s32.totalorder %s26, 1
      %p44 = por %p42, %p43
      %p46 = scmp.ne.s32.totalorder %s31, %s45
      %p47 = scmp.eq.s32.totalorder %s26, 0
      %p48 = por %p46, %p47
      %s49 = ssub.s32 %s20, %s27
      %p50 = scmp.eq.s32.totalorder %s49, 0
      %s52 = sadd.s32 %s51, 1
      %s53 = scalar_select %p50, %s51, %s52
      %p56 = pneg %p50
      %p57 = scmp.eq.s32.totalorder %s20, 1
      %p58 = por %p56, %p57
      %p59 = scmp.ne.s32.totalorder %s51, %s54
      %p60 = scmp.eq.s32.totalorder %s20, 0
      %p61 = por %p59, %p60
      %p62 = scmp.ne.s32.totalorder %s51, %s54
      %p63 = scmp.eq.s32.totalorder %s25, 1
      %p64 = por %p62, %p63
      %p65 = scmp.ne.s32.totalorder %s54, %s55
      %p66 = scmp.eq.s32.totalorder %s25, 0
      %p67 = por %p65, %p66
      %p68 = scmp.ne.s32.totalorder %s54, %s55
      %p69 = scmp.eq.s32.totalorder %s26, 1
      %p70 = por %p68, %p69
      %p72 = scmp.ne.s32.totalorder %s55, %s71
      %p73 = scmp.eq.s32.totalorder %s26, 0
      %p74 = por %p72, %p73
      %s75 = ssub.s32 %s20, %s27
      %p76 = scmp.eq.s32.totalorder %s75, 0
      %s78 = sadd.s32 %s77, 1
      %s79 = scalar_select %p76, %s77, %s78
      %p82 = pneg %p76
      %p83 = scmp.eq.s32.totalorder %s20, 1
      %p84 = por %p82, %p83
      %p85 = scmp.ne.s32.totalorder %s77, %s80
      %p86 = scmp.eq.s32.totalorder %s20, 0
      %p87 = por %p85, %p86
      %p88 = scmp.ne.s32.totalorder %s77, %s80
      %p89 = scmp.eq.s32.totalorder %s25, 1
      %p90 = por %p88, %p89
      %p91 = scmp.ne.s32.totalorder %s80, %s81
      %p92 = scmp.eq.s32.totalorder %s25, 0
      %p93 = por %p91, %p92
      %p94 = scmp.ne.s32.totalorder %s80, %s81
      %p95 = scmp.eq.s32.totalorder %s26, 1
      %p96 = por %p94, %p95
      %p98 = scmp.ne.s32.totalorder %s81, %s97
      %p99 = scmp.eq.s32.totalorder %s26, 0
      %p100 = por %p98, %p99
      %s101 = ssub.s32 %s20, %s27
      %p102 = scmp.eq.s32.totalorder %s101, 0
      %s104 = sadd.s32 %s103, 1
      %s105 = scalar_select %p102, %s103, %s104
      %p108 = pneg %p102
      %p109 = scmp.eq.s32.totalorder %s20, 1
      %p110 = por %p108, %p109
      %p111 = scmp.ne.s32.totalorder %s103, %s106
      %p112 = scmp.eq.s32.totalorder %s20, 0
      %p113 = por %p111, %p112
      %p114 = scmp.ne.s32.totalorder %s103, %s106
      %p115 = scmp.eq.s32.totalorder %s25, 1
      %p116 = por %p114, %p115
      %p117 = scmp.ne.s32.totalorder %s106, %s107
      %p118 = scmp.eq.s32.totalorder %s25, 0
      %p119 = por %p117, %p118
      %p120 = scmp.ne.s32.totalorder %s106, %s107
      %p121 = scmp.eq.s32.totalorder %s26, 1
      %p122 = por %p120, %p121
      %p124 = scmp.ne.s32.totalorder %s107, %s123
      %p125 = scmp.eq.s32.totalorder %s26, 0
      %p126 = por %p124, %p125
      %s127 = ssub.s32 %s20, %s27
      %p128 = scmp.eq.s32.totalorder %s127, 0
      %s130 = sadd.s32 %s129, 1
      %s131 = scalar_select %p128, %s129, %s130
      %p134 = pneg %p128
      %p135 = scmp.eq.s32.totalorder %s20, 1
      %p136 = por %p134, %p135
      %p137 = scmp.ne.s32.totalorder %s129, %s132
      %p138 = scmp.eq.s32.totalorder %s20, 0
      %p139 = por %p137, %p138
      %p140 = scmp.ne.s32.totalorder %s129, %s132
      %p141 = scmp.eq.s32.totalorder %s25, 1
      %p142 = por %p140, %p141
      %p143 = scmp.ne.s32.totalorder %s132, %s133
      %p144 = scmp.eq.s32.totalorder %s25, 0
      %p145 = por %p143, %p144
      %p146 = scmp.ne.s32.totalorder %s132, %s133
      %p147 = scmp.eq.s32.totalorder %s26, 1
      %p148 = por %p146, %p147
      %p150 = scmp.ne.s32.totalorder %s133, %s149
      %p151 = scmp.eq.s32.totalorder %s26, 0
      %p152 = por %p150, %p151
      %s153 = ssub.s32 %s20, %s27
      %p154 = scmp.eq.s32.totalorder %s153, 0
      %s156 = sadd.s32 %s155, 1
      %s157 = scalar_select %p154, %s155, %s156
      %p160 = pneg %p154
      %p161 = scmp.eq.s32.totalorder %s20, 1
      %p162 = por %p160, %p161
      %p163 = scmp.ne.s32.totalorder %s155, %s158
      %p164 = scmp.eq.s32.totalorder %s20, 0
      %p165 = por %p163, %p164
      %p166 = scmp.ne.s32.totalorder %s155, %s158
      %p167 = scmp.eq.s32.totalorder %s25, 1
      %p168 = por %p166, %p167
      %p169 = scmp.ne.s32.totalorder %s158, %s159
      %p170 = scmp.eq.s32.totalorder %s25, 0
      %p171 = por %p169, %p170
      %p172 = scmp.ne.s32.totalorder %s158, %s159
      %p173 = scmp.eq.s32.totalorder %s26, 1
      %p174 = por %p172, %p173
      %p176 = scmp.ne.s32.totalorder %s159, %s175
      %p177 = scmp.eq.s32.totalorder %s26, 0
      %p178 = por %p176, %p177
      %s179 = ssub.s32 %s20, %s27
      %p180 = scmp.eq.s32.totalorder %s179, 0
      %s182 = sadd.s32 %s181, 1
      %s183 = scalar_select %p180, %s181, %s182
      %p186 = pneg %p180
      %p187 = scmp.eq.s32.totalorder %s20, 1
      %p188 = por %p186, %p187
      %p189 = scmp.ne.s32.totalorder %s181, %s184
      %p190 = scmp.eq.s32.totalorder %s20, 0
      %p191 = por %p189, %p190
      %p192 = scmp.ne.s32.totalorder %s181, %s184
      %p193 = scmp.eq.s32.totalorder %s25, 1
      %p194 = por %p192, %p193
      %p195 = scmp.ne.s32.totalorder %s184, %s185
      %p196 = scmp.eq.s32.totalorder %s25, 0
      %p197 = por %p195, %p196
      %p198 = scmp.ne.s32.totalorder %s184, %s185
      %p199 = scmp.eq.s32.totalorder %s26, 1
      %p200 = por %p198, %p199
      %p202 = scmp.ne.s32.totalorder %s185, %s201
      %p203 = scmp.eq.s32.totalorder %s26, 0
      %p204 = por %p202, %p203
      %s205 = ssub.s32 %s20, %s27
      %p206 = scmp.eq.s32.totalorder %s205, 0
      %s208 = sadd.s32 %s207, 1
      %s209 = scalar_select %p206, %s207, %s208
      %p212 = pneg %p206
      %p213 = scmp.eq.s32.totalorder %s20, 1
      %p214 = por %p212, %p213
      %p215 = scmp.ne.s32.totalorder %s207, %s210
      %p216 = scmp.eq.s32.totalorder %s20, 0
      %p217 = por %p215, %p216
      %p218 = scmp.ne.s32.totalorder %s207, %s210
      %p219 = scmp.eq.s32.totalorder %s25, 1
      %p220 = por %p218, %p219
      %p221 = scmp.ne.s32.totalorder %s210, %s211
      %p222 = scmp.eq.s32.totalorder %s25, 0
      %p223 = por %p221, %p222
      %p224 = scmp.ne.s32.totalorder %s210, %s211
      %p225 = scmp.eq.s32.totalorder %s26, 1
      %p226 = por %p224, %p225
      %p228 = scmp.ne.s32.totalorder %s211, %s227
      %p229 = scmp.eq.s32.totalorder %s26, 0
      %p230 = por %p228, %p229
      %s231 = ssub.s32 %s20, %s27
      %p232 = scmp.eq.s32.totalorder %s231, 0
      %s234 = sadd.s32 %s233, 1
      %s235 = scalar_select %p232, %s233, %s234
      %p238 = pneg %p232
      %p239 = scmp.eq.s32.totalorder %s20, 1
      %p240 = por %p238, %p239
      %p241 = scmp.ne.s32.totalorder %s233, %s236
      %p242 = scmp.eq.s32.totalorder %s20, 0
      %p243 = por %p241, %p242
      %p244 = scmp.ne.s32.totalorder %s233, %s236
      %p245 = scmp.eq.s32.totalorder %s25, 1
      %p246 = por %p244, %p245
      %p247 = scmp.ne.s32.totalorder %s236, %s237
      %p248 = scmp.eq.s32.totalorder %s25, 0
      %p249 = por %p247, %p248
      %p250 = scmp.ne.s32.totalorder %s236, %s237
      %p251 = scmp.eq.s32.totalorder %s26, 1
      %p252 = por %p250, %p251
      %p254 = scmp.ne.s32.totalorder %s237, %s253
      %p255 = scmp.eq.s32.totalorder %s26, 0
      %p256 = por %p254, %p255
      %s257 = ssub.s32 %s20, %s27
      %p258 = scmp.eq.s32.totalorder %s257, 0
      %s260 = sadd.s32 %s259, 1
      %s261 = scalar_select %p258, %s259, %s260
      %p264 = pneg %p258
      %p265 = scmp.eq.s32.totalorder %s20, 1
      %p266 = por %p264, %p265
      %p267 = scmp.ne.s32.totalorder %s259, %s262
      %p268 = scmp.eq.s32.totalorder %s20, 0
      %p269 = por %p267, %p268
      %p270 = scmp.ne.s32.totalorder %s259, %s262
      %p271 = scmp.eq.s32.totalorder %s25, 1
      %p272 = por %p270, %p271
      %p273 = scmp.ne.s32.totalorder %s262, %s263
      %p274 = scmp.eq.s32.totalorder %s25, 0
      %p275 = por %p273, %p274
      %p276 = scmp.ne.s32.totalorder %s262, %s263
      %p277 = scmp.eq.s32.totalorder %s26, 1
      %p278 = por %p276, %p277
      %p280 = scmp.ne.s32.totalorder %s263, %s279
      %p281 = scmp.eq.s32.totalorder %s26, 0
      %p282 = por %p280, %p281
      %s283 = ssub.s32 %s20, %s27
      %p284 = scmp.eq.s32.totalorder %s283, 0
      %s286 = sadd.s32 %s285, 1
      %s287 = scalar_select %p284, %s285, %s286
      %p290 = pneg %p284
      %p291 = scmp.eq.s32.totalorder %s20, 1
      %p292 = por %p290, %p291
      %p293 = scmp.ne.s32.totalorder %s285, %s288
      %p294 = scmp.eq.s32.totalorder %s20, 0
      %p295 = por %p293, %p294
      %p296 = scmp.ne.s32.totalorder %s285, %s288
      %p297 = scmp.eq.s32.totalorder %s25, 1
      %p298 = por %p296, %p297
      %p299 = scmp.ne.s32.totalorder %s288, %s289
      %p300 = scmp.eq.s32.totalorder %s25, 0
      %p301 = por %p299, %p300
      %p302 = scmp.ne.s32.totalorder %s288, %s289
      %p303 = scmp.eq.s32.totalorder %s26, 1
      %p304 = por %p302, %p303
      %p306 = scmp.ne.s32.totalorder %s289, %s305
      %p307 = scmp.eq.s32.totalorder %s26, 0
      %p308 = por %p306, %p307
      %s309 = ssub.s32 %s20, %s27
      %p310 = scmp.eq.s32.totalorder %s309, 0
      %s312 = sadd.s32 %s311, 1
      %s313 = scalar_select %p310, %s311, %s312
      %p316 = pneg %p310
      %p317 = scmp.eq.s32.totalorder %s20, 1
      %p318 = por %p316, %p317
      %p319 = scmp.ne.s32.totalorder %s311, %s314
      %p320 = scmp.eq.s32.totalorder %s20, 0
      %p321 = por %p319, %p320
      %p322 = scmp.ne.s32.totalorder %s311, %s314
      %p323 = scmp.eq.s32.totalorder %s25, 1
      %p324 = por %p322, %p323
      %p325 = scmp.ne.s32.totalorder %s314, %s315
      %p326 = scmp.eq.s32.totalorder %s25, 0
      %p327 = por %p325, %p326
      %p328 = scmp.ne.s32.totalorder %s314, %s315
      %p329 = scmp.eq.s32.totalorder %s26, 1
      %p330 = por %p328, %p329
      %p332 = scmp.ne.s32.totalorder %s315, %s331
      %p333 = scmp.eq.s32.totalorder %s26, 0
      %p334 = por %p332, %p333
      %s335 = ssub.s32 %s20, %s27
      %p336 = scmp.eq.s32.totalorder %s335, 0
      %s338 = sadd.s32 %s337, 1
      %s339 = scalar_select %p336, %s337, %s338
      %p342 = pneg %p336
      %p343 = scmp.eq.s32.totalorder %s20, 1
      %p344 = por %p342, %p343
      %p345 = scmp.ne.s32.totalorder %s337, %s340
      %p346 = scmp.eq.s32.totalorder %s20, 0
      %p347 = por %p345, %p346
      %p348 = scmp.ne.s32.totalorder %s337, %s340
      %p349 = scmp.eq.s32.totalorder %s25, 1
      %p350 = por %p348, %p349
      %p351 = scmp.ne.s32.totalorder %s340, %s341
      %p352 = scmp.eq.s32.totalorder %s25, 0
      %p353 = por %p351, %p352
      %p354 = scmp.ne.s32.totalorder %s340, %s341
      %p355 = scmp.eq.s32.totalorder %s26, 1
      %p356 = por %p354, %p355
      %p358 = scmp.ne.s32.totalorder %s341, %s357
      %p359 = scmp.eq.s32.totalorder %s26, 0
      %p360 = por %p358, %p359
      %s362 = sadd.s32 %s361, 1
      %p365 = scmp.eq.s32.totalorder %s20, 1
      %p366 = scmp.ne.s32.totalorder %s361, %s363
      %p367 = scmp.eq.s32.totalorder %s20, 0
      %p368 = por %p366, %p367
      %p369 = scmp.ne.s32.totalorder %s361, %s363
      %p370 = scmp.eq.s32.totalorder %s25, 1
      %p371 = por %p369, %p370
      %p372 = scmp.ne.s32.totalorder %s363, %s364
      %p373 = scmp.eq.s32.totalorder %s25, 0
      %p374 = por %p372, %p373
      %p375 = scmp.ne.s32.totalorder %s363, %s364
      %p376 = scmp.eq.s32.totalorder %s26, 1
      %p377 = por %p375, %p376
      %p379 = scmp.ne.s32.totalorder %s364, %s378
      %p380 = scmp.eq.s32.totalorder %s26, 0
      %p381 = por %p379, %p380
      %p382 = scmp.le.s32.totalorder 1, %s20
      %p383 = scmp.lt.s32.totalorder %s20, 3
      %p384 = pnand %p382, %p383
      %p385 = pneg %p384
      // Predicated region
      $region9: #{tpu_custom_call.1} parent=5 // pred_check
        _
      $region10: #{tpu_custom_call.1} parent=5 // pred_check_branch
        %387 = sbr.rel (%p384) target = $region12
      $region11: #{tpu_custom_call.1} parent=5 // pred_region
        %s388 = ssub.s32 %s20, 1
        // Predicated region
        $region13: #{tpu_custom_call.1} parent=11 // pred_check
          %p389 = pneg %p41
        $region14: #{tpu_custom_call.1} parent=11 // pred_check_branch
          %391 = sbr.rel (%p389) target = $region16
        $region15: #{tpu_custom_call.1} parent=11 // pred_region
          _
        $region16: #{tpu_custom_call.1} parent=11 // pred_fallthru
          _
      $region12: #{tpu_custom_call.1} parent=5 // pred_fallthru
        _
      %p392 = scmp.lt.s32.totalorder %s20, 2
      // Predicated region
      $region17: #{tpu_custom_call.1} parent=5 // pred_check
        %p393 = pneg %p392
      $region18: #{tpu_custom_call.1} parent=5 // pred_check_branch
        %395 = sbr.rel (%p393) target = $region20
      $region19: #{tpu_custom_call.1} parent=5 // pred_region
        // Predicated region
        $region21: #{tpu_custom_call.1} parent=19 // pred_check
          %p396 = pneg %p61
        $region22: #{tpu_custom_call.1} parent=19 // pred_check_branch
          %398 = sbr.rel (%p396) target = $region24
        $region23: #{tpu_custom_call.1} parent=19 // pred_region
          %p399 = scmp.lt.s32.totalorder %s20, 1
          %s400 = scalar_select %p399, %s20, 1
          %s401 = scalar_lea.vmem %s1, %s400
        $region24: #{tpu_custom_call.1} parent=19 // pred_fallthru
          _
        // Predicated region
        $region25: #{tpu_custom_call.1} parent=19 // pred_check
          %p402 = pneg %p87
        $region26: #{tpu_custom_call.1} parent=19 // pred_check_branch
          %404 = sbr.rel (%p402) target = $region28
        $region27: #{tpu_custom_call.1} parent=19 // pred_region
          %p405 = scmp.lt.s32.totalorder %s20, 1
          %s406 = scalar_select %p405, %s20, 1
          %s407 = scalar_lea.vmem %s2, %s406
        $region28: #{tpu_custom_call.1} parent=19 // pred_fallthru
          _
        // Predicated region
        $region29: #{tpu_custom_call.1} parent=19 // pred_check
          %p408 = pneg %p113
        $region30: #{tpu_custom_call.1} parent=19 // pred_check_branch
          %410 = sbr.rel (%p408) target = $region32
        $region31: #{tpu_custom_call.1} parent=19 // pred_region
          %p411 = scmp.lt.s32.totalorder %s20, 1
          %s412 = scalar_select %p411, %s20, 1
          %s413 = smul.addr %s412, 16
          %s414 = smul.addr %s413, 4
          %s415 = scalar_lea.vmem %s3, %s414
        $region32: #{tpu_custom_call.1} parent=19 // pred_fallthru
          _
        // Predicated region
        $region33: #{tpu_custom_call.1} parent=19 // pred_check
          %p416 = pneg %p139
        $region34: #{tpu_custom_call.1} parent=19 // pred_check_branch
          %418 = sbr.rel (%p416) target = $region36
        $region35: #{tpu_custom_call.1} parent=19 // pred_region
          %p419 = scmp.lt.s32.totalorder %s20, 1
          %s420 = scalar_select %p419, %s20, 1
          %s421 = smul.addr %s420, 16
          %s422 = smul.addr %s421, 4
          %s423 = scalar_lea.vmem %s4, %s422
        $region36: #{tpu_custom_call.1} parent=19 // pred_fallthru
          _
        // Predicated region
        $region37: #{tpu_custom_call.1} parent=19 // pred_check
          %p424 = pneg %p165
        $region38: #{tpu_custom_call.1} parent=19 // pred_check_branch
          %426 = sbr.rel (%p424) target = $region40
        $region39: #{tpu_custom_call.1} parent=19 // pred_region
          %p427 = scmp.lt.s32.totalorder %s20, 1
          %s428 = scalar_select %p427, %s20, 1
          %s429 = smul.addr %s428, 16
          %s430 = smul.addr %s429, 4
          %s431 = scalar_lea.vmem %s5, %s430
        $region40: #{tpu_custom_call.1} parent=19 // pred_fallthru
          _
        // Predicated region
        $region41: #{tpu_custom_call.1} parent=19 // pred_check
          %p432 = pneg %p191
        $region42: #{tpu_custom_call.1} parent=19 // pred_check_branch
          %434 = sbr.rel (%p432) target = $region44
        $region43: #{tpu_custom_call.1} parent=19 // pred_region
          %p435 = scmp.lt.s32.totalorder %s20, 1
          %s436 = scalar_select %p435, %s20, 1
          %s437 = smul.addr %s436, 4
          %s438 = smul.addr %s437, 4
          %s439 = scalar_lea.vmem %s6, %s438
        $region44: #{tpu_custom_call.1} parent=19 // pred_fallthru
          _
        // Predicated region
        $region45: #{tpu_custom_call.1} parent=19 // pred_check
          %p440 = pneg %p217
        $region46: #{tpu_custom_call.1} parent=19 // pred_check_branch
          %442 = sbr.rel (%p440) target = $region48
        $region47: #{tpu_custom_call.1} parent=19 // pred_region
          %p443 = scmp.lt.s32.totalorder %s20, 1
          %s444 = scalar_select %p443, %s20, 1
          %s445 = scalar_lea.vmem %s7, %s444
        $region48: #{tpu_custom_call.1} parent=19 // pred_fallthru
          _
        // Predicated region
        $region49: #{tpu_custom_call.1} parent=19 // pred_check
          %p446 = pneg %p243
        $region50: #{tpu_custom_call.1} parent=19 // pred_check_branch
          %448 = sbr.rel (%p446) target = $region52
        $region51: #{tpu_custom_call.1} parent=19 // pred_region
          %p449 = scmp.lt.s32.totalorder %s20, 1
          %s450 = scalar_select %p449, %s20, 1
          %s451 = scalar_lea.vmem %s8, %s450
        $region52: #{tpu_custom_call.1} parent=19 // pred_fallthru
          _
        // Predicated region
        $region53: #{tpu_custom_call.1} parent=19 // pred_check
          %p452 = pneg %p269
        $region54: #{tpu_custom_call.1} parent=19 // pred_check_branch
          %454 = sbr.rel (%p452) target = $region56
        $region55: #{tpu_custom_call.1} parent=19 // pred_region
          %p455 = scmp.lt.s32.totalorder %s20, 1
          %s456 = scalar_select %p455, %s20, 1
          %s457 = smul.addr %s456, 4
          %s458 = smul.addr %s457, 4
          %s459 = scalar_lea.vmem %s9, %s458
        $region56: #{tpu_custom_call.1} parent=19 // pred_fallthru
          _
        // Predicated region
        $region57: #{tpu_custom_call.1} parent=19 // pred_check
          %p460 = pneg %p295
        $region58: #{tpu_custom_call.1} parent=19 // pred_check_branch
          %462 = sbr.rel (%p460) target = $region60
        $region59: #{tpu_custom_call.1} parent=19 // pred_region
          %p463 = scmp.lt.s32.totalorder %s20, 1
          %s464 = scalar_select %p463, %s20, 1
          %s465 = scalar_lea.vmem %s10, %s464
        $region60: #{tpu_custom_call.1} parent=19 // pred_fallthru
          _
        // Predicated region
        $region61: #{tpu_custom_call.1} parent=19 // pred_check
          %p466 = pneg %p321
        $region62: #{tpu_custom_call.1} parent=19 // pred_check_branch
          %468 = sbr.rel (%p466) target = $region64
        $region63: #{tpu_custom_call.1} parent=19 // pred_region
          %p469 = scmp.lt.s32.totalorder %s20, 1
          %s470 = scalar_select %p469, %s20, 1
          %s471 = smul.addr %s470, 8
          %s472 = smul.addr %s471, 4
          %s473 = scalar_lea.vmem %s11, %s472
        $region64: #{tpu_custom_call.1} parent=19 // pred_fallthru
          _
        // Predicated region
        $region65: #{tpu_custom_call.1} parent=19 // pred_check
          %p474 = pneg %p347
        $region66: #{tpu_custom_call.1} parent=19 // pred_check_branch
          %476 = sbr.rel (%p474) target = $region68
        $region67: #{tpu_custom_call.1} parent=19 // pred_region
          %p477 = scmp.lt.s32.totalorder %s20, 1
          %s478 = scalar_select %p477, %s20, 1
          %s479 = scalar_lea.vmem %s12, %s478
        $region68: #{tpu_custom_call.1} parent=19 // pred_fallthru
          _
      $region20: #{tpu_custom_call.1} parent=5 // pred_fallthru
        _
      %p480 = scmp.le.s32.totalorder 1, %s20
      %p481 = scmp.lt.s32.totalorder %s20, 3
      %p482 = pnand %p480, %p481
      %p483 = pneg %p482
      // Predicated region
      $region69: #{tpu_custom_call.1} parent=5 // pred_check
        _
      $region70: #{tpu_custom_call.1} parent=5 // pred_check_branch
        %485 = sbr.rel (%p482) target = $region72
      $region71: #{tpu_custom_call.1} parent=5 // pred_region
        %s486 = ssub.s32 %s20, 1
        %p487 = pneg %p41
        %p488 = pneg %p38
        %p489 = scmp.lt.s32.totalorder %s25, 1
        %s490 = scalar_select %p489, %s25, 1
        %s491 = scalar_lea.vmem %s1, %s490
        %p492 = pneg %p67
        %p493 = pneg %p64
        %p494 = scmp.lt.s32.totalorder %s25, 1
        %s495 = scalar_select %p494, %s25, 1
        %s496 = scalar_lea.vmem %s2, %s495
        %p497 = pneg %p93
        %p498 = pneg %p90
        %p499 = scmp.lt.s32.totalorder %s25, 1
        %s500 = scalar_select %p499, %s25, 1
        %s501 = smul.addr %s500, 16
        %s502 = smul.addr %s501, 4
        %s503 = scalar_lea.vmem %s3, %s502
        %p504 = pneg %p119
        %p505 = pneg %p116
        %p506 = scmp.lt.s32.totalorder %s25, 1
        %s507 = scalar_select %p506, %s25, 1
        %s508 = smul.addr %s507, 16
        %s509 = smul.addr %s508, 4
        %s510 = scalar_lea.vmem %s4, %s509
        %p511 = pneg %p145
        %p512 = pneg %p142
        %p513 = scmp.lt.s32.totalorder %s25, 1
        %s514 = scalar_select %p513, %s25, 1
        %s515 = smul.addr %s514, 16
        %s516 = smul.addr %s515, 4
        %s517 = scalar_lea.vmem %s5, %s516
        %p518 = pneg %p171
        %p519 = pneg %p168
        %p520 = scmp.lt.s32.totalorder %s25, 1
        %s521 = scalar_select %p520, %s25, 1
        %s522 = smul.addr %s521, 4
        %s523 = smul.addr %s522, 4
        %s524 = scalar_lea.vmem %s6, %s523
        %p525 = pneg %p197
        %p526 = pneg %p194
        %p527 = scmp.lt.s32.totalorder %s25, 1
        %s528 = scalar_select %p527, %s25, 1
        %s529 = scalar_lea.vmem %s7, %s528
        %p530 = pneg %p223
        %p531 = pneg %p220
        %p532 = scmp.lt.s32.totalorder %s25, 1
        %s533 = scalar_select %p532, %s25, 1
        %s534 = scalar_lea.vmem %s8, %s533
        %p535 = pneg %p249
        %p536 = pneg %p246
        %p537 = scmp.lt.s32.totalorder %s25, 1
        %s538 = scalar_select %p537, %s25, 1
        %s539 = smul.addr %s538, 4
        %s540 = smul.addr %s539, 4
        %s541 = scalar_lea.vmem %s9, %s540
        %p542 = pneg %p275
        %p543 = pneg %p272
        %p544 = scmp.lt.s32.totalorder %s25, 1
        %s545 = scalar_select %p544, %s25, 1
        %s546 = scalar_lea.vmem %s10, %s545
        %p547 = pneg %p301
        %p548 = pneg %p298
        %p549 = scmp.lt.s32.totalorder %s25, 1
        %s550 = scalar_select %p549, %s25, 1
        %s551 = smul.addr %s550, 8
        %s552 = smul.addr %s551, 4
        %s553 = scalar_lea.vmem %s11, %s552
        %p554 = pneg %p327
        %p555 = pneg %p324
        %p556 = scmp.lt.s32.totalorder %s25, 1
        %s557 = scalar_select %p556, %s25, 1
        %s558 = scalar_lea.vmem %s12, %s557
        %p559 = pneg %p353
        %p560 = pneg %p350
        %p561 = pneg %p374
        %p562 = pneg %p371
        %p563 = scmp.lt.s32.totalorder %s25, 1
        %s564 = scalar_select %p563, %s25, 1
        %s565 = scalar_lea.vmem %s1, %s564
        %p566 = scmp.lt.s32.totalorder %s25, 1
        %s567 = scalar_select %p566, %s25, 1
        %s568 = scalar_lea.vmem %s2, %s567
        %p569 = scmp.lt.s32.totalorder %s25, 1
        %s570 = scalar_select %p569, %s25, 1
        %s571 = smul.addr %s570, 16
        %s572 = smul.addr %s571, 4
        %s573 = scalar_lea.vmem %s3, %s572
        %p574 = scmp.lt.s32.totalorder %s25, 1
        %s575 = scalar_select %p574, %s25, 1
        %s576 = smul.addr %s575, 16
        %s577 = smul.addr %s576, 4
        %s578 = scalar_lea.vmem %s4, %s577
        %p579 = scmp.lt.s32.totalorder %s25, 1
        %s580 = scalar_select %p579, %s25, 1
        %s581 = smul.addr %s580, 16
        %s582 = smul.addr %s581, 4
        %s583 = scalar_lea.vmem %s5, %s582
        %p584 = scmp.lt.s32.totalorder %s25, 1
        %s585 = scalar_select %p584, %s25, 1
        %s586 = smul.addr %s585, 4
        %s587 = smul.addr %s586, 4
        %s588 = scalar_lea.vmem %s6, %s587
        %p589 = scmp.lt.s32.totalorder %s25, 1
        %s590 = scalar_select %p589, %s25, 1
        %s591 = scalar_lea.vmem %s7, %s590
        %p592 = scmp.lt.s32.totalorder %s25, 1
        %s593 = scalar_select %p592, %s25, 1
        %s594 = scalar_lea.vmem %s8, %s593
        %p595 = scmp.lt.s32.totalorder %s25, 1
        %s596 = scalar_select %p595, %s25, 1
        %s597 = smul.addr %s596, 4
        %s598 = smul.addr %s597, 4
        %s599 = scalar_lea.vmem %s9, %s598
        %p600 = scmp.lt.s32.totalorder %s25, 1
        %s601 = scalar_select %p600, %s25, 1
        %s602 = scalar_lea.vmem %s10, %s601
        %p603 = scmp.lt.s32.totalorder %s25, 1
        %s604 = scalar_select %p603, %s25, 1
        %s605 = smul.addr %s604, 8
        %s606 = smul.addr %s605, 4
        %s607 = scalar_lea.vmem %s11, %s606
        %p608 = scmp.lt.s32.totalorder %s25, 1
        %s609 = scalar_select %p608, %s25, 1
        %s610 = scalar_lea.vmem %s12, %s609
        %p612 = scmp.eq.s32.totalorder %s25, 0
        // Predicated region
        $region73: #{tpu_custom_call.1} parent=71 // pred_check
          %p613 = pneg %p612
        $region74: #{tpu_custom_call.1} parent=71 // pred_check_branch
          %615 = sbr.rel (%p613) target = $region76
        $region75: #{tpu_custom_call.1} parent=71 // pred_region
          %v616 = vld [vmem:[%s0] sm:$0xff]
          %v617 = vld [vmem:[%s0 + $0x8] sm:$0xff]
          %vm618 = vcmask 261120
          %619 = vst.msk [vmem:[#allocation2] sm:$0xff] %vm618, %v616
          %620 = vst.msk [vmem:[#allocation2 + $0x8] sm:$0xff] %vm618, %v617
        $region76: #{tpu_custom_call.1} parent=71 // pred_fallthru
          _
        %v621 = vld [vmem:[#allocation2] sm:$0xff]
        %v622 = vld [vmem:[#allocation2 + $0x8] sm:$0xff]
        %v623 = vld [vmem:[%s565] sm:$0x1]
        %v624 = vld [vmem:[%s568] sm:$0x1]
        %vm625 = vcmask 261120
        %v626 = vsel %vm625, %v621, 0.0
        %627 = vadd.xlane.f32.xlu0 %v626
        %v628 = vpop.xlane.xlu0 %627
        %v629 = vsel %vm625, %v622, 0.0
        %630 = vadd.xlane.f32.xlu0 %v629
        %v631 = vpop.xlane.xlu0 %630
        %v632 = vrcp.pop 32.0
        %v633 = vmul.f32 %v628, %v632
        %v634 = vmul.f32 %v631, %v632
        %v635 = vsub.f32 %v621, %v633
        %v636 = vsub.f32 %v622, %v634
        %v637 = vmul.f32 %v635, %v635
        %v638 = vmul.f32 %v636, %v636
        %v639 = vsel %vm625, %v637, 0.0
        %640 = vadd.xlane.f32.xlu0 %v639
        %v641 = vpop.xlane.xlu0 %640
        %v642 = vsel %vm625, %v638, 0.0
        %643 = vadd.xlane.f32.xlu0 %v642
        %v644 = vpop.xlane.xlu0 %643
        %v645 = vmul.f32 %v641, %v632
        %v646 = vmul.f32 %v644, %v632
        %v647 = vadd.f32 %v645, 1e-05
        %v648 = vadd.f32 %v646, 1e-05
        %v649 = vrsqrt.pop %v647
        %v650 = vrsqrt.pop %v648
        %v651 = vmul.f32 %v635, %v649
        %v652 = vmul.f32 %v636, %v650
        %v654 = vlaneseq
        %v655 = vshrl.u32 %v654, 7
        %v656 = vsub.s32 0, %v655
        %v657 = vrot.slane %v623, %v656
        %v659 = vmul.f32 %v651, %v657
        %v660 = vmul.f32 %v652, %v657
        %v662 = vlaneseq
        %v663 = vshrl.u32 %v662, 7
        %v664 = vsub.s32 0, %v663
        %v665 = vrot.slane %v624, %v664
        %v667 = vadd.f32 %v659, %v665
        %v668 = vadd.f32 %v660, %v665
        %v669 = vpack.c.bf16 %v668, %v667
        %v670 = vld [vmem:[%s573] sm:$0xf]
        %v671 = vld [vmem:[%s573 + $0x4] sm:$0xf]
        %v672 = vld [vmem:[%s573 + $0x8] sm:$0xf]
        %v673 = vld [vmem:[%s573 + $0xc] sm:$0xf]
        %v678 = vunpack.c.l.b16 %v670
        %v679 = vunpack.c.l.b16 %v671
        %v680 = vunpack.c.l.b16 %v672
        %v681 = vunpack.c.l.b16 %v673
        %v682 = vpack.c.b16 %v679, %v678
        %v683 = vpack.c.b16 %v681, %v680
        %v687 = vsel %vm625, %v669, 0
        %689 = vmatprep.subr.bf16.mxu0 0
        %690 = vmatpush1.bf16.msra.mxu0 0
        %691 = vmatprep.subr.bf16.mxu0 0
        %692 = vmatpush1.bf16.msra.mxu0 0
        %693 = vmatprep.subr.bf16.mxu0 0
        %694 = vmatpush1.bf16.msra.mxu0 0
        %695 = vmatprep.subr.bf16.mxu0 0
        %696 = vmatpush1.bf16.msra.mxu0 0
        %697 = vmatprep.subr.bf16.mxu0 0
        %698 = vmatpush1.bf16.msra.mxu0 0
        %699 = vmatprep.subr.bf16.mxu0 0
        %700 = vmatpush1.bf16.msra.mxu0 0
        %701 = vmatprep.subr.bf16.mxu0 0
        %702 = vmatpush1.bf16.msra.mxu0 %v683
        %703 = vmatprep.subr.bf16.mxu0 0
        %704 = vmatpush1.bf16.msra.mxu0 %v682
        %705 = vmatprep.subr.bf16.mxu0 0
        %706 = vmatpush2.bf16.msra.mxu0 0
        %707 = vmatprep.subr.bf16.mxu0 0
        %708 = vmatpush2.bf16.msra.mxu0 0
        %709 = vmatprep.subr.bf16.mxu0 0
        %710 = vmatpush2.bf16.msra.mxu0 0
        %711 = vmatprep.subr.bf16.mxu0 0
        %712 = vmatpush2.bf16.msra.mxu0 0
        %713 = vmatprep.subr.bf16.mxu0 0
        %714 = vmatpush2.bf16.msra.mxu0 0
        %715 = vmatprep.subr.bf16.mxu0 0
        %716 = vmatpush2.bf16.msra.mxu0 0
        %717 = vmatprep.subr.bf16.mxu0 0
        %718 = vmatpush2.bf16.msra.mxu0 0
        %719 = vmatprep.subr.bf16.mxu0 0
        %720 = vmatpush2.bf16.msra.mxu0 0
        %721 = vmatprep.mubr.bf16.mxu0 0
        %722 = vmatmul.mubr.bf16.gmra.mxu0 %v687
        %v723 = vpop.f32.mrf.mxu0
        %v724 = vadd.f32 0.0, %v723
        %v725 = vpop.f32.mrf.mxu0
        %v726 = vpop.f32.mrf.mxu0
        %v727 = vadd.f32 0.0, %v726
        %v728 = vpop.f32.mrf.mxu0
        %729 = vdwg.mxu0
        %v730 = vld [vmem:[%s578] sm:$0xf]
        %v731 = vld [vmem:[%s578 + $0x4] sm:$0xf]
        %v732 = vld [vmem:[%s578 + $0x8] sm:$0xf]
        %v733 = vld [vmem:[%s578 + $0xc] sm:$0xf]
        %v738 = vunpack.c.l.b16 %v730
        %v739 = vunpack.c.l.b16 %v731
        %v740 = vunpack.c.l.b16 %v732
        %v741 = vunpack.c.l.b16 %v733
        %v742 = vpack.c.b16 %v739, %v738
        %v743 = vpack.c.b16 %v741, %v740
        %746 = vmatprep.subr.bf16.mxu0 0
        %747 = vmatpush1.bf16.msra.mxu0 0
        %748 = vmatprep.subr.bf16.mxu0 0
        %749 = vmatpush1.bf16.msra.mxu0 0
        %750 = vmatprep.subr.bf16.mxu0 0
        %751 = vmatpush1.bf16.msra.mxu0 0
        %752 = vmatprep.subr.bf16.mxu0 0
        %753 = vmatpush1.bf16.msra.mxu0 0
        %754 = vmatprep.subr.bf16.mxu0 0
        %755 = vmatpush1.bf16.msra.mxu0 0
        %756 = vmatprep.subr.bf16.mxu0 0
        %757 = vmatpush1.bf16.msra.mxu0 0
        %758 = vmatprep.subr.bf16.mxu0 0
        %759 = vmatpush1.bf16.msra.mxu0 %v743
        %760 = vmatprep.subr.bf16.mxu0 0
        %761 = vmatpush1.bf16.msra.mxu0 %v742
        %762 = vmatprep.subr.bf16.mxu0 0
        %763 = vmatpush2.bf16.msra.mxu0 0
        %764 = vmatprep.subr.bf16.mxu0 0
        %765 = vmatpush2.bf16.msra.mxu0 0
        %766 = vmatprep.subr.bf16.mxu0 0
        %767 = vmatpush2.bf16.msra.mxu0 0
        %768 = vmatprep.subr.bf16.mxu0 0
        %769 = vmatpush2.bf16.msra.mxu0 0
        %770 = vmatprep.subr.bf16.mxu0 0
        %771 = vmatpush2.bf16.msra.mxu0 0
        %772 = vmatprep.subr.bf16.mxu0 0
        %773 = vmatpush2.bf16.msra.mxu0 0
        %774 = vmatprep.subr.bf16.mxu0 0
        %775 = vmatpush2.bf16.msra.mxu0 0
        %776 = vmatprep.subr.bf16.mxu0 0
        %777 = vmatpush2.bf16.msra.mxu0 0
        %778 = vmatprep.mubr.bf16.mxu0 0
        %779 = vmatmul.mubr.bf16.gmra.mxu0 %v687
        %v780 = vpop.f32.mrf.mxu0
        %v781 = vadd.f32 0.0, %v780
        %v782 = vpop.f32.mrf.mxu0
        %v783 = vpop.f32.mrf.mxu0
        %v784 = vadd.f32 0.0, %v783
        %v785 = vpop.f32.mrf.mxu0
        %786 = vdwg.mxu0
        %v787 = vld [vmem:[%s583] sm:$0xf]
        %v788 = vld [vmem:[%s583 + $0x4] sm:$0xf]
        %v789 = vld [vmem:[%s583 + $0x8] sm:$0xf]
        %v790 = vld [vmem:[%s583 + $0xc] sm:$0xf]
        %v795 = vunpack.c.l.b16 %v787
        %v796 = vunpack.c.l.b16 %v788
        %v797 = vunpack.c.l.b16 %v789
        %v798 = vunpack.c.l.b16 %v790
        %v799 = vpack.c.b16 %v796, %v795
        %v800 = vpack.c.b16 %v798, %v797
        %803 = vmatprep.subr.bf16.mxu0 0
        %804 = vmatpush1.bf16.msra.mxu0 0
        %805 = vmatprep.subr.bf16.mxu0 0
        %806 = vmatpush1.bf16.msra.mxu0 0
        %807 = vmatprep.subr.bf16.mxu0 0
        %808 = vmatpush1.bf16.msra.mxu0 0
        %809 = vmatprep.subr.bf16.mxu0 0
        %810 = vmatpush1.bf16.msra.mxu0 0
        %811 = vmatprep.subr.bf16.mxu0 0
        %812 = vmatpush1.bf16.msra.mxu0 0
        %813 = vmatprep.subr.bf16.mxu0 0
        %814 = vmatpush1.bf16.msra.mxu0 0
        %815 = vmatprep.subr.bf16.mxu0 0
        %816 = vmatpush1.bf16.msra.mxu0 %v800
        %817 = vmatprep.subr.bf16.mxu0 0
        %818 = vmatpush1.bf16.msra.mxu0 %v799
        %819 = vmatprep.subr.bf16.mxu0 0
        %820 = vmatpush2.bf16.msra.mxu0 0
        %821 = vmatprep.subr.bf16.mxu0 0
        %822 = vmatpush2.bf16.msra.mxu0 0
        %823 = vmatprep.subr.bf16.mxu0 0
        %824 = vmatpush2.bf16.msra.mxu0 0
        %825 = vmatprep.subr.bf16.mxu0 0
        %826 = vmatpush2.bf16.msra.mxu0 0
        %827 = vmatprep.subr.bf16.mxu0 0
        %828 = vmatpush2.bf16.msra.mxu0 0
        %829 = vmatprep.subr.bf16.mxu0 0
        %830 = vmatpush2.bf16.msra.mxu0 0
        %831 = vmatprep.subr.bf16.mxu0 0
        %832 = vmatpush2.bf16.msra.mxu0 0
        %833 = vmatprep.subr.bf16.mxu0 0
        %834 = vmatpush2.bf16.msra.mxu0 0
        %835 = vmatprep.mubr.bf16.mxu0 0
        %836 = vmatmul.mubr.bf16.gmra.mxu0 %v687
        %v837 = vpop.f32.mrf.mxu0
        %v838 = vadd.f32 0.0, %v837
        %v839 = vpop.f32.mrf.mxu0
        %v840 = vpop.f32.mrf.mxu0
        %v841 = vadd.f32 0.0, %v840
        %v842 = vpop.f32.mrf.mxu0
        %843 = vdwg.mxu0
        %v844 = vpack.c.bf16 %v724, %v724
        %v845 = vpack.c.bf16 %v727, %v727
        %v846 = vpack.c.bf16 %v781, %v781
        %v847 = vpack.c.bf16 %v784, %v784
        %vm848 = vcmask 64512
        %v850 = vsel %vm848, %v844, 0
        %v853 = vsel %vm848, %v846, 0
        %855 = vmatprep.subr.bf16.mxu0 0
        %856 = vmatpush1.bf16.xpose.msra.mxu0 0
        %857 = vmatprep.subr.bf16.mxu0 0
        %858 = vmatpush1.bf16.xpose.msra.mxu0 0
        %859 = vmatprep.subr.bf16.mxu0 0
        %860 = vmatpush1.bf16.xpose.msra.mxu0 0
        %861 = vmatprep.subr.bf16.mxu0 0
        %862 = vmatpush1.bf16.xpose.msra.mxu0 0
        %863 = vmatprep.subr.bf16.mxu0 0
        %864 = vmatpush1.bf16.xpose.msra.mxu0 0
        %865 = vmatprep.subr.bf16.mxu0 0
        %866 = vmatpush1.bf16.xpose.msra.mxu0 0
        %867 = vmatprep.subr.bf16.mxu0 0
        %868 = vmatpush1.bf16.xpose.msra.mxu0 0
        %869 = vmatprep.subr.bf16.mxu0 0
        %870 = vmatpush1.bf16.xpose.msra.mxu0 %v853
        %871 = vmatprep.subr.bf16.mxu0 0
        %872 = vmatpush2.bf16.xpose.msra.mxu0 0
        %873 = vmatprep.subr.bf16.mxu0 0
        %874 = vmatpush2.bf16.xpose.msra.mxu0 0
        %875 = vmatprep.subr.bf16.mxu0 0
        %876 = vmatpush2.bf16.xpose.msra.mxu0 0
        %877 = vmatprep.subr.bf16.mxu0 0
        %878 = vmatpush2.bf16.xpose.msra.mxu0 0
        %879 = vmatprep.subr.bf16.mxu0 0
        %880 = vmatpush2.bf16.xpose.msra.mxu0 0
        %881 = vmatprep.subr.bf16.mxu0 0
        %882 = vmatpush2.bf16.xpose.msra.mxu0 0
        %883 = vmatprep.subr.bf16.mxu0 0
        %884 = vmatpush2.bf16.xpose.msra.mxu0 0
        %885 = vmatprep.subr.bf16.mxu0 0
        %886 = vmatpush2.bf16.xpose.msra.mxu0 0
        %887 = vmatprep.mubr.bf16.mxu0 0
        %888 = vmatmul.mubr.bf16.gmra.mxu0 %v850
        %v889 = vpop.f32.mrf.mxu0
        %v890 = vadd.f32 0.0, %v889
        %v891 = vpop.f32.mrf.mxu0
        %v892 = vpop.f32.mrf.mxu0
        %v893 = vpop.f32.mrf.mxu0
        %894 = vdwg.mxu0
        %v896 = vsel %vm848, %v845, 0
        %v899 = vsel %vm848, %v847, 0
        %901 = vmatprep.subr.bf16.mxu0 0
        %902 = vmatpush1.bf16.xpose.msra.mxu0 0
        %903 = vmatprep.subr.bf16.mxu0 0
        %904 = vmatpush1.bf16.xpose.msra.mxu0 0
        %905 = vmatprep.subr.bf16.mxu0 0
        %906 = vmatpush1.bf16.xpose.msra.mxu0 0
        %907 = vmatprep.subr.bf16.mxu0 0
        %908 = vmatpush1.bf16.xpose.msra.mxu0 0
        %909 = vmatprep.subr.bf16.mxu0 0
        %910 = vmatpush1.bf16.xpose.msra.mxu0 0
        %911 = vmatprep.subr.bf16.mxu0 0
        %912 = vmatpush1.bf16.xpose.msra.mxu0 0
        %913 = vmatprep.subr.bf16.mxu0 0
        %914 = vmatpush1.bf16.xpose.msra.mxu0 0
        %915 = vmatprep.subr.bf16.mxu0 0
        %916 = vmatpush1.bf16.xpose.msra.mxu0 %v899
        %917 = vmatprep.subr.bf16.mxu0 0
        %918 = vmatpush2.bf16.xpose.msra.mxu0 0
        %919 = vmatprep.subr.bf16.mxu0 0
        %920 = vmatpush2.bf16.xpose.msra.mxu0 0
        %921 = vmatprep.subr.bf16.mxu0 0
        %922 = vmatpush2.bf16.xpose.msra.mxu0 0
        %923 = vmatprep.subr.bf16.mxu0 0
        %924 = vmatpush2.bf16.xpose.msra.mxu0 0
        %925 = vmatprep.subr.bf16.mxu0 0
        %926 = vmatpush2.bf16.xpose.msra.mxu0 0
        %927 = vmatprep.subr.bf16.mxu0 0
        %928 = vmatpush2.bf16.xpose.msra.mxu0 0
        %929 = vmatprep.subr.bf16.mxu0 0
        %930 = vmatpush2.bf16.xpose.msra.mxu0 0
        %931 = vmatprep.subr.bf16.mxu0 0
        %932 = vmatpush2.bf16.xpose.msra.mxu0 0
        %933 = vmatprep.mubr.bf16.mxu0 0
        %934 = vmatmul.mubr.bf16.gmra.mxu0 %v896
        %v935 = vpop.f32.mrf.mxu0
        %v936 = vadd.f32 0.0, %v935
        %v937 = vpop.f32.mrf.mxu0
        %v938 = vpop.f32.mrf.mxu0
        %v939 = vpop.f32.mrf.mxu0
        %940 = vdwg.mxu0
        %v941 = vmul.f32 %v890, 0.35355338
        %v942 = vmul.f32 %v936, 0.35355338
        %v943 = vsel %vm848, %v941, -inf
        %944 = vmax.xlane.f32.xlu0 %v943
        %v945 = vpop.xlane.xlu0 %944
        %v946 = vsel %vm848, %v942, -inf
        %947 = vmax.xlane.f32.xlu0 %v946
        %v948 = vpop.xlane.xlu0 %947
        %v949 = vsub.f32 %v941, %v945
        %v950 = vsub.f32 %v942, %v948
        %v951 = vmul.f32 %v949, 1.442695
        %v952 = vpow.pop %v951
        %v953 = vmul.f32 %v950, 1.442695
        %v954 = vpow.pop %v953
        %v955 = vsel %vm848, %v952, 0.0
        %956 = vadd.xlane.f32.xlu0 %v955
        %v957 = vpop.xlane.xlu0 %956
        %v958 = vsel %vm848, %v954, 0.0
        %959 = vadd.xlane.f32.xlu0 %v958
        %v960 = vpop.xlane.xlu0 %959
        %v961 = vrcp.pop %v957
        %v962 = vrcp.pop %v960
        %v963 = vmul.f32 %v952, %v961
        %v964 = vmul.f32 %v954, %v962
        %v965 = vpack.c.bf16 %v963, %v963
        %v966 = vpack.c.bf16 %v964, %v964
        %v967 = vpack.c.bf16 %v838, %v838
        %v968 = vpack.c.bf16 %v841, %v841
        %v970 = vsel %vm848, %v965, 0
        %vm972 = vcmask 1043456
        %v974 = vsel %vm972, %v967, 0
        %976 = vmatprep.subr.bf16.mxu0 0
        %977 = vmatpush1.bf16.msra.mxu0 0
        %978 = vmatprep.subr.bf16.mxu0 0
        %979 = vmatpush1.bf16.msra.mxu0 0
        %980 = vmatprep.subr.bf16.mxu0 0
        %981 = vmatpush1.bf16.msra.mxu0 0
        %982 = vmatprep.subr.bf16.mxu0 0
        %983 = vmatpush1.bf16.msra.mxu0 0
        %984 = vmatprep.subr.bf16.mxu0 0
        %985 = vmatpush1.bf16.msra.mxu0 0
        %986 = vmatprep.subr.bf16.mxu0 0
        %987 = vmatpush1.bf16.msra.mxu0 0
        %988 = vmatprep.subr.bf16.mxu0 0
        %989 = vmatpush1.bf16.msra.mxu0 0
        %990 = vmatprep.subr.bf16.mxu0 0
        %991 = vmatpush1.bf16.msra.mxu0 %v974
        %992 = vmatprep.subr.bf16.mxu0 0
        %993 = vmatpush2.bf16.msra.mxu0 0
        %994 = vmatprep.subr.bf16.mxu0 0
        %995 = vmatpush2.bf16.msra.mxu0 0
        %996 = vmatprep.subr.bf16.mxu0 0
        %997 = vmatpush2.bf16.msra.mxu0 0
        %998 = vmatprep.subr.bf16.mxu0 0
        %999 = vmatpush2.bf16.msra.mxu0 0
        %1000 = vmatprep.subr.bf16.mxu0 0
        %1001 = vmatpush2.bf16.msra.mxu0 0
        %1002 = vmatprep.subr.bf16.mxu0 0
        %1003 = vmatpush2.bf16.msra.mxu0 0
        %1004 = vmatprep.subr.bf16.mxu0 0
        %1005 = vmatpush2.bf16.msra.mxu0 0
        %1006 = vmatprep.subr.bf16.mxu0 0
        %1007 = vmatpush2.bf16.msra.mxu0 0
        %1008 = vmatprep.mubr.bf16.mxu0 0
        %1009 = vmatmul.mubr.bf16.gmra.mxu0 %v970
        %v1010 = vpop.f32.mrf.mxu0
        %v1011 = vadd.f32 0.0, %v1010
        %v1012 = vpop.f32.mrf.mxu0
        %v1013 = vpop.f32.mrf.mxu0
        %v1014 = vpop.f32.mrf.mxu0
        %1015 = vdwg.mxu0
        %v1017 = vsel %vm848, %v966, 0
        %v1020 = vsel %vm972, %v968, 0
        %1022 = vmatprep.subr.bf16.mxu0 0
        %1023 = vmatpush1.bf16.msra.mxu0 0
        %1024 = vmatprep.subr.bf16.mxu0 0
        %1025 = vmatpush1.bf16.msra.mxu0 0
        %1026 = vmatprep.subr.bf16.mxu0 0
        %1027 = vmatpush1.bf16.msra.mxu0 0
        %1028 = vmatprep.subr.bf16.mxu0 0
        %1029 = vmatpush1.bf16.msra.mxu0 0
        %1030 = vmatprep.subr.bf16.mxu0 0
        %1031 = vmatpush1.bf16.msra.mxu0 0
        %1032 = vmatprep.subr.bf16.mxu0 0
        %1033 = vmatpush1.bf16.msra.mxu0 0
        %1034 = vmatprep.subr.bf16.mxu0 0
        %1035 = vmatpush1.bf16.msra.mxu0 0
        %1036 = vmatprep.subr.bf16.mxu0 0
        %1037 = vmatpush1.bf16.msra.mxu0 %v1020
        %1038 = vmatprep.subr.bf16.mxu0 0
        %1039 = vmatpush2.bf16.msra.mxu0 0
        %1040 = vmatprep.subr.bf16.mxu0 0
        %1041 = vmatpush2.bf16.msra.mxu0 0
        %1042 = vmatprep.subr.bf16.mxu0 0
        %1043 = vmatpush2.bf16.msra.mxu0 0
        %1044 = vmatprep.subr.bf16.mxu0 0
        %1045 = vmatpush2.bf16.msra.mxu0 0
        %1046 = vmatprep.subr.bf16.mxu0 0
        %1047 = vmatpush2.bf16.msra.mxu0 0
        %1048 = vmatprep.subr.bf16.mxu0 0
        %1049 = vmatpush2.bf16.msra.mxu0 0
        %1050 = vmatprep.subr.bf16.mxu0 0
        %1051 = vmatpush2.bf16.msra.mxu0 0
        %1052 = vmatprep.subr.bf16.mxu0 0
        %1053 = vmatpush2.bf16.msra.mxu0 0
        %1054 = vmatprep.mubr.bf16.mxu0 0
        %1055 = vmatmul.mubr.bf16.gmra.mxu0 %v1017
        %v1056 = vpop.f32.mrf.mxu0
        %v1057 = vadd.f32 0.0, %v1056
        %v1058 = vpop.f32.mrf.mxu0
        %v1059 = vpop.f32.mrf.mxu0
        %v1060 = vpop.f32.mrf.mxu0
        %1061 = vdwg.mxu0
        %v1062 = vpack.c.bf16 %v1057, %v1011
        %v1063 = vld [vmem:[%s588] sm:$0xf]
        %s1064 = scalar_lea.vmem %s573, 16
        %v1065 = vld [vmem:[%s1064] sm:$0xf]
        %v1066 = vld [vmem:[%s1064 + $0x4] sm:$0xf]
        %v1067 = vld [vmem:[%s1064 + $0x8] sm:$0xf]
        %v1068 = vld [vmem:[%s1064 + $0xc] sm:$0xf]
        %v1073 = vunpack.c.l.b16 %v1065
        %v1074 = vunpack.c.l.b16 %v1066
        %v1075 = vunpack.c.l.b16 %v1067
        %v1076 = vunpack.c.l.b16 %v1068
        %v1077 = vpack.c.b16 %v1074, %v1073
        %v1078 = vpack.c.b16 %v1076, %v1075
        %1081 = vmatprep.subr.bf16.mxu0 0
        %1082 = vmatpush1.bf16.msra.mxu0 0
        %1083 = vmatprep.subr.bf16.mxu0 0
        %1084 = vmatpush1.bf16.msra.mxu0 0
        %1085 = vmatprep.subr.bf16.mxu0 0
        %1086 = vmatpush1.bf16.msra.mxu0 0
        %1087 = vmatprep.subr.bf16.mxu0 0
        %1088 = vmatpush1.bf16.msra.mxu0 0
        %1089 = vmatprep.subr.bf16.mxu0 0
        %1090 = vmatpush1.bf16.msra.mxu0 0
        %1091 = vmatprep.subr.bf16.mxu0 0
        %1092 = vmatpush1.bf16.msra.mxu0 0
        %1093 = vmatprep.subr.bf16.mxu0 0
        %1094 = vmatpush1.bf16.msra.mxu0 %v1078
        %1095 = vmatprep.subr.bf16.mxu0 0
        %1096 = vmatpush1.bf16.msra.mxu0 %v1077
        %1097 = vmatprep.subr.bf16.mxu0 0
        %1098 = vmatpush2.bf16.msra.mxu0 0
        %1099 = vmatprep.subr.bf16.mxu0 0
        %1100 = vmatpush2.bf16.msra.mxu0 0
        %1101 = vmatprep.subr.bf16.mxu0 0
        %1102 = vmatpush2.bf16.msra.mxu0 0
        %1103 = vmatprep.subr.bf16.mxu0 0
        %1104 = vmatpush2.bf16.msra.mxu0 0
        %1105 = vmatprep.subr.bf16.mxu0 0
        %1106 = vmatpush2.bf16.msra.mxu0 0
        %1107 = vmatprep.subr.bf16.mxu0 0
        %1108 = vmatpush2.bf16.msra.mxu0 0
        %1109 = vmatprep.subr.bf16.mxu0 0
        %1110 = vmatpush2.bf16.msra.mxu0 0
        %1111 = vmatprep.subr.bf16.mxu0 0
        %1112 = vmatpush2.bf16.msra.mxu0 0
        %1113 = vmatprep.mubr.bf16.mxu0 0
        %1114 = vmatmul.mubr.bf16.gmra.mxu0 %v687
        %v1115 = vpop.f32.mrf.mxu0
        %v1116 = vadd.f32 0.0, %v1115
        %v1117 = vpop.f32.mrf.mxu0
        %v1118 = vpop.f32.mrf.mxu0
        %v1119 = vadd.f32 0.0, %v1118
        %v1120 = vpop.f32.mrf.mxu0
        %1121 = vdwg.mxu0
        %s1122 = scalar_lea.vmem %s578, 16
        %v1123 = vld [vmem:[%s1122] sm:$0xf]
        %v1124 = vld [vmem:[%s1122 + $0x4] sm:$0xf]
        %v1125 = vld [vmem:[%s1122 + $0x8] sm:$0xf]
        %v1126 = vld [vmem:[%s1122 + $0xc] sm:$0xf]
        %v1131 = vunpack.c.l.b16 %v1123
        %v1132 = vunpack.c.l.b16 %v1124
        %v1133 = vunpack.c.l.b16 %v1125
        %v1134 = vunpack.c.l.b16 %v1126
        %v1135 = vpack.c.b16 %v1132, %v1131
        %v1136 = vpack.c.b16 %v1134, %v1133
        %1139 = vmatprep.subr.bf16.mxu0 0
        %1140 = vmatpush1.bf16.msra.mxu0 0
        %1141 = vmatprep.subr.bf16.mxu0 0
        %1142 = vmatpush1.bf16.msra.mxu0 0
        %1143 = vmatprep.subr.bf16.mxu0 0
        %1144 = vmatpush1.bf16.msra.mxu0 0
        %1145 = vmatprep.subr.bf16.mxu0 0
        %1146 = vmatpush1.bf16.msra.mxu0 0
        %1147 = vmatprep.subr.bf16.mxu0 0
        %1148 = vmatpush1.bf16.msra.mxu0 0
        %1149 = vmatprep.subr.bf16.mxu0 0
        %1150 = vmatpush1.bf16.msra.mxu0 0
        %1151 = vmatprep.subr.bf16.mxu0 0
        %1152 = vmatpush1.bf16.msra.mxu0 %v1136
        %1153 = vmatprep.subr.bf16.mxu0 0
        %1154 = vmatpush1.bf16.msra.mxu0 %v1135
        %1155 = vmatprep.subr.bf16.mxu0 0
        %1156 = vmatpush2.bf16.msra.mxu0 0
        %1157 = vmatprep.subr.bf16.mxu0 0
        %1158 = vmatpush2.bf16.msra.mxu0 0
        %1159 = vmatprep.subr.bf16.mxu0 0
        %1160 = vmatpush2.bf16.msra.mxu0 0
        %1161 = vmatprep.subr.bf16.mxu0 0
        %1162 = vmatpush2.bf16.msra.mxu0 0
        %1163 = vmatprep.subr.bf16.mxu0 0
        %1164 = vmatpush2.bf16.msra.mxu0 0
        %1165 = vmatprep.subr.bf16.mxu0 0
        %1166 = vmatpush2.bf16.msra.mxu0 0
        %1167 = vmatprep.subr.bf16.mxu0 0
        %1168 = vmatpush2.bf16.msra.mxu0 0
        %1169 = vmatprep.subr.bf16.mxu0 0
        %1170 = vmatpush2.bf16.msra.mxu0 0
        %1171 = vmatprep.mubr.bf16.mxu0 0
        %1172 = vmatmul.mubr.bf16.gmra.mxu0 %v687
        %v1173 = vpop.f32.mrf.mxu0
        %v1174 = vadd.f32 0.0, %v1173
        %v1175 = vpop.f32.mrf.mxu0
        %v1176 = vpop.f32.mrf.mxu0
        %v1177 = vadd.f32 0.0, %v1176
        %v1178 = vpop.f32.mrf.mxu0
        %1179 = vdwg.mxu0
        %s1180 = scalar_lea.vmem %s583, 16
        %v1181 = vld [vmem:[%s1180] sm:$0xf]
        %v1182 = vld [vmem:[%s1180 + $0x4] sm:$0xf]
        %v1183 = vld [vmem:[%s1180 + $0x8] sm:$0xf]
        %v1184 = vld [vmem:[%s1180 + $0xc] sm:$0xf]
        %v1189 = vunpack.c.l.b16 %v1181
        %v1190 = vunpack.c.l.b16 %v1182
        %v1191 = vunpack.c.l.b16 %v1183
        %v1192 = vunpack.c.l.b16 %v1184
        %v1193 = vpack.c.b16 %v1190, %v1189
        %v1194 = vpack.c.b16 %v1192, %v1191
        %1197 = vmatprep.subr.bf16.mxu0 0
        %1198 = vmatpush1.bf16.msra.mxu0 0
        %1199 = vmatprep.subr.bf16.mxu0 0
        %1200 = vmatpush1.bf16.msra.mxu0 0
        %1201 = vmatprep.subr.bf16.mxu0 0
        %1202 = vmatpush1.bf16.msra.mxu0 0
        %1203 = vmatprep.subr.bf16.mxu0 0
        %1204 = vmatpush1.bf16.msra.mxu0 0
        %1205 = vmatprep.subr.bf16.mxu0 0
        %1206 = vmatpush1.bf16.msra.mxu0 0
        %1207 = vmatprep.subr.bf16.mxu0 0
        %1208 = vmatpush1.bf16.msra.mxu0 0
        %1209 = vmatprep.subr.bf16.mxu0 0
        %1210 = vmatpush1.bf16.msra.mxu0 %v1194
        %1211 = vmatprep.subr.bf16.mxu0 0
        %1212 = vmatpush1.bf16.msra.mxu0 %v1193
        %1213 = vmatprep.subr.bf16.mxu0 0
        %1214 = vmatpush2.bf16.msra.mxu0 0
        %1215 = vmatprep.subr.bf16.mxu0 0
        %1216 = vmatpush2.bf16.msra.mxu0 0
        %1217 = vmatprep.subr.bf16.mxu0 0
        %1218 = vmatpush2.bf16.msra.mxu0 0
        %1219 = vmatprep.subr.bf16.mxu0 0
        %1220 = vmatpush2.bf16.msra.mxu0 0
        %1221 = vmatprep.subr.bf16.mxu0 0
        %1222 = vmatpush2.bf16.msra.mxu0 0
        %1223 = vmatprep.subr.bf16.mxu0 0
        %1224 = vmatpush2.bf16.msra.mxu0 0
        %1225 = vmatprep.subr.bf16.mxu0 0
        %1226 = vmatpush2.bf16.msra.mxu0 0
        %1227 = vmatprep.subr.bf16.mxu0 0
        %1228 = vmatpush2.bf16.msra.mxu0 0
        %1229 = vmatprep.mubr.bf16.mxu0 0
        %1230 = vmatmul.mubr.bf16.gmra.mxu0 %v687
        %v1231 = vpop.f32.mrf.mxu0
        %v1232 = vadd.f32 0.0, %v1231
        %v1233 = vpop.f32.mrf.mxu0
        %v1234 = vpop.f32.mrf.mxu0
        %v1235 = vadd.f32 0.0, %v1234
        %v1236 = vpop.f32.mrf.mxu0
        %1237 = vdwg.mxu0
        %v1238 = vpack.c.bf16 %v1116, %v1116
        %v1239 = vpack.c.bf16 %v1119, %v1119
        %v1240 = vpack.c.bf16 %v1174, %v1174
        %v1241 = vpack.c.bf16 %v1177, %v1177
        %v1243 = vsel %vm848, %v1238, 0
        %v1246 = vsel %vm848, %v1240, 0
        %1248 = vmatprep.subr.bf16.mxu0 0
        %1249 = vmatpush1.bf16.xpose.msra.mxu0 0
        %1250 = vmatprep.subr.bf16.mxu0 0
        %1251 = vmatpush1.bf16.xpose.msra.mxu0 0
        %1252 = vmatprep.subr.bf16.mxu0 0
        %1253 = vmatpush1.bf16.xpose.msra.mxu0 0
        %1254 = vmatprep.subr.bf16.mxu0 0
        %1255 = vmatpush1.bf16.xpose.msra.mxu0 0
        %1256 = vmatprep.subr.bf16.mxu0 0
        %1257 = vmatpush1.bf16.xpose.msra.mxu0 0
        %1258 = vmatprep.subr.bf16.mxu0 0
        %1259 = vmatpush1.bf16.xpose.msra.mxu0 0
        %1260 = vmatprep.subr.bf16.mxu0 0
        %1261 = vmatpush1.bf16.xpose.msra.mxu0 0
        %1262 = vmatprep.subr.bf16.mxu0 0
        %1263 = vmatpush1.bf16.xpose.msra.mxu0 %v1246
        %1264 = vmatprep.subr.bf16.mxu0 0
        %1265 = vmatpush2.bf16.xpose.msra.mxu0 0
        %1266 = vmatprep.subr.bf16.mxu0 0
        %1267 = vmatpush2.bf16.xpose.msra.mxu0 0
        %1268 = vmatprep.subr.bf16.mxu0 0
        %1269 = vmatpush2.bf16.xpose.msra.mxu0 0
        %1270 = vmatprep.subr.bf16.mxu0 0
        %1271 = vmatpush2.bf16.xpose.msra.mxu0 0
        %1272 = vmatprep.subr.bf16.mxu0 0
        %1273 = vmatpush2.bf16.xpose.msra.mxu0 0
        %1274 = vmatprep.subr.bf16.mxu0 0
        %1275 = vmatpush2.bf16.xpose.msra.mxu0 0
        %1276 = vmatprep.subr.bf16.mxu0 0
        %1277 = vmatpush2.bf16.xpose.msra.mxu0 0
        %1278 = vmatprep.subr.bf16.mxu0 0
        %1279 = vmatpush2.bf16.xpose.msra.mxu0 0
        %1280 = vmatprep.mubr.bf16.mxu0 0
        %1281 = vmatmul.mubr.bf16.gmra.mxu0 %v1243
        %v1282 = vpop.f32.mrf.mxu0
        %v1283 = vadd.f32 0.0, %v1282
        %v1284 = vpop.f32.mrf.mxu0
        %v1285 = vpop.f32.mrf.mxu0
        %v1286 = vpop.f32.mrf.mxu0
        %1287 = vdwg.mxu0
        %v1289 = vsel %vm848, %v1239, 0
        %v1292 = vsel %vm848, %v1241, 0
        %1294 = vmatprep.subr.bf16.mxu0 0
        %1295 = vmatpush1.bf16.xpose.msra.mxu0 0
        %1296 = vmatprep.subr.bf16.mxu0 0
        %1297 = vmatpush1.bf16.xpose.msra.mxu0 0
        %1298 = vmatprep.subr.bf16.mxu0 0
        %1299 = vmatpush1.bf16.xpose.msra.mxu0 0
        %1300 = vmatprep.subr.bf16.mxu0 0
        %1301 = vmatpush1.bf16.xpose.msra.mxu0 0
        %1302 = vmatprep.subr.bf16.mxu0 0
        %1303 = vmatpush1.bf16.xpose.msra.mxu0 0
        %1304 = vmatprep.subr.bf16.mxu0 0
        %1305 = vmatpush1.bf16.xpose.msra.mxu0 0
        %1306 = vmatprep.subr.bf16.mxu0 0
        %1307 = vmatpush1.bf16.xpose.msra.mxu0 0
        %1308 = vmatprep.subr.bf16.mxu0 0
        %1309 = vmatpush1.bf16.xpose.msra.mxu0 %v1292
        %1310 = vmatprep.subr.bf16.mxu0 0
        %1311 = vmatpush2.bf16.xpose.msra.mxu0 0
        %1312 = vmatprep.subr.bf16.mxu0 0
        %1313 = vmatpush2.bf16.xpose.msra.mxu0 0
        %1314 = vmatprep.subr.bf16.mxu0 0
        %1315 = vmatpush2.bf16.xpose.msra.mxu0 0
        %1316 = vmatprep.subr.bf16.mxu0 0
        %1317 = vmatpush2.bf16.xpose.msra.mxu0 0
        %1318 = vmatprep.subr.bf16.mxu0 0
        %1319 = vmatpush2.bf16.xpose.msra.mxu0 0
        %1320 = vmatprep.subr.bf16.mxu0 0
        %1321 = vmatpush2.bf16.xpose.msra.mxu0 0
        %1322 = vmatprep.subr.bf16.mxu0 0
        %1323 = vmatpush2.bf16.xpose.msra.mxu0 0
        %1324 = vmatprep.subr.bf16.mxu0 0
        %1325 = vmatpush2.bf16.xpose.msra.mxu0 0
        %1326 = vmatprep.mubr.bf16.mxu0 0
        %1327 = vmatmul.mubr.bf16.gmra.mxu0 %v1289
        %v1328 = vpop.f32.mrf.mxu0
        %v1329 = vadd.f32 0.0, %v1328
        %v1330 = vpop.f32.mrf.mxu0
        %v1331 = vpop.f32.mrf.mxu0
        %v1332 = vpop.f32.mrf.mxu0
        %1333 = vdwg.mxu0
        %v1334 = vmul.f32 %v1283, 0.35355338
        %v1335 = vmul.f32 %v1329, 0.35355338
        %v1336 = vsel %vm848, %v1334, -inf
        %1337 = vmax.xlane.f32.xlu0 %v1336
        %v1338 = vpop.xlane.xlu0 %1337
        %v1339 = vsel %vm848, %v1335, -inf
        %1340 = vmax.xlane.f32.xlu0 %v1339
        %v1341 = vpop.xlane.xlu0 %1340
        %v1342 = vsub.f32 %v1334, %v1338
        %v1343 = vsub.f32 %v1335, %v1341
        %v1344 = vmul.f32 %v1342, 1.442695
        %v1345 = vpow.pop %v1344
        %v1346 = vmul.f32 %v1343, 1.442695
        %v1347 = vpow.pop %v1346
        %v1348 = vsel %vm848, %v1345, 0.0
        %1349 = vadd.xlane.f32.xlu0 %v1348
        %v1350 = vpop.xlane.xlu0 %1349
        %v1351 = vsel %vm848, %v1347, 0.0
        %1352 = vadd.xlane.f32.xlu0 %v1351
        %v1353 = vpop.xlane.xlu0 %1352
        %v1354 = vrcp.pop %v1350
        %v1355 = vrcp.pop %v1353
        %v1356 = vmul.f32 %v1345, %v1354
        %v1357 = vmul.f32 %v1347, %v1355
        %v1358 = vpack.c.bf16 %v1356, %v1356
        %v1359 = vpack.c.bf16 %v1357, %v1357
        %v1360 = vpack.c.bf16 %v1232, %v1232
        %v1361 = vpack.c.bf16 %v1235, %v1235
        %v1363 = vsel %vm848, %v1358, 0
        %v1366 = vsel %vm972, %v1360, 0
        %1368 = vmatprep.subr.bf16.mxu0 0
        %1369 = vmatpush1.bf16.msra.mxu0 0
        %1370 = vmatprep.subr.bf16.mxu0 0
        %1371 = vmatpush1.bf16.msra.mxu0 0
        %1372 = vmatprep.subr.bf16.mxu0 0
        %1373 = vmatpush1.bf16.msra.mxu0 0
        %1374 = vmatprep.subr.bf16.mxu0 0
        %1375 = vmatpush1.bf16.msra.mxu0 0
        %1376 = vmatprep.subr.bf16.mxu0 0
        %1377 = vmatpush1.bf16.msra.mxu0 0
        %1378 = vmatprep.subr.bf16.mxu0 0
        %1379 = vmatpush1.bf16.msra.mxu0 0
        %1380 = vmatprep.subr.bf16.mxu0 0
        %1381 = vmatpush1.bf16.msra.mxu0 0
        %1382 = vmatprep.subr.bf16.mxu0 0
        %1383 = vmatpush1.bf16.msra.mxu0 %v1366
        %1384 = vmatprep.subr.bf16.mxu0 0
        %1385 = vmatpush2.bf16.msra.mxu0 0
        %1386 = vmatprep.subr.bf16.mxu0 0
        %1387 = vmatpush2.bf16.msra.mxu0 0
        %1388 = vmatprep.subr.bf16.mxu0 0
        %1389 = vmatpush2.bf16.msra.mxu0 0
        %1390 = vmatprep.subr.bf16.mxu0 0
        %1391 = vmatpush2.bf16.msra.mxu0 0
        %1392 = vmatprep.subr.bf16.mxu0 0
        %1393 = vmatpush2.bf16.msra.mxu0 0
        %1394 = vmatprep.subr.bf16.mxu0 0
        %1395 = vmatpush2.bf16.msra.mxu0 0
        %1396 = vmatprep.subr.bf16.mxu0 0
        %1397 = vmatpush2.bf16.msra.mxu0 0
        %1398 = vmatprep.subr.bf16.mxu0 0
        %1399 = vmatpush2.bf16.msra.mxu0 0
        %1400 = vmatprep.mubr.bf16.mxu0 0
        %1401 = vmatmul.mubr.bf16.gmra.mxu0 %v1363
        %v1402 = vpop.f32.mrf.mxu0
        %v1403 = vadd.f32 0.0, %v1402
        %v1404 = vpop.f32.mrf.mxu0
        %v1405 = vpop.f32.mrf.mxu0
        %v1406 = vpop.f32.mrf.mxu0
        %1407 = vdwg.mxu0
        %v1409 = vsel %vm848, %v1359, 0
        %v1412 = vsel %vm972, %v1361, 0
        %1414 = vmatprep.subr.bf16.mxu0 0
        %1415 = vmatpush1.bf16.msra.mxu0 0
        %1416 = vmatprep.subr.bf16.mxu0 0
        %1417 = vmatpush1.bf16.msra.mxu0 0
        %1418 = vmatprep.subr.bf16.mxu0 0
        %1419 = vmatpush1.bf16.msra.mxu0 0
        %1420 = vmatprep.subr.bf16.mxu0 0
        %1421 = vmatpush1.bf16.msra.mxu0 0
        %1422 = vmatprep.subr.bf16.mxu0 0
        %1423 = vmatpush1.bf16.msra.mxu0 0
        %1424 = vmatprep.subr.bf16.mxu0 0
        %1425 = vmatpush1.bf16.msra.mxu0 0
        %1426 = vmatprep.subr.bf16.mxu0 0
        %1427 = vmatpush1.bf16.msra.mxu0 0
        %1428 = vmatprep.subr.bf16.mxu0 0
        %1429 = vmatpush1.bf16.msra.mxu0 %v1412
        %1430 = vmatprep.subr.bf16.mxu0 0
        %1431 = vmatpush2.bf16.msra.mxu0 0
        %1432 = vmatprep.subr.bf16.mxu0 0
        %1433 = vmatpush2.bf16.msra.mxu0 0
        %1434 = vmatprep.subr.bf16.mxu0 0
        %1435 = vmatpush2.bf16.msra.mxu0 0
        %1436 = vmatprep.subr.bf16.mxu0 0
        %1437 = vmatpush2.bf16.msra.mxu0 0
        %1438 = vmatprep.subr.bf16.mxu0 0
        %1439 = vmatpush2.bf16.msra.mxu0 0
        %1440 = vmatprep.subr.bf16.mxu0 0
        %1441 = vmatpush2.bf16.msra.mxu0 0
        %1442 = vmatprep.subr.bf16.mxu0 0
        %1443 = vmatpush2.bf16.msra.mxu0 0
        %1444 = vmatprep.subr.bf16.mxu0 0
        %1445 = vmatpush2.bf16.msra.mxu0 0
        %1446 = vmatprep.mubr.bf16.mxu0 0
        %1447 = vmatmul.mubr.bf16.gmra.mxu0 %v1409
        %v1448 = vpop.f32.mrf.mxu0
        %v1449 = vadd.f32 0.0, %v1448
        %v1450 = vpop.f32.mrf.mxu0
        %v1451 = vpop.f32.mrf.mxu0
        %v1452 = vpop.f32.mrf.mxu0
        %1453 = vdwg.mxu0
        %v1454 = vpack.c.bf16 %v1449, %v1403
        %s1455 = scalar_lea.vmem %s588, 4
        %v1456 = vld [vmem:[%s1455] sm:$0xf]
        %v1458 = vsel %vm848, %v1454, 0
        %v1461 = vsel %vm972, %v1456, 0
        %1463 = vmatprep.subr.bf16.mxu0 0
        %1464 = vmatpush1.bf16.msra.mxu0 0
        %1465 = vmatprep.subr.bf16.mxu0 0
        %1466 = vmatpush1.bf16.msra.mxu0 0
        %1467 = vmatprep.subr.bf16.mxu0 0
        %1468 = vmatpush1.bf16.msra.mxu0 0
        %1469 = vmatprep.subr.bf16.mxu0 0
        %1470 = vmatpush1.bf16.msra.mxu0 0
        %1471 = vmatprep.subr.bf16.mxu0 0
        %1472 = vmatpush1.bf16.msra.mxu0 0
        %1473 = vmatprep.subr.bf16.mxu0 0
        %1474 = vmatpush1.bf16.msra.mxu0 0
        %1475 = vmatprep.subr.bf16.mxu0 0
        %1476 = vmatpush1.bf16.msra.mxu0 0
        %1477 = vmatprep.subr.bf16.mxu0 0
        %1478 = vmatpush1.bf16.msra.mxu0 %v1461
        %1479 = vmatprep.subr.bf16.mxu0 0
        %1480 = vmatpush2.bf16.msra.mxu0 0
        %1481 = vmatprep.subr.bf16.mxu0 0
        %1482 = vmatpush2.bf16.msra.mxu0 0
        %1483 = vmatprep.subr.bf16.mxu0 0
        %1484 = vmatpush2.bf16.msra.mxu0 0
        %1485 = vmatprep.subr.bf16.mxu0 0
        %1486 = vmatpush2.bf16.msra.mxu0 0
        %1487 = vmatprep.subr.bf16.mxu0 0
        %1488 = vmatpush2.bf16.msra.mxu0 0
        %1489 = vmatprep.subr.bf16.mxu0 0
        %1490 = vmatpush2.bf16.msra.mxu0 0
        %1491 = vmatprep.subr.bf16.mxu0 0
        %1492 = vmatpush2.bf16.msra.mxu0 0
        %1493 = vmatprep.subr.bf16.mxu0 0
        %1494 = vmatpush2.bf16.msra.mxu0 0
        %1495 = vmatprep.mubr.bf16.mxu0 0
        %1496 = vmatmul.mubr.bf16.gmra.mxu0 %v1458
        %v1497 = vpop.f32.mrf.mxu0
        %v1498 = vadd.f32 0.0, %v1497
        %v1499 = vpop.f32.mrf.mxu0
        %v1500 = vpop.f32.mrf.mxu0
        %v1501 = vadd.f32 0.0, %v1500
        %v1502 = vpop.f32.mrf.mxu0
        %1503 = vdwg.mxu0
        %v1505 = vsel %vm848, %v1062, 0
        %v1508 = vsel %vm972, %v1063, 0
        %1510 = vmatprep.subr.bf16.mxu0 0
        %1511 = vmatpush1.bf16.msra.mxu0 0
        %1512 = vmatprep.subr.bf16.mxu0 0
        %1513 = vmatpush1.bf16.msra.mxu0 0
        %1514 = vmatprep.subr.bf16.mxu0 0
        %1515 = vmatpush1.bf16.msra.mxu0 0
        %1516 = vmatprep.subr.bf16.mxu0 0
        %1517 = vmatpush1.bf16.msra.mxu0 0
        %1518 = vmatprep.subr.bf16.mxu0 0
        %1519 = vmatpush1.bf16.msra.mxu0 0
        %1520 = vmatprep.subr.bf16.mxu0 0
        %1521 = vmatpush1.bf16.msra.mxu0 0
        %1522 = vmatprep.subr.bf16.mxu0 0
        %1523 = vmatpush1.bf16.msra.mxu0 0
        %1524 = vmatprep.subr.bf16.mxu0 0
        %1525 = vmatpush1.bf16.msra.mxu0 %v1508
        %1526 = vmatprep.subr.bf16.mxu0 0
        %1527 = vmatpush2.bf16.msra.mxu0 0
        %1528 = vmatprep.subr.bf16.mxu0 0
        %1529 = vmatpush2.bf16.msra.mxu0 0
        %1530 = vmatprep.subr.bf16.mxu0 0
        %1531 = vmatpush2.bf16.msra.mxu0 0
        %1532 = vmatprep.subr.bf16.mxu0 0
        %1533 = vmatpush2.bf16.msra.mxu0 0
        %1534 = vmatprep.subr.bf16.mxu0 0
        %1535 = vmatpush2.bf16.msra.mxu0 0
        %1536 = vmatprep.subr.bf16.mxu0 0
        %1537 = vmatpush2.bf16.msra.mxu0 0
        %1538 = vmatprep.subr.bf16.mxu0 0
        %1539 = vmatpush2.bf16.msra.mxu0 0
        %1540 = vmatprep.subr.bf16.mxu0 0
        %1541 = vmatpush2.bf16.msra.mxu0 0
        %1542 = vmatprep.mubr.bf16.mxu0 0
        %1543 = vmatmul.mubr.bf16.gmra.mxu0 %v1505
        %v1544 = vpop.f32.mrf.mxu0
        %v1545 = vadd.f32 %v1498, %v1544
        %v1546 = vpop.f32.mrf.mxu0
        %v1547 = vpop.f32.mrf.mxu0
        %v1548 = vadd.f32 %v1501, %v1547
        %v1549 = vpop.f32.mrf.mxu0
        %1550 = vdwg.mxu0
        %s1551 = scalar_lea.vmem %s573, 32
        %v1552 = vld [vmem:[%s1551] sm:$0xf]
        %v1553 = vld [vmem:[%s1551 + $0x4] sm:$0xf]
        %v1554 = vld [vmem:[%s1551 + $0x8] sm:$0xf]
        %v1555 = vld [vmem:[%s1551 + $0xc] sm:$0xf]
        %v1560 = vunpack.c.l.b16 %v1552
        %v1561 = vunpack.c.l.b16 %v1553
        %v1562 = vunpack.c.l.b16 %v1554
        %v1563 = vunpack.c.l.b16 %v1555
        %v1564 = vpack.c.b16 %v1561, %v1560
        %v1565 = vpack.c.b16 %v1563, %v1562
        %1568 = vmatprep.subr.bf16.mxu0 0
        %1569 = vmatpush1.bf16.msra.mxu0 0
        %1570 = vmatprep.subr.bf16.mxu0 0
        %1571 = vmatpush1.bf16.msra.mxu0 0
        %1572 = vmatprep.subr.bf16.mxu0 0
        %1573 = vmatpush1.bf16.msra.mxu0 0
        %1574 = vmatprep.subr.bf16.mxu0 0
        %1575 = vmatpush1.bf16.msra.mxu0 0
        %1576 = vmatprep.subr.bf16.mxu0 0
        %1577 = vmatpush1.bf16.msra.mxu0 0
        %1578 = vmatprep.subr.bf16.mxu0 0
        %1579 = vmatpush1.bf16.msra.mxu0 0
        %1580 = vmatprep.subr.bf16.mxu0 0
        %1581 = vmatpush1.bf16.msra.mxu0 %v1565
        %1582 = vmatprep.subr.bf16.mxu0 0
        %1583 = vmatpush1.bf16.msra.mxu0 %v1564
        %1584 = vmatprep.subr.bf16.mxu0 0
        %1585 = vmatpush2.bf16.msra.mxu0 0
        %1586 = vmatprep.subr.bf16.mxu0 0
        %1587 = vmatpush2.bf16.msra.mxu0 0
        %1588 = vmatprep.subr.bf16.mxu0 0
        %1589 = vmatpush2.bf16.msra.mxu0 0
        %1590 = vmatprep.subr.bf16.mxu0 0
        %1591 = vmatpush2.bf16.msra.mxu0 0
        %1592 = vmatprep.subr.bf16.mxu0 0
        %1593 = vmatpush2.bf16.msra.mxu0 0
        %1594 = vmatprep.subr.bf16.mxu0 0
        %1595 = vmatpush2.bf16.msra.mxu0 0
        %1596 = vmatprep.subr.bf16.mxu0 0
        %1597 = vmatpush2.bf16.msra.mxu0 0
        %1598 = vmatprep.subr.bf16.mxu0 0
        %1599 = vmatpush2.bf16.msra.mxu0 0
        %1600 = vmatprep.mubr.bf16.mxu0 0
        %1601 = vmatmul.mubr.bf16.gmra.mxu0 %v687
        %v1602 = vpop.f32.mrf.mxu0
        %v1603 = vadd.f32 0.0, %v1602
        %v1604 = vpop.f32.mrf.mxu0
        %v1605 = vpop.f32.mrf.mxu0
        %v1606 = vadd.f32 0.0, %v1605
        %v1607 = vpop.f32.mrf.mxu0
        %1608 = vdwg.mxu0
        %s1609 = scalar_lea.vmem %s578, 32
        %v1610 = vld [vmem:[%s1609] sm:$0xf]
        %v1611 = vld [vmem:[%s1609 + $0x4] sm:$0xf]
        %v1612 = vld [vmem:[%s1609 + $0x8] sm:$0xf]
        %v1613 = vld [vmem:[%s1609 + $0xc] sm:$0xf]
        %v1618 = vunpack.c.l.b16 %v1610
        %v1619 = vunpack.c.l.b16 %v1611
        %v1620 = vunpack.c.l.b16 %v1612
        %v1621 = vunpack.c.l.b16 %v1613
        %v1622 = vpack.c.b16 %v1619, %v1618
        %v1623 = vpack.c.b16 %v1621, %v1620
        %1626 = vmatprep.subr.bf16.mxu0 0
        %1627 = vmatpush1.bf16.msra.mxu0 0
        %1628 = vmatprep.subr.bf16.mxu0 0
        %1629 = vmatpush1.bf16.msra.mxu0 0
        %1630 = vmatprep.subr.bf16.mxu0 0
        %1631 = vmatpush1.bf16.msra.mxu0 0
        %1632 = vmatprep.subr.bf16.mxu0 0
        %1633 = vmatpush1.bf16.msra.mxu0 0
        %1634 = vmatprep.subr.bf16.mxu0 0
        %1635 = vmatpush1.bf16.msra.mxu0 0
        %1636 = vmatprep.subr.bf16.mxu0 0
        %1637 = vmatpush1.bf16.msra.mxu0 0
        %1638 = vmatprep.subr.bf16.mxu0 0
        %1639 = vmatpush1.bf16.msra.mxu0 %v1623
        %1640 = vmatprep.subr.bf16.mxu0 0
        %1641 = vmatpush1.bf16.msra.mxu0 %v1622
        %1642 = vmatprep.subr.bf16.mxu0 0
        %1643 = vmatpush2.bf16.msra.mxu0 0
        %1644 = vmatprep.subr.bf16.mxu0 0
        %1645 = vmatpush2.bf16.msra.mxu0 0
        %1646 = vmatprep.subr.bf16.mxu0 0
        %1647 = vmatpush2.bf16.msra.mxu0 0
        %1648 = vmatprep.subr.bf16.mxu0 0
        %1649 = vmatpush2.bf16.msra.mxu0 0
        %1650 = vmatprep.subr.bf16.mxu0 0
        %1651 = vmatpush2.bf16.msra.mxu0 0
        %1652 = vmatprep.subr.bf16.mxu0 0
        %1653 = vmatpush2.bf16.msra.mxu0 0
        %1654 = vmatprep.subr.bf16.mxu0 0
        %1655 = vmatpush2.bf16.msra.mxu0 0
        %1656 = vmatprep.subr.bf16.mxu0 0
        %1657 = vmatpush2.bf16.msra.mxu0 0
        %1658 = vmatprep.mubr.bf16.mxu0 0
        %1659 = vmatmul.mubr.bf16.gmra.mxu0 %v687
        %v1660 = vpop.f32.mrf.mxu0
        %v1661 = vadd.f32 0.0, %v1660
        %v1662 = vpop.f32.mrf.mxu0
        %v1663 = vpop.f32.mrf.mxu0
        %v1664 = vadd.f32 0.0, %v1663
        %v1665 = vpop.f32.mrf.mxu0
        %1666 = vdwg.mxu0
        %s1667 = scalar_lea.vmem %s583, 32
        %v1668 = vld [vmem:[%s1667] sm:$0xf]
        %v1669 = vld [vmem:[%s1667 + $0x4] sm:$0xf]
        %v1670 = vld [vmem:[%s1667 + $0x8] sm:$0xf]
        %v1671 = vld [vmem:[%s1667 + $0xc] sm:$0xf]
        %v1676 = vunpack.c.l.b16 %v1668
        %v1677 = vunpack.c.l.b16 %v1669
        %v1678 = vunpack.c.l.b16 %v1670
        %v1679 = vunpack.c.l.b16 %v1671
        %v1680 = vpack.c.b16 %v1677, %v1676
        %v1681 = vpack.c.b16 %v1679, %v1678
        %1684 = vmatprep.subr.bf16.mxu0 0
        %1685 = vmatpush1.bf16.msra.mxu0 0
        %1686 = vmatprep.subr.bf16.mxu0 0
        %1687 = vmatpush1.bf16.msra.mxu0 0
        %1688 = vmatprep.subr.bf16.mxu0 0
        %1689 = vmatpush1.bf16.msra.mxu0 0
        %1690 = vmatprep.subr.bf16.mxu0 0
        %1691 = vmatpush1.bf16.msra.mxu0 0
        %1692 = vmatprep.subr.bf16.mxu0 0
        %1693 = vmatpush1.bf16.msra.mxu0 0
        %1694 = vmatprep.subr.bf16.mxu0 0
        %1695 = vmatpush1.bf16.msra.mxu0 0
        %1696 = vmatprep.subr.bf16.mxu0 0
        %1697 = vmatpush1.bf16.msra.mxu0 %v1681
        %1698 = vmatprep.subr.bf16.mxu0 0
        %1699 = vmatpush1.bf16.msra.mxu0 %v1680
        %1700 = vmatprep.subr.bf16.mxu0 0
        %1701 = vmatpush2.bf16.msra.mxu0 0
        %1702 = vmatprep.subr.bf16.mxu0 0
        %1703 = vmatpush2.bf16.msra.mxu0 0
        %1704 = vmatprep.subr.bf16.mxu0 0
        %1705 = vmatpush2.bf16.msra.mxu0 0
        %1706 = vmatprep.subr.bf16.mxu0 0
        %1707 = vmatpush2.bf16.msra.mxu0 0
        %1708 = vmatprep.subr.bf16.mxu0 0
        %1709 = vmatpush2.bf16.msra.mxu0 0
        %1710 = vmatprep.subr.bf16.mxu0 0
        %1711 = vmatpush2.bf16.msra.mxu0 0
        %1712 = vmatprep.subr.bf16.mxu0 0
        %1713 = vmatpush2.bf16.msra.mxu0 0
        %1714 = vmatprep.subr.bf16.mxu0 0
        %1715 = vmatpush2.bf16.msra.mxu0 0
        %1716 = vmatprep.mubr.bf16.mxu0 0
        %1717 = vmatmul.mubr.bf16.gmra.mxu0 %v687
        %v1718 = vpop.f32.mrf.mxu0
        %v1719 = vadd.f32 0.0, %v1718
        %v1720 = vpop.f32.mrf.mxu0
        %v1721 = vpop.f32.mrf.mxu0
        %v1722 = vadd.f32 0.0, %v1721
        %v1723 = vpop.f32.mrf.mxu0
        %1724 = vdwg.mxu0
        %v1725 = vpack.c.bf16 %v1603, %v1603
        %v1726 = vpack.c.bf16 %v1606, %v1606
        %v1727 = vpack.c.bf16 %v1661, %v1661
        %v1728 = vpack.c.bf16 %v1664, %v1664
        %v1730 = vsel %vm848, %v1725, 0
        %v1733 = vsel %vm848, %v1727, 0
        %1735 = vmatprep.subr.bf16.mxu0 0
        %1736 = vmatpush1.bf16.xpose.msra.mxu0 0
        %1737 = vmatprep.subr.bf16.mxu0 0
        %1738 = vmatpush1.bf16.xpose.msra.mxu0 0
        %1739 = vmatprep.subr.bf16.mxu0 0
        %1740 = vmatpush1.bf16.xpose.msra.mxu0 0
        %1741 = vmatprep.subr.bf16.mxu0 0
        %1742 = vmatpush1.bf16.xpose.msra.mxu0 0
        %1743 = vmatprep.subr.bf16.mxu0 0
        %1744 = vmatpush1.bf16.xpose.msra.mxu0 0
        %1745 = vmatprep.subr.bf16.mxu0 0
        %1746 = vmatpush1.bf16.xpose.msra.mxu0 0
        %1747 = vmatprep.subr.bf16.mxu0 0
        %1748 = vmatpush1.bf16.xpose.msra.mxu0 0
        %1749 = vmatprep.subr.bf16.mxu0 0
        %1750 = vmatpush1.bf16.xpose.msra.mxu0 %v1733
        %1751 = vmatprep.subr.bf16.mxu0 0
        %1752 = vmatpush2.bf16.xpose.msra.mxu0 0
        %1753 = vmatprep.subr.bf16.mxu0 0
        %1754 = vmatpush2.bf16.xpose.msra.mxu0 0
        %1755 = vmatprep.subr.bf16.mxu0 0
        %1756 = vmatpush2.bf16.xpose.msra.mxu0 0
        %1757 = vmatprep.subr.bf16.mxu0 0
        %1758 = vmatpush2.bf16.xpose.msra.mxu0 0
        %1759 = vmatprep.subr.bf16.mxu0 0
        %1760 = vmatpush2.bf16.xpose.msra.mxu0 0
        %1761 = vmatprep.subr.bf16.mxu0 0
        %1762 = vmatpush2.bf16.xpose.msra.mxu0 0
        %1763 = vmatprep.subr.bf16.mxu0 0
        %1764 = vmatpush2.bf16.xpose.msra.mxu0 0
        %1765 = vmatprep.subr.bf16.mxu0 0
        %1766 = vmatpush2.bf16.xpose.msra.mxu0 0
        %1767 = vmatprep.mubr.bf16.mxu0 0
        %1768 = vmatmul.mubr.bf16.gmra.mxu0 %v1730
        %v1769 = vpop.f32.mrf.mxu0
        %v1770 = vadd.f32 0.0, %v1769
        %v1771 = vpop.f32.mrf.mxu0
        %v1772 = vpop.f32.mrf.mxu0
        %v1773 = vpop.f32.mrf.mxu0
        %1774 = vdwg.mxu0
        %v1776 = vsel %vm848, %v1726, 0
        %v1779 = vsel %vm848, %v1728, 0
        %1781 = vmatprep.subr.bf16.mxu0 0
        %1782 = vmatpush1.bf16.xpose.msra.mxu0 0
        %1783 = vmatprep.subr.bf16.mxu0 0
        %1784 = vmatpush1.bf16.xpose.msra.mxu0 0
        %1785 = vmatprep.subr.bf16.mxu0 0
        %1786 = vmatpush1.bf16.xpose.msra.mxu0 0
        %1787 = vmatprep.subr.bf16.mxu0 0
        %1788 = vmatpush1.bf16.xpose.msra.mxu0 0
        %1789 = vmatprep.subr.bf16.mxu0 0
        %1790 = vmatpush1.bf16.xpose.msra.mxu0 0
        %1791 = vmatprep.subr.bf16.mxu0 0
        %1792 = vmatpush1.bf16.xpose.msra.mxu0 0
        %1793 = vmatprep.subr.bf16.mxu0 0
        %1794 = vmatpush1.bf16.xpose.msra.mxu0 0
        %1795 = vmatprep.subr.bf16.mxu0 0
        %1796 = vmatpush1.bf16.xpose.msra.mxu0 %v1779
        %1797 = vmatprep.subr.bf16.mxu0 0
        %1798 = vmatpush2.bf16.xpose.msra.mxu0 0
        %1799 = vmatprep.subr.bf16.mxu0 0
        %1800 = vmatpush2.bf16.xpose.msra.mxu0 0
        %1801 = vmatprep.subr.bf16.mxu0 0
        %1802 = vmatpush2.bf16.xpose.msra.mxu0 0
        %1803 = vmatprep.subr.bf16.mxu0 0
        %1804 = vmatpush2.bf16.xpose.msra.mxu0 0
        %1805 = vmatprep.subr.bf16.mxu0 0
        %1806 = vmatpush2.bf16.xpose.msra.mxu0 0
        %1807 = vmatprep.subr.bf16.mxu0 0
        %1808 = vmatpush2.bf16.xpose.msra.mxu0 0
        %1809 = vmatprep.subr.bf16.mxu0 0
        %1810 = vmatpush2.bf16.xpose.msra.mxu0 0
        %1811 = vmatprep.subr.bf16.mxu0 0
        %1812 = vmatpush2.bf16.xpose.msra.mxu0 0
        %1813 = vmatprep.mubr.bf16.mxu0 0
        %1814 = vmatmul.mubr.bf16.gmra.mxu0 %v1776
        %v1815 = vpop.f32.mrf.mxu0
        %v1816 = vadd.f32 0.0, %v1815
        %v1817 = vpop.f32.mrf.mxu0
        %v1818 = vpop.f32.mrf.mxu0
        %v1819 = vpop.f32.mrf.mxu0
        %1820 = vdwg.mxu0
        %v1821 = vmul.f32 %v1770, 0.35355338
        %v1822 = vmul.f32 %v1816, 0.35355338
        %v1823 = vsel %vm848, %v1821, -inf
        %1824 = vmax.xlane.f32.xlu0 %v1823
        %v1825 = vpop.xlane.xlu0 %1824
        %v1826 = vsel %vm848, %v1822, -inf
        %1827 = vmax.xlane.f32.xlu0 %v1826
        %v1828 = vpop.xlane.xlu0 %1827
        %v1829 = vsub.f32 %v1821, %v1825
        %v1830 = vsub.f32 %v1822, %v1828
        %v1831 = vmul.f32 %v1829, 1.442695
        %v1832 = vpow.pop %v1831
        %v1833 = vmul.f32 %v1830, 1.442695
        %v1834 = vpow.pop %v1833
        %v1835 = vsel %vm848, %v1832, 0.0
        %1836 = vadd.xlane.f32.xlu0 %v1835
        %v1837 = vpop.xlane.xlu0 %1836
        %v1838 = vsel %vm848, %v1834, 0.0
        %1839 = vadd.xlane.f32.xlu0 %v1838
        %v1840 = vpop.xlane.xlu0 %1839
        %v1841 = vrcp.pop %v1837
        %v1842 = vrcp.pop %v1840
        %v1843 = vmul.f32 %v1832, %v1841
        %v1844 = vmul.f32 %v1834, %v1842
        %v1845 = vpack.c.bf16 %v1843, %v1843
        %v1846 = vpack.c.bf16 %v1844, %v1844
        %v1847 = vpack.c.bf16 %v1719, %v1719
        %v1848 = vpack.c.bf16 %v1722, %v1722
        %v1850 = vsel %vm848, %v1845, 0
        %v1853 = vsel %vm972, %v1847, 0
        %1855 = vmatprep.subr.bf16.mxu0 0
        %1856 = vmatpush1.bf16.msra.mxu0 0
        %1857 = vmatprep.subr.bf16.mxu0 0
        %1858 = vmatpush1.bf16.msra.mxu0 0
        %1859 = vmatprep.subr.bf16.mxu0 0
        %1860 = vmatpush1.bf16.msra.mxu0 0
        %1861 = vmatprep.subr.bf16.mxu0 0
        %1862 = vmatpush1.bf16.msra.mxu0 0
        %1863 = vmatprep.subr.bf16.mxu0 0
        %1864 = vmatpush1.bf16.msra.mxu0 0
        %1865 = vmatprep.subr.bf16.mxu0 0
        %1866 = vmatpush1.bf16.msra.mxu0 0
        %1867 = vmatprep.subr.bf16.mxu0 0
        %1868 = vmatpush1.bf16.msra.mxu0 0
        %1869 = vmatprep.subr.bf16.mxu0 0
        %1870 = vmatpush1.bf16.msra.mxu0 %v1853
        %1871 = vmatprep.subr.bf16.mxu0 0
        %1872 = vmatpush2.bf16.msra.mxu0 0
        %1873 = vmatprep.subr.bf16.mxu0 0
        %1874 = vmatpush2.bf16.msra.mxu0 0
        %1875 = vmatprep.subr.bf16.mxu0 0
        %1876 = vmatpush2.bf16.msra.mxu0 0
        %1877 = vmatprep.subr.bf16.mxu0 0
        %1878 = vmatpush2.bf16.msra.mxu0 0
        %1879 = vmatprep.subr.bf16.mxu0 0
        %1880 = vmatpush2.bf16.msra.mxu0 0
        %1881 = vmatprep.subr.bf16.mxu0 0
        %1882 = vmatpush2.bf16.msra.mxu0 0
        %1883 = vmatprep.subr.bf16.mxu0 0
        %1884 = vmatpush2.bf16.msra.mxu0 0
        %1885 = vmatprep.subr.bf16.mxu0 0
        %1886 = vmatpush2.bf16.msra.mxu0 0
        %1887 = vmatprep.mubr.bf16.mxu0 0
        %1888 = vmatmul.mubr.bf16.gmra.mxu0 %v1850
        %v1889 = vpop.f32.mrf.mxu0
        %v1890 = vadd.f32 0.0, %v1889
        %v1891 = vpop.f32.mrf.mxu0
        %v1892 = vpop.f32.mrf.mxu0
        %v1893 = vpop.f32.mrf.mxu0
        %1894 = vdwg.mxu0
        %v1896 = vsel %vm848, %v1846, 0
        %v1899 = vsel %vm972, %v1848, 0
        %1901 = vmatprep.subr.bf16.mxu0 0
        %1902 = vmatpush1.bf16.msra.mxu0 0
        %1903 = vmatprep.subr.bf16.mxu0 0
        %1904 = vmatpush1.bf16.msra.mxu0 0
        %1905 = vmatprep.subr.bf16.mxu0 0
        %1906 = vmatpush1.bf16.msra.mxu0 0
        %1907 = vmatprep.subr.bf16.mxu0 0
        %1908 = vmatpush1.bf16.msra.mxu0 0
        %1909 = vmatprep.subr.bf16.mxu0 0
        %1910 = vmatpush1.bf16.msra.mxu0 0
        %1911 = vmatprep.subr.bf16.mxu0 0
        %1912 = vmatpush1.bf16.msra.mxu0 0
        %1913 = vmatprep.subr.bf16.mxu0 0
        %1914 = vmatpush1.bf16.msra.mxu0 0
        %1915 = vmatprep.subr.bf16.mxu0 0
        %1916 = vmatpush1.bf16.msra.mxu0 %v1899
        %1917 = vmatprep.subr.bf16.mxu0 0
        %1918 = vmatpush2.bf16.msra.mxu0 0
        %1919 = vmatprep.subr.bf16.mxu0 0
        %1920 = vmatpush2.bf16.msra.mxu0 0
        %1921 = vmatprep.subr.bf16.mxu0 0
        %1922 = vmatpush2.bf16.msra.mxu0 0
        %1923 = vmatprep.subr.bf16.mxu0 0
        %1924 = vmatpush2.bf16.msra.mxu0 0
        %1925 = vmatprep.subr.bf16.mxu0 0
        %1926 = vmatpush2.bf16.msra.mxu0 0
        %1927 = vmatprep.subr.bf16.mxu0 0
        %1928 = vmatpush2.bf16.msra.mxu0 0
        %1929 = vmatprep.subr.bf16.mxu0 0
        %1930 = vmatpush2.bf16.msra.mxu0 0
        %1931 = vmatprep.subr.bf16.mxu0 0
        %1932 = vmatpush2.bf16.msra.mxu0 0
        %1933 = vmatprep.mubr.bf16.mxu0 0
        %1934 = vmatmul.mubr.bf16.gmra.mxu0 %v1896
        %v1935 = vpop.f32.mrf.mxu0
        %v1936 = vadd.f32 0.0, %v1935
        %v1937 = vpop.f32.mrf.mxu0
        %v1938 = vpop.f32.mrf.mxu0
        %v1939 = vpop.f32.mrf.mxu0
        %1940 = vdwg.mxu0
        %v1941 = vpack.c.bf16 %v1936, %v1890
        %s1942 = scalar_lea.vmem %s588, 8
        %v1943 = vld [vmem:[%s1942] sm:$0xf]
        %v1945 = vsel %vm848, %v1941, 0
        %v1948 = vsel %vm972, %v1943, 0
        %1950 = vmatprep.subr.bf16.mxu0 0
        %1951 = vmatpush1.bf16.msra.mxu0 0
        %1952 = vmatprep.subr.bf16.mxu0 0
        %1953 = vmatpush1.bf16.msra.mxu0 0
        %1954 = vmatprep.subr.bf16.mxu0 0
        %1955 = vmatpush1.bf16.msra.mxu0 0
        %1956 = vmatprep.subr.bf16.mxu0 0
        %1957 = vmatpush1.bf16.msra.mxu0 0
        %1958 = vmatprep.subr.bf16.mxu0 0
        %1959 = vmatpush1.bf16.msra.mxu0 0
        %1960 = vmatprep.subr.bf16.mxu0 0
        %1961 = vmatpush1.bf16.msra.mxu0 0
        %1962 = vmatprep.subr.bf16.mxu0 0
        %1963 = vmatpush1.bf16.msra.mxu0 0
        %1964 = vmatprep.subr.bf16.mxu0 0
        %1965 = vmatpush1.bf16.msra.mxu0 %v1948
        %1966 = vmatprep.subr.bf16.mxu0 0
        %1967 = vmatpush2.bf16.msra.mxu0 0
        %1968 = vmatprep.subr.bf16.mxu0 0
        %1969 = vmatpush2.bf16.msra.mxu0 0
        %1970 = vmatprep.subr.bf16.mxu0 0
        %1971 = vmatpush2.bf16.msra.mxu0 0
        %1972 = vmatprep.subr.bf16.mxu0 0
        %1973 = vmatpush2.bf16.msra.mxu0 0
        %1974 = vmatprep.subr.bf16.mxu0 0
        %1975 = vmatpush2.bf16.msra.mxu0 0
        %1976 = vmatprep.subr.bf16.mxu0 0
        %1977 = vmatpush2.bf16.msra.mxu0 0
        %1978 = vmatprep.subr.bf16.mxu0 0
        %1979 = vmatpush2.bf16.msra.mxu0 0
        %1980 = vmatprep.subr.bf16.mxu0 0
        %1981 = vmatpush2.bf16.msra.mxu0 0
        %1982 = vmatprep.mubr.bf16.mxu0 0
        %1983 = vmatmul.mubr.bf16.gmra.mxu0 %v1945
        %v1984 = vpop.f32.mrf.mxu0
        %v1985 = vadd.f32 0.0, %v1984
        %v1986 = vpop.f32.mrf.mxu0
        %v1987 = vpop.f32.mrf.mxu0
        %v1988 = vadd.f32 0.0, %v1987
        %v1989 = vpop.f32.mrf.mxu0
        %1990 = vdwg.mxu0
        %v1991 = vadd.f32 %v1545, %v1985
        %v1992 = vadd.f32 %v1548, %v1988
        %s1993 = scalar_lea.vmem %s573, 48
        %v1994 = vld [vmem:[%s1993] sm:$0xf]
        %v1995 = vld [vmem:[%s1993 + $0x4] sm:$0xf]
        %v1996 = vld [vmem:[%s1993 + $0x8] sm:$0xf]
        %v1997 = vld [vmem:[%s1993 + $0xc] sm:$0xf]
        %v2002 = vunpack.c.l.b16 %v1994
        %v2003 = vunpack.c.l.b16 %v1995
        %v2004 = vunpack.c.l.b16 %v1996
        %v2005 = vunpack.c.l.b16 %v1997
        %v2006 = vpack.c.b16 %v2003, %v2002
        %v2007 = vpack.c.b16 %v2005, %v2004
        %2010 = vmatprep.subr.bf16.mxu0 0
        %2011 = vmatpush1.bf16.msra.mxu0 0
        %2012 = vmatprep.subr.bf16.mxu0 0
        %2013 = vmatpush1.bf16.msra.mxu0 0
        %2014 = vmatprep.subr.bf16.mxu0 0
        %2015 = vmatpush1.bf16.msra.mxu0 0
        %2016 = vmatprep.subr.bf16.mxu0 0
        %2017 = vmatpush1.bf16.msra.mxu0 0
        %2018 = vmatprep.subr.bf16.mxu0 0
        %2019 = vmatpush1.bf16.msra.mxu0 0
        %2020 = vmatprep.subr.bf16.mxu0 0
        %2021 = vmatpush1.bf16.msra.mxu0 0
        %2022 = vmatprep.subr.bf16.mxu0 0
        %2023 = vmatpush1.bf16.msra.mxu0 %v2007
        %2024 = vmatprep.subr.bf16.mxu0 0
        %2025 = vmatpush1.bf16.msra.mxu0 %v2006
        %2026 = vmatprep.subr.bf16.mxu0 0
        %2027 = vmatpush2.bf16.msra.mxu0 0
        %2028 = vmatprep.subr.bf16.mxu0 0
        %2029 = vmatpush2.bf16.msra.mxu0 0
        %2030 = vmatprep.subr.bf16.mxu0 0
        %2031 = vmatpush2.bf16.msra.mxu0 0
        %2032 = vmatprep.subr.bf16.mxu0 0
        %2033 = vmatpush2.bf16.msra.mxu0 0
        %2034 = vmatprep.subr.bf16.mxu0 0
        %2035 = vmatpush2.bf16.msra.mxu0 0
        %2036 = vmatprep.subr.bf16.mxu0 0
        %2037 = vmatpush2.bf16.msra.mxu0 0
        %2038 = vmatprep.subr.bf16.mxu0 0
        %2039 = vmatpush2.bf16.msra.mxu0 0
        %2040 = vmatprep.subr.bf16.mxu0 0
        %2041 = vmatpush2.bf16.msra.mxu0 0
        %2042 = vmatprep.mubr.bf16.mxu0 0
        %2043 = vmatmul.mubr.bf16.gmra.mxu0 %v687
        %v2044 = vpop.f32.mrf.mxu0
        %v2045 = vadd.f32 0.0, %v2044
        %v2046 = vpop.f32.mrf.mxu0
        %v2047 = vpop.f32.mrf.mxu0
        %v2048 = vadd.f32 0.0, %v2047
        %v2049 = vpop.f32.mrf.mxu0
        %2050 = vdwg.mxu0
        %s2051 = scalar_lea.vmem %s578, 48
        %v2052 = vld [vmem:[%s2051] sm:$0xf]
        %v2053 = vld [vmem:[%s2051 + $0x4] sm:$0xf]
        %v2054 = vld [vmem:[%s2051 + $0x8] sm:$0xf]
        %v2055 = vld [vmem:[%s2051 + $0xc] sm:$0xf]
        %v2060 = vunpack.c.l.b16 %v2052
        %v2061 = vunpack.c.l.b16 %v2053
        %v2062 = vunpack.c.l.b16 %v2054
        %v2063 = vunpack.c.l.b16 %v2055
        %v2064 = vpack.c.b16 %v2061, %v2060
        %v2065 = vpack.c.b16 %v2063, %v2062
        %2068 = vmatprep.subr.bf16.mxu0 0
        %2069 = vmatpush1.bf16.msra.mxu0 0
        %2070 = vmatprep.subr.bf16.mxu0 0
        %2071 = vmatpush1.bf16.msra.mxu0 0
        %2072 = vmatprep.subr.bf16.mxu0 0
        %2073 = vmatpush1.bf16.msra.mxu0 0
        %2074 = vmatprep.subr.bf16.mxu0 0
        %2075 = vmatpush1.bf16.msra.mxu0 0
        %2076 = vmatprep.subr.bf16.mxu0 0
        %2077 = vmatpush1.bf16.msra.mxu0 0
        %2078 = vmatprep.subr.bf16.mxu0 0
        %2079 = vmatpush1.bf16.msra.mxu0 0
        %2080 = vmatprep.subr.bf16.mxu0 0
        %2081 = vmatpush1.bf16.msra.mxu0 %v2065
        %2082 = vmatprep.subr.bf16.mxu0 0
        %2083 = vmatpush1.bf16.msra.mxu0 %v2064
        %2084 = vmatprep.subr.bf16.mxu0 0
        %2085 = vmatpush2.bf16.msra.mxu0 0
        %2086 = vmatprep.subr.bf16.mxu0 0
        %2087 = vmatpush2.bf16.msra.mxu0 0
        %2088 = vmatprep.subr.bf16.mxu0 0
        %2089 = vmatpush2.bf16.msra.mxu0 0
        %2090 = vmatprep.subr.bf16.mxu0 0
        %2091 = vmatpush2.bf16.msra.mxu0 0
        %2092 = vmatprep.subr.bf16.mxu0 0
        %2093 = vmatpush2.bf16.msra.mxu0 0
        %2094 = vmatprep.subr.bf16.mxu0 0
        %2095 = vmatpush2.bf16.msra.mxu0 0
        %2096 = vmatprep.subr.bf16.mxu0 0
        %2097 = vmatpush2.bf16.msra.mxu0 0
        %2098 = vmatprep.subr.bf16.mxu0 0
        %2099 = vmatpush2.bf16.msra.mxu0 0
        %2100 = vmatprep.mubr.bf16.mxu0 0
        %2101 = vmatmul.mubr.bf16.gmra.mxu0 %v687
        %v2102 = vpop.f32.mrf.mxu0
        %v2103 = vadd.f32 0.0, %v2102
        %v2104 = vpop.f32.mrf.mxu0
        %v2105 = vpop.f32.mrf.mxu0
        %v2106 = vadd.f32 0.0, %v2105
        %v2107 = vpop.f32.mrf.mxu0
        %2108 = vdwg.mxu0
        %s2109 = scalar_lea.vmem %s583, 48
        %v2110 = vld [vmem:[%s2109] sm:$0xf]
        %v2111 = vld [vmem:[%s2109 + $0x4] sm:$0xf]
        %v2112 = vld [vmem:[%s2109 + $0x8] sm:$0xf]
        %v2113 = vld [vmem:[%s2109 + $0xc] sm:$0xf]
        %v2118 = vunpack.c.l.b16 %v2110
        %v2119 = vunpack.c.l.b16 %v2111
        %v2120 = vunpack.c.l.b16 %v2112
        %v2121 = vunpack.c.l.b16 %v2113
        %v2122 = vpack.c.b16 %v2119, %v2118
        %v2123 = vpack.c.b16 %v2121, %v2120
        %2126 = vmatprep.subr.bf16.mxu0 0
        %2127 = vmatpush1.bf16.msra.mxu0 0
        %2128 = vmatprep.subr.bf16.mxu0 0
        %2129 = vmatpush1.bf16.msra.mxu0 0
        %2130 = vmatprep.subr.bf16.mxu0 0
        %2131 = vmatpush1.bf16.msra.mxu0 0
        %2132 = vmatprep.subr.bf16.mxu0 0
        %2133 = vmatpush1.bf16.msra.mxu0 0
        %2134 = vmatprep.subr.bf16.mxu0 0
        %2135 = vmatpush1.bf16.msra.mxu0 0
        %2136 = vmatprep.subr.bf16.mxu0 0
        %2137 = vmatpush1.bf16.msra.mxu0 0
        %2138 = vmatprep.subr.bf16.mxu0 0
        %2139 = vmatpush1.bf16.msra.mxu0 %v2123
        %2140 = vmatprep.subr.bf16.mxu0 0
        %2141 = vmatpush1.bf16.msra.mxu0 %v2122
        %2142 = vmatprep.subr.bf16.mxu0 0
        %2143 = vmatpush2.bf16.msra.mxu0 0
        %2144 = vmatprep.subr.bf16.mxu0 0
        %2145 = vmatpush2.bf16.msra.mxu0 0
        %2146 = vmatprep.subr.bf16.mxu0 0
        %2147 = vmatpush2.bf16.msra.mxu0 0
        %2148 = vmatprep.subr.bf16.mxu0 0
        %2149 = vmatpush2.bf16.msra.mxu0 0
        %2150 = vmatprep.subr.bf16.mxu0 0
        %2151 = vmatpush2.bf16.msra.mxu0 0
        %2152 = vmatprep.subr.bf16.mxu0 0
        %2153 = vmatpush2.bf16.msra.mxu0 0
        %2154 = vmatprep.subr.bf16.mxu0 0
        %2155 = vmatpush2.bf16.msra.mxu0 0
        %2156 = vmatprep.subr.bf16.mxu0 0
        %2157 = vmatpush2.bf16.msra.mxu0 0
        %2158 = vmatprep.mubr.bf16.mxu0 0
        %2159 = vmatmul.mubr.bf16.gmra.mxu0 %v687
        %v2160 = vpop.f32.mrf.mxu0
        %v2161 = vadd.f32 0.0, %v2160
        %v2162 = vpop.f32.mrf.mxu0
        %v2163 = vpop.f32.mrf.mxu0
        %v2164 = vadd.f32 0.0, %v2163
        %v2165 = vpop.f32.mrf.mxu0
        %2166 = vdwg.mxu0
        %v2167 = vpack.c.bf16 %v2045, %v2045
        %v2168 = vpack.c.bf16 %v2048, %v2048
        %v2169 = vpack.c.bf16 %v2103, %v2103
        %v2170 = vpack.c.bf16 %v2106, %v2106
        %v2172 = vsel %vm848, %v2167, 0
        %v2175 = vsel %vm848, %v2169, 0
        %2177 = vmatprep.subr.bf16.mxu0 0
        %2178 = vmatpush1.bf16.xpose.msra.mxu0 0
        %2179 = vmatprep.subr.bf16.mxu0 0
        %2180 = vmatpush1.bf16.xpose.msra.mxu0 0
        %2181 = vmatprep.subr.bf16.mxu0 0
        %2182 = vmatpush1.bf16.xpose.msra.mxu0 0
        %2183 = vmatprep.subr.bf16.mxu0 0
        %2184 = vmatpush1.bf16.xpose.msra.mxu0 0
        %2185 = vmatprep.subr.bf16.mxu0 0
        %2186 = vmatpush1.bf16.xpose.msra.mxu0 0
        %2187 = vmatprep.subr.bf16.mxu0 0
        %2188 = vmatpush1.bf16.xpose.msra.mxu0 0
        %2189 = vmatprep.subr.bf16.mxu0 0
        %2190 = vmatpush1.bf16.xpose.msra.mxu0 0
        %2191 = vmatprep.subr.bf16.mxu0 0
        %2192 = vmatpush1.bf16.xpose.msra.mxu0 %v2175
        %2193 = vmatprep.subr.bf16.mxu0 0
        %2194 = vmatpush2.bf16.xpose.msra.mxu0 0
        %2195 = vmatprep.subr.bf16.mxu0 0
        %2196 = vmatpush2.bf16.xpose.msra.mxu0 0
        %2197 = vmatprep.subr.bf16.mxu0 0
        %2198 = vmatpush2.bf16.xpose.msra.mxu0 0
        %2199 = vmatprep.subr.bf16.mxu0 0
        %2200 = vmatpush2.bf16.xpose.msra.mxu0 0
        %2201 = vmatprep.subr.bf16.mxu0 0
        %2202 = vmatpush2.bf16.xpose.msra.mxu0 0
        %2203 = vmatprep.subr.bf16.mxu0 0
        %2204 = vmatpush2.bf16.xpose.msra.mxu0 0
        %2205 = vmatprep.subr.bf16.mxu0 0
        %2206 = vmatpush2.bf16.xpose.msra.mxu0 0
        %2207 = vmatprep.subr.bf16.mxu0 0
        %2208 = vmatpush2.bf16.xpose.msra.mxu0 0
        %2209 = vmatprep.mubr.bf16.mxu0 0
        %2210 = vmatmul.mubr.bf16.gmra.mxu0 %v2172
        %v2211 = vpop.f32.mrf.mxu0
        %v2212 = vadd.f32 0.0, %v2211
        %v2213 = vpop.f32.mrf.mxu0
        %v2214 = vpop.f32.mrf.mxu0
        %v2215 = vpop.f32.mrf.mxu0
        %2216 = vdwg.mxu0
        %v2218 = vsel %vm848, %v2168, 0
        %v2221 = vsel %vm848, %v2170, 0
        %2223 = vmatprep.subr.bf16.mxu0 0
        %2224 = vmatpush1.bf16.xpose.msra.mxu0 0
        %2225 = vmatprep.subr.bf16.mxu0 0
        %2226 = vmatpush1.bf16.xpose.msra.mxu0 0
        %2227 = vmatprep.subr.bf16.mxu0 0
        %2228 = vmatpush1.bf16.xpose.msra.mxu0 0
        %2229 = vmatprep.subr.bf16.mxu0 0
        %2230 = vmatpush1.bf16.xpose.msra.mxu0 0
        %2231 = vmatprep.subr.bf16.mxu0 0
        %2232 = vmatpush1.bf16.xpose.msra.mxu0 0
        %2233 = vmatprep.subr.bf16.mxu0 0
        %2234 = vmatpush1.bf16.xpose.msra.mxu0 0
        %2235 = vmatprep.subr.bf16.mxu0 0
        %2236 = vmatpush1.bf16.xpose.msra.mxu0 0
        %2237 = vmatprep.subr.bf16.mxu0 0
        %2238 = vmatpush1.bf16.xpose.msra.mxu0 %v2221
        %2239 = vmatprep.subr.bf16.mxu0 0
        %2240 = vmatpush2.bf16.xpose.msra.mxu0 0
        %2241 = vmatprep.subr.bf16.mxu0 0
        %2242 = vmatpush2.bf16.xpose.msra.mxu0 0
        %2243 = vmatprep.subr.bf16.mxu0 0
        %2244 = vmatpush2.bf16.xpose.msra.mxu0 0
        %2245 = vmatprep.subr.bf16.mxu0 0
        %2246 = vmatpush2.bf16.xpose.msra.mxu0 0
        %2247 = vmatprep.subr.bf16.mxu0 0
        %2248 = vmatpush2.bf16.xpose.msra.mxu0 0
        %2249 = vmatprep.subr.bf16.mxu0 0
        %2250 = vmatpush2.bf16.xpose.msra.mxu0 0
        %2251 = vmatprep.subr.bf16.mxu0 0
        %2252 = vmatpush2.bf16.xpose.msra.mxu0 0
        %2253 = vmatprep.subr.bf16.mxu0 0
        %2254 = vmatpush2.bf16.xpose.msra.mxu0 0
        %2255 = vmatprep.mubr.bf16.mxu0 0
        %2256 = vmatmul.mubr.bf16.gmra.mxu0 %v2218
        %v2257 = vpop.f32.mrf.mxu0
        %v2258 = vadd.f32 0.0, %v2257
        %v2259 = vpop.f32.mrf.mxu0
        %v2260 = vpop.f32.mrf.mxu0
        %v2261 = vpop.f32.mrf.mxu0
        %2262 = vdwg.mxu0
        %v2263 = vmul.f32 %v2212, 0.35355338
        %v2264 = vmul.f32 %v2258, 0.35355338
        %v2265 = vsel %vm848, %v2263, -inf
        %2266 = vmax.xlane.f32.xlu0 %v2265
        %v2267 = vpop.xlane.xlu0 %2266
        %v2268 = vsel %vm848, %v2264, -inf
        %2269 = vmax.xlane.f32.xlu0 %v2268
        %v2270 = vpop.xlane.xlu0 %2269
        %v2271 = vsub.f32 %v2263, %v2267
        %v2272 = vsub.f32 %v2264, %v2270
        %v2273 = vmul.f32 %v2271, 1.442695
        %v2274 = vpow.pop %v2273
        %v2275 = vmul.f32 %v2272, 1.442695
        %v2276 = vpow.pop %v2275
        %v2277 = vsel %vm848, %v2274, 0.0
        %2278 = vadd.xlane.f32.xlu0 %v2277
        %v2279 = vpop.xlane.xlu0 %2278
        %v2280 = vsel %vm848, %v2276, 0.0
        %2281 = vadd.xlane.f32.xlu0 %v2280
        %v2282 = vpop.xlane.xlu0 %2281
        %v2283 = vrcp.pop %v2279
        %v2284 = vrcp.pop %v2282
        %v2285 = vmul.f32 %v2274, %v2283
        %v2286 = vmul.f32 %v2276, %v2284
        %v2287 = vpack.c.bf16 %v2285, %v2285
        %v2288 = vpack.c.bf16 %v2286, %v2286
        %v2289 = vpack.c.bf16 %v2161, %v2161
        %v2290 = vpack.c.bf16 %v2164, %v2164
        %v2292 = vsel %vm848, %v2287, 0
        %v2295 = vsel %vm972, %v2289, 0
        %2297 = vmatprep.subr.bf16.mxu0 0
        %2298 = vmatpush1.bf16.msra.mxu0 0
        %2299 = vmatprep.subr.bf16.mxu0 0
        %2300 = vmatpush1.bf16.msra.mxu0 0
        %2301 = vmatprep.subr.bf16.mxu0 0
        %2302 = vmatpush1.bf16.msra.mxu0 0
        %2303 = vmatprep.subr.bf16.mxu0 0
        %2304 = vmatpush1.bf16.msra.mxu0 0
        %2305 = vmatprep.subr.bf16.mxu0 0
        %2306 = vmatpush1.bf16.msra.mxu0 0
        %2307 = vmatprep.subr.bf16.mxu0 0
        %2308 = vmatpush1.bf16.msra.mxu0 0
        %2309 = vmatprep.subr.bf16.mxu0 0
        %2310 = vmatpush1.bf16.msra.mxu0 0
        %2311 = vmatprep.subr.bf16.mxu0 0
        %2312 = vmatpush1.bf16.msra.mxu0 %v2295
        %2313 = vmatprep.subr.bf16.mxu0 0
        %2314 = vmatpush2.bf16.msra.mxu0 0
        %2315 = vmatprep.subr.bf16.mxu0 0
        %2316 = vmatpush2.bf16.msra.mxu0 0
        %2317 = vmatprep.subr.bf16.mxu0 0
        %2318 = vmatpush2.bf16.msra.mxu0 0
        %2319 = vmatprep.subr.bf16.mxu0 0
        %2320 = vmatpush2.bf16.msra.mxu0 0
        %2321 = vmatprep.subr.bf16.mxu0 0
        %2322 = vmatpush2.bf16.msra.mxu0 0
        %2323 = vmatprep.subr.bf16.mxu0 0
        %2324 = vmatpush2.bf16.msra.mxu0 0
        %2325 = vmatprep.subr.bf16.mxu0 0
        %2326 = vmatpush2.bf16.msra.mxu0 0
        %2327 = vmatprep.subr.bf16.mxu0 0
        %2328 = vmatpush2.bf16.msra.mxu0 0
        %2329 = vmatprep.mubr.bf16.mxu0 0
        %2330 = vmatmul.mubr.bf16.gmra.mxu0 %v2292
        %v2331 = vpop.f32.mrf.mxu0
        %v2332 = vadd.f32 0.0, %v2331
        %v2333 = vpop.f32.mrf.mxu0
        %v2334 = vpop.f32.mrf.mxu0
        %v2335 = vpop.f32.mrf.mxu0
        %2336 = vdwg.mxu0
        %v2338 = vsel %vm848, %v2288, 0
        %v2341 = vsel %vm972, %v2290, 0
        %2343 = vmatprep.subr.bf16.mxu0 0
        %2344 = vmatpush1.bf16.msra.mxu0 0
        %2345 = vmatprep.subr.bf16.mxu0 0
        %2346 = vmatpush1.bf16.msra.mxu0 0
        %2347 = vmatprep.subr.bf16.mxu0 0
        %2348 = vmatpush1.bf16.msra.mxu0 0
        %2349 = vmatprep.subr.bf16.mxu0 0
        %2350 = vmatpush1.bf16.msra.mxu0 0
        %2351 = vmatprep.subr.bf16.mxu0 0
        %2352 = vmatpush1.bf16.msra.mxu0 0
        %2353 = vmatprep.subr.bf16.mxu0 0
        %2354 = vmatpush1.bf16.msra.mxu0 0
        %2355 = vmatprep.subr.bf16.mxu0 0
        %2356 = vmatpush1.bf16.msra.mxu0 0
        %2357 = vmatprep.subr.bf16.mxu0 0
        %2358 = vmatpush1.bf16.msra.mxu0 %v2341
        %2359 = vmatprep.subr.bf16.mxu0 0
        %2360 = vmatpush2.bf16.msra.mxu0 0
        %2361 = vmatprep.subr.bf16.mxu0 0
        %2362 = vmatpush2.bf16.msra.mxu0 0
        %2363 = vmatprep.subr.bf16.mxu0 0
        %2364 = vmatpush2.bf16.msra.mxu0 0
        %2365 = vmatprep.subr.bf16.mxu0 0
        %2366 = vmatpush2.bf16.msra.mxu0 0
        %2367 = vmatprep.subr.bf16.mxu0 0
        %2368 = vmatpush2.bf16.msra.mxu0 0
        %2369 = vmatprep.subr.bf16.mxu0 0
        %2370 = vmatpush2.bf16.msra.mxu0 0
        %2371 = vmatprep.subr.bf16.mxu0 0
        %2372 = vmatpush2.bf16.msra.mxu0 0
        %2373 = vmatprep.subr.bf16.mxu0 0
        %2374 = vmatpush2.bf16.msra.mxu0 0
        %2375 = vmatprep.mubr.bf16.mxu0 0
        %2376 = vmatmul.mubr.bf16.gmra.mxu0 %v2338
        %v2377 = vpop.f32.mrf.mxu0
        %v2378 = vadd.f32 0.0, %v2377
        %v2379 = vpop.f32.mrf.mxu0
        %v2380 = vpop.f32.mrf.mxu0
        %v2381 = vpop.f32.mrf.mxu0
        %2382 = vdwg.mxu0
        %v2383 = vpack.c.bf16 %v2378, %v2332
        %s2384 = scalar_lea.vmem %s588, 12
        %v2385 = vld [vmem:[%s2384] sm:$0xf]
        %v2387 = vsel %vm848, %v2383, 0
        %v2390 = vsel %vm972, %v2385, 0
        %2392 = vmatprep.subr.bf16.mxu0 0
        %2393 = vmatpush1.bf16.msra.mxu0 0
        %2394 = vmatprep.subr.bf16.mxu0 0
        %2395 = vmatpush1.bf16.msra.mxu0 0
        %2396 = vmatprep.subr.bf16.mxu0 0
        %2397 = vmatpush1.bf16.msra.mxu0 0
        %2398 = vmatprep.subr.bf16.mxu0 0
        %2399 = vmatpush1.bf16.msra.mxu0 0
        %2400 = vmatprep.subr.bf16.mxu0 0
        %2401 = vmatpush1.bf16.msra.mxu0 0
        %2402 = vmatprep.subr.bf16.mxu0 0
        %2403 = vmatpush1.bf16.msra.mxu0 0
        %2404 = vmatprep.subr.bf16.mxu0 0
        %2405 = vmatpush1.bf16.msra.mxu0 0
        %2406 = vmatprep.subr.bf16.mxu0 0
        %2407 = vmatpush1.bf16.msra.mxu0 %v2390
        %2408 = vmatprep.subr.bf16.mxu0 0
        %2409 = vmatpush2.bf16.msra.mxu0 0
        %2410 = vmatprep.subr.bf16.mxu0 0
        %2411 = vmatpush2.bf16.msra.mxu0 0
        %2412 = vmatprep.subr.bf16.mxu0 0
        %2413 = vmatpush2.bf16.msra.mxu0 0
        %2414 = vmatprep.subr.bf16.mxu0 0
        %2415 = vmatpush2.bf16.msra.mxu0 0
        %2416 = vmatprep.subr.bf16.mxu0 0
        %2417 = vmatpush2.bf16.msra.mxu0 0
        %2418 = vmatprep.subr.bf16.mxu0 0
        %2419 = vmatpush2.bf16.msra.mxu0 0
        %2420 = vmatprep.subr.bf16.mxu0 0
        %2421 = vmatpush2.bf16.msra.mxu0 0
        %2422 = vmatprep.subr.bf16.mxu0 0
        %2423 = vmatpush2.bf16.msra.mxu0 0
        %2424 = vmatprep.mubr.bf16.mxu0 0
        %2425 = vmatmul.mubr.bf16.gmra.mxu0 %v2387
        %v2426 = vpop.f32.mrf.mxu0
        %v2427 = vadd.f32 0.0, %v2426
        %v2428 = vpop.f32.mrf.mxu0
        %v2429 = vpop.f32.mrf.mxu0
        %v2430 = vadd.f32 0.0, %v2429
        %v2431 = vpop.f32.mrf.mxu0
        %2432 = vdwg.mxu0
        %v2433 = vadd.f32 %v1991, %v2427
        %v2434 = vadd.f32 %v1992, %v2430
        %v2435 = vadd.f32 %v621, %v2433
        %v2436 = vadd.f32 %v622, %v2434
        %v2437 = vld [vmem:[%s591] sm:$0x1]
        %v2438 = vld [vmem:[%s594] sm:$0x1]
        %v2439 = vsel %vm625, %v2435, 0.0
        %2440 = vadd.xlane.f32.xlu0 %v2439
        %v2441 = vpop.xlane.xlu0 %2440
        %v2442 = vsel %vm625, %v2436, 0.0
        %2443 = vadd.xlane.f32.xlu0 %v2442
        %v2444 = vpop.xlane.xlu0 %2443
        %v2445 = vmul.f32 %v2441, %v632
        %v2446 = vmul.f32 %v2444, %v632
        %v2447 = vsub.f32 %v2435, %v2445
        %v2448 = vsub.f32 %v2436, %v2446
        %v2449 = vmul.f32 %v2447, %v2447
        %v2450 = vmul.f32 %v2448, %v2448
        %v2451 = vsel %vm625, %v2449, 0.0
        %2452 = vadd.xlane.f32.xlu0 %v2451
        %v2453 = vpop.xlane.xlu0 %2452
        %v2454 = vsel %vm625, %v2450, 0.0
        %2455 = vadd.xlane.f32.xlu0 %v2454
        %v2456 = vpop.xlane.xlu0 %2455
        %v2457 = vmul.f32 %v2453, %v632
        %v2458 = vmul.f32 %v2456, %v632
        %v2459 = vadd.f32 %v2457, 1e-05
        %v2460 = vadd.f32 %v2458, 1e-05
        %v2461 = vrsqrt.pop %v2459
        %v2462 = vrsqrt.pop %v2460
        %v2463 = vmul.f32 %v2447, %v2461
        %v2464 = vmul.f32 %v2448, %v2462
        %v2466 = vlaneseq
        %v2467 = vshrl.u32 %v2466, 7
        %v2468 = vsub.s32 0, %v2467
        %v2469 = vrot.slane %v2437, %v2468
        %v2471 = vmul.f32 %v2463, %v2469
        %v2472 = vmul.f32 %v2464, %v2469
        %v2474 = vlaneseq
        %v2475 = vshrl.u32 %v2474, 7
        %v2476 = vsub.s32 0, %v2475
        %v2477 = vrot.slane %v2438, %v2476
        %v2479 = vadd.f32 %v2471, %v2477
        %v2480 = vadd.f32 %v2472, %v2477
        %v2481 = vpack.c.bf16 %v2480, %v2479
        %v2482 = vld [vmem:[%s599] sm:$0xf]
        %v2483 = vld [vmem:[%s599 + $0x4] sm:$0xf]
        %v2484 = vld [vmem:[%s599 + $0x8] sm:$0xf]
        %v2485 = vld [vmem:[%s599 + $0xc] sm:$0xf]
        %v2486 = vld [vmem:[%s602] sm:$0x1]
        %v2488 = vlaneseq
        %v2489 = vshrl.u32 %v2488, 7
        %v2490 = vsub.s32 0, %v2489
        %v2491 = vrot.slane %v2486, %v2490
        %v2497 = vunpack.c.l.b16 %v2482
        %v2498 = vunpack.c.l.b16 %v2483
        %v2499 = vunpack.c.l.b16 %v2484
        %v2500 = vunpack.c.l.b16 %v2485
        %v2501 = vpack.c.b16 %v2498, %v2497
        %v2502 = vpack.c.b16 %v2500, %v2499
        %v2506 = vsel %vm625, %v2481, 0
        %2508 = vmatprep.subr.bf16.mxu0 0
        %2509 = vmatpush1.bf16.msra.mxu0 0
        %2510 = vmatprep.subr.bf16.mxu0 0
        %2511 = vmatpush1.bf16.msra.mxu0 0
        %2512 = vmatprep.subr.bf16.mxu0 0
        %2513 = vmatpush1.bf16.msra.mxu0 0
        %2514 = vmatprep.subr.bf16.mxu0 0
        %2515 = vmatpush1.bf16.msra.mxu0 0
        %2516 = vmatprep.subr.bf16.mxu0 0
        %2517 = vmatpush1.bf16.msra.mxu0 0
        %2518 = vmatprep.subr.bf16.mxu0 0
        %2519 = vmatpush1.bf16.msra.mxu0 0
        %2520 = vmatprep.subr.bf16.mxu0 0
        %2521 = vmatpush1.bf16.msra.mxu0 %v2502
        %2522 = vmatprep.subr.bf16.mxu0 0
        %2523 = vmatpush1.bf16.msra.mxu0 %v2501
        %2524 = vmatprep.subr.bf16.mxu0 0
        %2525 = vmatpush2.bf16.msra.mxu0 0
        %2526 = vmatprep.subr.bf16.mxu0 0
        %2527 = vmatpush2.bf16.msra.mxu0 0
        %2528 = vmatprep.subr.bf16.mxu0 0
        %2529 = vmatpush2.bf16.msra.mxu0 0
        %2530 = vmatprep.subr.bf16.mxu0 0
        %2531 = vmatpush2.bf16.msra.mxu0 0
        %2532 = vmatprep.subr.bf16.mxu0 0
        %2533 = vmatpush2.bf16.msra.mxu0 0
        %2534 = vmatprep.subr.bf16.mxu0 0
        %2535 = vmatpush2.bf16.msra.mxu0 0
        %2536 = vmatprep.subr.bf16.mxu0 0
        %2537 = vmatpush2.bf16.msra.mxu0 0
        %2538 = vmatprep.subr.bf16.mxu0 0
        %2539 = vmatpush2.bf16.msra.mxu0 0
        %2540 = vmatprep.mubr.bf16.mxu0 0
        %2541 = vmatmul.mubr.bf16.gmra.mxu0 %v2506
        %v2542 = vpop.f32.mrf.mxu0
        %v2543 = vadd.f32 %v2491, %v2542
        %v2544 = vpop.f32.mrf.mxu0
        %v2545 = vpop.f32.mrf.mxu0
        %v2546 = vadd.f32 %v2491, %v2545
        %v2547 = vpop.f32.mrf.mxu0
        %2548 = vdwg.mxu0
        %v2549 = vmul.f32 %v2543, 0.5
        %v2550 = vmul.f32 %v2546, 0.5
        %v2551 = vmul.f32 %v2543, 0.70710677
        %v2552 = vmul.f32 %v2546, 0.70710677
        %v2553 = verf.f32.pop %v2551
        %v2554 = verf.f32.pop %v2552
        %v2555 = vadd.f32 %v2553, 1.0
        %v2556 = vadd.f32 %v2554, 1.0
        %v2557 = vmul.f32 %v2549, %v2555
        %v2558 = vmul.f32 %v2550, %v2556
        %v2559 = vpack.c.bf16 %v2558, %v2557
        %v2560 = vld [vmem:[%s607] sm:$0xf]
        %v2561 = vld [vmem:[%s607 + $0x4] sm:$0xf]
        %v2562 = vld [vmem:[%s607 + $0x8] sm:$0xf]
        %v2563 = vld [vmem:[%s607 + $0xc] sm:$0xf]
        %v2564 = vld [vmem:[%s607 + $0x10] sm:$0xf]
        %v2565 = vld [vmem:[%s607 + $0x14] sm:$0xf]
        %v2566 = vld [vmem:[%s607 + $0x18] sm:$0xf]
        %v2567 = vld [vmem:[%s607 + $0x1c] sm:$0xf]
        %v2568 = vld [vmem:[%s610] sm:$0x1]
        %v2570 = vlaneseq
        %v2571 = vshrl.u32 %v2570, 7
        %v2572 = vsub.s32 0, %v2571
        %v2573 = vrot.slane %v2568, %v2572
        %v2583 = vunpack.c.l.b16 %v2560
        %v2584 = vunpack.c.l.b16 %v2561
        %v2585 = vunpack.c.l.b16 %v2562
        %v2586 = vunpack.c.l.b16 %v2563
        %v2587 = vunpack.c.l.b16 %v2564
        %v2588 = vunpack.c.l.b16 %v2565
        %v2589 = vunpack.c.l.b16 %v2566
        %v2590 = vunpack.c.l.b16 %v2567
        %v2591 = vpack.c.b16 %v2584, %v2583
        %v2592 = vpack.c.b16 %v2586, %v2585
        %v2593 = vpack.c.b16 %v2588, %v2587
        %v2594 = vpack.c.b16 %v2590, %v2589
        %vm2599 = vcmask 523264
        %v2601 = vsel %vm2599, %v2559, 0
        %2603 = vmatprep.subr.bf16.mxu0 0
        %2604 = vmatpush1.bf16.msra.mxu0 0
        %2605 = vmatprep.subr.bf16.mxu0 0
        %2606 = vmatpush1.bf16.msra.mxu0 0
        %2607 = vmatprep.subr.bf16.mxu0 0
        %2608 = vmatpush1.bf16.msra.mxu0 0
        %2609 = vmatprep.subr.bf16.mxu0 0
        %2610 = vmatpush1.bf16.msra.mxu0 0
        %2611 = vmatprep.subr.bf16.mxu0 0
        %2612 = vmatpush1.bf16.msra.mxu0 %v2594
        %2613 = vmatprep.subr.bf16.mxu0 0
        %2614 = vmatpush1.bf16.msra.mxu0 %v2593
        %2615 = vmatprep.subr.bf16.mxu0 0
        %2616 = vmatpush1.bf16.msra.mxu0 %v2592
        %2617 = vmatprep.subr.bf16.mxu0 0
        %2618 = vmatpush1.bf16.msra.mxu0 %v2591
        %2619 = vmatprep.subr.bf16.mxu0 0
        %2620 = vmatpush2.bf16.msra.mxu0 0
        %2621 = vmatprep.subr.bf16.mxu0 0
        %2622 = vmatpush2.bf16.msra.mxu0 0
        %2623 = vmatprep.subr.bf16.mxu0 0
        %2624 = vmatpush2.bf16.msra.mxu0 0
        %2625 = vmatprep.subr.bf16.mxu0 0
        %2626 = vmatpush2.bf16.msra.mxu0 0
        %2627 = vmatprep.subr.bf16.mxu0 0
        %2628 = vmatpush2.bf16.msra.mxu0 0
        %2629 = vmatprep.subr.bf16.mxu0 0
        %2630 = vmatpush2.bf16.msra.mxu0 0
        %2631 = vmatprep.subr.bf16.mxu0 0
        %2632 = vmatpush2.bf16.msra.mxu0 0
        %2633 = vmatprep.subr.bf16.mxu0 0
        %2634 = vmatpush2.bf16.msra.mxu0 0
        %2635 = vmatprep.mubr.bf16.mxu0 0
        %2636 = vmatmul.mubr.bf16.gmra.mxu0 %v2601
        %v2637 = vpop.f32.mrf.mxu0
        %v2638 = vadd.f32 %v2573, %v2637
        %v2639 = vpop.f32.mrf.mxu0
        %v2640 = vpop.f32.mrf.mxu0
        %v2641 = vadd.f32 %v2573, %v2640
        %v2642 = vpop.f32.mrf.mxu0
        %2643 = vdwg.mxu0
        %v2644 = vadd.f32 %v2435, %v2638
        %v2645 = vadd.f32 %v2436, %v2641
        %2646 = vst.msk [vmem:[#allocation2] sm:$0xff] %vm625, %v2644
        %2647 = vst.msk [vmem:[#allocation2 + $0x8] sm:$0xff] %vm625, %v2645
        // Predicated region
        $region77: #{tpu_custom_call.1} parent=71 // pred_check
          %p2648 = pneg %p371
        $region78: #{tpu_custom_call.1} parent=71 // pred_check_branch
          %2650 = sbr.rel (%p2648) target = $region80
        $region79: #{tpu_custom_call.1} parent=71 // pred_region
          %s2652 = ssub.s32 256, 256
          %2653 = vsyncadd [#allocation3], %s2652
          %s2654 = sshll.u32 [#allocation2], 4
          %s2655 = int_to_ptr.vmem [resolvable:$true] %s2654
          %2660 = dma.vmem_to_hbm [thread:$0]  %s2655, 256, %s13, [#allocation3], 128, 128, 8
        $region80: #{tpu_custom_call.1} parent=71 // pred_fallthru
          _
        // Predicated region
        $region81: #{tpu_custom_call.1} parent=71 // pred_check
          %p2661 = pneg %p371
        $region82: #{tpu_custom_call.1} parent=71 // pred_check_branch
          %2663 = sbr.rel (%p2661) target = $region84
        $region83: #{tpu_custom_call.1} parent=71 // pred_region
          %2664 = dma.done [#allocation3], 256
        $region84: #{tpu_custom_call.1} parent=71 // pred_fallthru
          _
      $region72: #{tpu_custom_call.1} parent=5 // pred_fallthru
        _
      %p2665 = scmp.le.s32.totalorder 2, %s20
      // Predicated region
      $region85: #{tpu_custom_call.1} parent=5 // pred_check
        %p2666 = pneg %p2665
      $region86: #{tpu_custom_call.1} parent=5 // pred_check_branch
        %2668 = sbr.rel (%p2666) target = $region88
      $region87: #{tpu_custom_call.1} parent=5 // pred_region
        %s2669 = ssub.s32 %s20, 2
      $region88: #{tpu_custom_call.1} parent=5 // pred_fallthru
        _
    $region6: #{tpu_custom_call.1} parent=1 // loop_footer
      %s24 = sadd.s32 1, %s20
    $region7: #{tpu_custom_call.1} parent=1 // loop_footer_branch
      %19 = sbr.rel target = $region3
    $region8: #{tpu_custom_call.1} parent=1 // loop_exit
      _
    %2670 = vsyncpa [#allocation3], 1
    %s2671 = scalar_lea.sflag [#allocation3], 1
    %2672 = vsyncpa %s2671, 1

</llo_original>
